<compile_context>
chip_gen: v7x
topology: tpu7x:2x2x1
jax: 0.10.0
libtpu: 0.0.40
codegen_flags: <defaults>
</compile_context>

<pallas_src>
import numpy as np
import jax
import jax.numpy as jnp
from jax.experimental import pallas as pl
from jax.experimental.pallas import tpu as pltpu

INPUT_DIM = 300
N_CLASSES = 12
GP = 128  # lane-dense padded gate width (3H = 96 -> 128)


def _pick_time_chunk(T):
    # Per-grid-step overhead (~0.35 us) dominates at small T, and the chunk's
    # VMEM footprint is tiny, so take the whole sequence in one chunk when possible.
    if T <= 512:
        return T
    for cand in (512, 384, 256, 128, 64, 32, 16, 8):
        if T % cand == 0:
            return cand
    return 512  # non-divisible tail handled by cdiv grid + length masking


# --------------------------- fused GRU kernel ---------------------------

def _gru_fused_kernel(maxlen_ref,                        # SMEM scalar prefetch (1,)
                      lens_ref, x_ref, wih0_ref, bih0_ref,
                      whh_ref, bhh_ref, wih1_ref, bih1_ref,
                      fcw_ref, fcb_ref,
                      out_ref,
                      gi0_scr, h0_scr, h1_scr):
    c = pl.program_id(0)
    n_chunks = pl.num_programs(0)
    TCB, GPw = gi0_scr.shape                             # (TC*B, 128)
    B, H = h0_scr.shape
    TC = TCB // B
    t0 = c * TC

    @pl.when(c == 0)
    def _():
        h0_scr[...] = jnp.zeros_like(h0_scr)
        h1_scr[...] = jnp.zeros_like(h1_scr)

    # Skip chunks that are entirely past the longest sequence (scalar compare in SMEM).
    @pl.when(t0 < maxlen_ref[0])
    def _():
        # --- fused "stage 1": one lane-dense MXU matmul for the whole chunk (bf16 in,
        #     f32 accumulate). r/z hidden biases are already folded into bih0.
        gi0_scr[...] = (jnp.dot(x_ref[...], wih0_ref[...],
                                preferred_element_type=jnp.float32)
                        + bih0_ref[...])

        # Hoist weight/bias loads and bias broadcasts out of the time loop.
        lens = lens_ref[...]                             # (B, 1) int32
        whh = whh_ref[...]                               # (2H, 2*GP) block-diagonal
        wih1 = wih1_ref[...]                             # (H, GP)
        bhh = jnp.broadcast_to(bhh_ref[...], (B, 2 * GPw))
        bih1 = jnp.broadcast_to(bih1_ref[...], (B, GPw))

        def step(i, carry):
            h0, h1 = carry
            keep = (t0 + i) < lens                       # (B, 1) packed-seq mask

            # layer-0 input projection (precomputed for the chunk)
            gi0 = gi0_scr[pl.ds(pl.multiple_of(i * B, B), B), :]   # (B, GP)

            # fused recurrent-path matmul: [gh0 | gh1] from the OLD h0/h1
            gh = jnp.dot(jnp.concatenate([h0, h1], axis=1), whh,
                         preferred_element_type=jnp.float32) + bhh
            gh0 = gh[:, :GPw]
            gh1 = gh[:, GPw:]

            # ----- layer 0 (all elementwise math in f32) -----
            r0 = jax.nn.sigmoid(gi0[:, :H] + gh0[:, :H])
            z0 = jax.nn.sigmoid(gi0[:, H:2 * H] + gh0[:, H:2 * H])
            n0 = jnp.tanh(gi0[:, 2 * H:3 * H] + r0 * gh0[:, 2 * H:3 * H])
            h0 = jnp.where(keep, (1.0 - z0) * n0 + z0 * h0, h0)

            # ----- layer 1 -----
            gi1 = jnp.dot(h0, wih1, preferred_element_type=jnp.float32) + bih1
            r1 = jax.nn.sigmoid(gi1[:, :H] + gh1[:, :H])
            z1 = jax.nn.sigmoid(gi1[:, H:2 * H] + gh1[:, H:2 * H])
            n1 = jnp.tanh(gi1[:, 2 * H:3 * H] + r1 * gh1[:, 2 * H:3 * H])
            h1 = jnp.where(keep, (1.0 - z1) * n1 + z1 * h1, h1)
            return h0, h1

        h0, h1 = jax.lax.fori_loop(0, TC, step, (h0_scr[...], h1_scr[...]),
                                   unroll=min(8, TC))
        h0_scr[...] = h0
        h1_scr[...] = h1

    @pl.when(c == n_chunks - 1)
    def _():
        out_ref[...] = (jnp.dot(h1_scr[...], fcw_ref[...],
                                preferred_element_type=jnp.float32)
                        + fcb_ref[...])


# --------------------------------- wrapper ---------------------------------

def rnn_classifier_forward(x, input_lengths, params):
    """x: (B, T, 300) float32 (batch_first, like PyTorch); input_lengths: (B,) int32.
    Returns (B, 12) float32 logits == fc(hidden_state[-1])."""
    B, T, IN = x.shape
    H = params["wih1"].shape[0]

    TC = _pick_time_chunk(T)
    n_chunks = pl.cdiv(T, TC)
    T_pad = n_chunks * TC

    # time-major, flattened, bf16 operands for the input-projection matmul
    x_tm = jnp.transpose(x, (1, 0, 2)).astype(jnp.bfloat16)   # (T, B, IN)
    if T_pad != T:
        x_tm = jnp.pad(x_tm, ((0, T_pad - T), (0, 0), (0, 0)))
    xf = x_tm.reshape(T_pad * B, IN)

    lens = input_lengths.reshape(B, 1).astype(jnp.int32)
    max_len = jnp.max(input_lengths).astype(jnp.int32).reshape(1)

    return pl.pallas_call(
        _gru_fused_kernel,
        out_shape=jax.ShapeDtypeStruct((B, N_CLASSES), jnp.float32),
        grid_spec=pltpu.PrefetchScalarGridSpec(
            num_scalar_prefetch=1,                      # max_len -> SMEM
            grid=(n_chunks,),
            in_specs=[
                pl.BlockSpec((B, 1), lambda c, ml: (0, 0)),            # lens (vector mask)
                pl.BlockSpec((TC * B, IN), lambda c, ml: (c, 0)),      # x chunk (bf16)
                pl.BlockSpec((IN, GP), lambda c, ml: (0, 0)),          # wih0 (bf16, padded)
                pl.BlockSpec((1, GP), lambda c, ml: (0, 0)),           # bih0 (fused r/z)
                pl.BlockSpec((2 * H, 2 * GP), lambda c, ml: (0, 0)),   # blockdiag(whh0, whh1)
                pl.BlockSpec((1, 2 * GP), lambda c, ml: (0, 0)),       # bhh (n-gate only)
                pl.BlockSpec((H, GP), lambda c, ml: (0, 0)),           # wih1 (padded)
                pl.BlockSpec((1, GP), lambda c, ml: (0, 0)),           # bih1 (fused r/z)
                pl.BlockSpec((H, N_CLASSES), lambda c, ml: (0, 0)),    # fc weight
                pl.BlockSpec((1, N_CLASSES), lambda c, ml: (0, 0)),    # fc bias
            ],
            out_specs=pl.BlockSpec((B, N_CLASSES), lambda c, ml: (0, 0)),
            scratch_shapes=[
                pltpu.VMEM((TC * B, GP), jnp.float32),   # gi0 chunk (lane-dense)
                pltpu.VMEM((B, H), jnp.float32),         # h0 carried across chunks
                pltpu.VMEM((B, H), jnp.float32),         # h1 carried across chunks
            ],
        ),
        compiler_params=pltpu.CompilerParams(dimension_semantics=("arbitrary",)),
    )(max_len, lens, xf,
      params["wih0"], params["bih0"],
      params["whh_blk"], params["bhh_blk"],
      params["wih1"], params["bih1"],
      params["fcw"], params["fcb"])


# ---------------- parameter construction (deterministic, PyTorch shapes) ----------------

def init_params(key, hidden_dim):
    """Mimics nn.GRU / nn.Linear default init shapes; returns kernel-friendly layouts."""
    H = hidden_dim
    G3 = 3 * H
    assert G3 <= GP
    k_gru = 1.0 / np.sqrt(H)
    k_fc = 1.0 / np.sqrt(H)
    keys = jax.random.split(key, 10)

    def u(k, shape, bound):
        return jax.random.uniform(k, shape, jnp.float32, -bound, bound)

    # PyTorch-layout GRU params, gate order [r, z, n]
    w_ih_l0 = u(keys[0], (G3, INPUT_DIM), k_gru)
    w_hh_l0 = u(keys[1], (G3, H), k_gru)
    b_ih_l0 = u(keys[2], (G3,), k_gru)
    b_hh_l0 = u(keys[3], (G3,), k_gru)
    w_ih_l1 = u(keys[4], (G3, H), k_gru)
    w_hh_l1 = u(keys[5], (G3, H), k_gru)
    b_ih_l1 = u(keys[6], (G3,), k_gru)
    b_hh_l1 = u(keys[7], (G3,), k_gru)
    fc_w = u(keys[8], (N_CLASSES, H), k_fc)
    fc_b = u(keys[9], (N_CLASSES,), k_fc)

    torch_layout = dict(w_ih_l0=w_ih_l0, w_hh_l0=w_hh_l0, b_ih_l0=b_ih_l0, b_hh_l0=b_hh_l0,
                        w_ih_l1=w_ih_l1, w_hh_l1=w_hh_l1, b_ih_l1=b_ih_l1, b_hh_l1=b_hh_l1,
                        fc_w=fc_w, fc_b=fc_b)

    def pad_cols(a):
        return jnp.pad(a, ((0, 0), (0, GP - a.shape[1])))

    def fuse_ih(w_ih, b_ih, b_hh):
        # (3H, in) -> (in, GP); r/z hidden biases folded into the input bias; pad 96->128.
        w = pad_cols(w_ih.T)
        b = jnp.concatenate([b_ih[:2 * H] + b_hh[:2 * H], b_ih[2 * H:]])
        b = jnp.pad(b, (0, GP - G3)).reshape(1, GP)
        return w, b

    wih0, bih0 = fuse_ih(w_ih_l0, b_ih_l0, b_hh_l0)
    wih1, bih1 = fuse_ih(w_ih_l1, b_ih_l1, b_hh_l1)

    # Block-diagonal fused recurrent weight: [h0|h1] (B,2H) @ (2H, 2*GP) -> [gh0 | gh1].
    # Only the n-gate hidden biases remain on the gh path.
    whh_blk = jnp.zeros((2 * H, 2 * GP), jnp.float32)
    whh_blk = whh_blk.at[:H, :G3].set(w_hh_l0.T)
    whh_blk = whh_blk.at[H:, GP:GP + G3].set(w_hh_l1.T)
    bhh_blk = jnp.zeros((2 * GP,), jnp.float32)
    bhh_blk = bhh_blk.at[2 * H:G3].set(b_hh_l0[2 * H:])
    bhh_blk = bhh_blk.at[GP + 2 * H:GP + G3].set(b_hh_l1[2 * H:])
    bhh_blk = bhh_blk.reshape(1, 2 * GP)

    kernel_params = dict(
        wih0=wih0.astype(jnp.bfloat16),   # bf16 operand for the big input projection
        bih0=bih0,
        whh_blk=whh_blk, bhh_blk=bhh_blk,
        wih1=wih1, bih1=bih1,
        fcw=fc_w.T, fcb=fc_b.reshape(1, N_CLASSES),
    )
    return kernel_params, torch_layout


# ---------------- pure-JAX reference (PyTorch packed-GRU semantics) ----------------

def reference_forward(x, lengths, pt, hidden_dim):
    B, T, _ = x.shape
    H = hidden_dim
    hp = jax.lax.Precision.HIGHEST

    def cell(xt, h, w_ih, w_hh, b_ih, b_hh):
        gi = jnp.dot(xt, w_ih.T, precision=hp) + b_ih
        gh = jnp.dot(h, w_hh.T, precision=hp) + b_hh
        i_r, i_z, i_n = jnp.split(gi, 3, axis=1)
        h_r, h_z, h_n = jnp.split(gh, 3, axis=1)
        r = jax.nn.sigmoid(i_r + h_r)
        z = jax.nn.sigmoid(i_z + h_z)
        n = jnp.tanh(i_n + r * h_n)
        return (1.0 - z) * n + z * h

    h0 = jnp.zeros((B, H), jnp.float32)
    h1 = jnp.zeros((B, H), jnp.float32)
    for t in range(T):
        m = (t < lengths).astype(jnp.float32)[:, None]
        h0n = cell(x[:, t], h0, pt["w_ih_l0"], pt["w_hh_l0"], pt["b_ih_l0"], pt["b_hh_l0"])
        h0 = m * h0n + (1.0 - m) * h0
        h1n = cell(h0, h1, pt["w_ih_l1"], pt["w_hh_l1"], pt["b_ih_l1"], pt["b_hh_l1"])
        h1 = m * h1n + (1.0 - m) * h1
    return jnp.dot(h1, pt["fc_w"].T, precision=hp) + pt["fc_b"]


if __name__ == "__main__":
    hidden_dim = 32
    B, T = 2, 8

    key = jax.random.PRNGKey(0)
    k_x, k_p = jax.random.split(key)
    x = jax.random.normal(k_x, (B, T, INPUT_DIM), jnp.float32)
    # pack_padded_sequence requires descending lengths (enforce_sorted=True default)
    input_lengths = jnp.array([8, 5], dtype=jnp.int32)

    params, torch_layout = init_params(k_p, hidden_dim)

    logits = rnn_classifier_forward(x, input_lengths, params)
    logits = jax.block_until_ready(logits)

    ref = reference_forward(x, input_lengths, torch_layout, hidden_dim)
    # bf16 input-projection operands + default MXU precision on the recurrent matmuls
    # vs the HIGHEST-precision f32 reference -> explicitly accept 2e-2 tolerance.
    np.testing.assert_allclose(np.asarray(logits), np.asarray(ref), atol=2e-2, rtol=2e-2)

    print("KERNEL_OK")
</pallas_src>

<mosaic_0001>
module attributes {stable_mosaic.version = 11 : i64} {
  func.func @_gru_fused_kernel(%arg0: i32, %arg1: memref<1xi32, #tpu.memory_space<smem>>, %arg2: memref<2x1xi32, #tpu.memory_space<vmem>>, %arg3: memref<16x300xbf16, #tpu.memory_space<vmem>>, %arg4: memref<300x128xbf16, #tpu.memory_space<vmem>>, %arg5: memref<1x128xf32, #tpu.memory_space<vmem>>, %arg6: memref<64x256xf32, #tpu.memory_space<vmem>>, %arg7: memref<1x256xf32, #tpu.memory_space<vmem>>, %arg8: memref<32x128xf32, #tpu.memory_space<vmem>>, %arg9: memref<1x128xf32, #tpu.memory_space<vmem>>, %arg10: memref<32x12xf32, #tpu.memory_space<vmem>>, %arg11: memref<1x12xf32, #tpu.memory_space<vmem>>, %arg12: memref<2x12xf32, #tpu.memory_space<vmem>>, %arg13: memref<16x128xf32, #tpu.memory_space<vmem>>, %arg14: memref<2x32xf32, #tpu.memory_space<vmem>>, %arg15: memref<2x32xf32, #tpu.memory_space<vmem>>) attributes {dimension_semantics = [#tpu.dimension_semantics<arbitrary>], iteration_bounds = array<i64: 1>, scalar_prefetch = 1 : i64, scratch_operands = 3 : i64, tpu.core_type = #tpu.core_type<tc>, window_params = [{pipeline_mode = #tpu.pipeline_mode<synchronous>, transform_indices = @transform_0, window_bounds = array<i64: 2, 1>}, {transform_indices = @transform_1, window_bounds = array<i64: 16, 300>}, {pipeline_mode = #tpu.pipeline_mode<synchronous>, transform_indices = @transform_2, window_bounds = array<i64: 300, 128>}, {pipeline_mode = #tpu.pipeline_mode<synchronous>, transform_indices = @transform_3, window_bounds = array<i64: 1, 128>}, {pipeline_mode = #tpu.pipeline_mode<synchronous>, transform_indices = @transform_4, window_bounds = array<i64: 64, 256>}, {pipeline_mode = #tpu.pipeline_mode<synchronous>, transform_indices = @transform_5, window_bounds = array<i64: 1, 256>}, {pipeline_mode = #tpu.pipeline_mode<synchronous>, transform_indices = @transform_6, window_bounds = array<i64: 32, 128>}, {pipeline_mode = #tpu.pipeline_mode<synchronous>, transform_indices = @transform_7, window_bounds = array<i64: 1, 128>}, {pipeline_mode = #tpu.pipeline_mode<synchronous>, transform_indices = @transform_8, window_bounds = array<i64: 32, 12>}, {pipeline_mode = #tpu.pipeline_mode<synchronous>, transform_indices = @transform_9, window_bounds = array<i64: 1, 12>}, {pipeline_mode = #tpu.pipeline_mode<synchronous>, transform_indices = @transform_10, window_bounds = array<i64: 2, 12>}]} {
    %c8_i32 = arith.constant 8 : i32
    %0 = arith.muli %arg0, %c8_i32 : i32
    %c0_i32 = arith.constant 0 : i32
    %1 = arith.cmpi eq, %arg0, %c0_i32 : i32
    %2 = arith.extui %1 : i1 to i32
    %c0_i32_0 = arith.constant 0 : i32
    %3 = arith.cmpi ne, %2, %c0_i32_0 : i32
    scf.if %3 {
      %cst = arith.constant 0.000000e+00 : f32
      %11 = vector.broadcast %cst : f32 to vector<2x32xf32>
      %c0_4 = arith.constant 0 : index
      %c0_5 = arith.constant 0 : index
      %12 = vector.load %arg14[%c0_4, %c0_5] : memref<2x32xf32, #tpu.memory_space<vmem>>, vector<2x32xf32>
      tpu.vector_store %arg14[%c0_4, %c0_5], %11 {strides = array<i32>} : memref<2x32xf32, #tpu.memory_space<vmem>>, vector<2x32xf32>,
      %cst_6 = arith.constant 0.000000e+00 : f32
      %13 = vector.broadcast %cst_6 : f32 to vector<2x32xf32>
      %c0_7 = arith.constant 0 : index
      %c0_8 = arith.constant 0 : index
      %14 = vector.load %arg15[%c0_7, %c0_8] : memref<2x32xf32, #tpu.memory_space<vmem>>, vector<2x32xf32>
      tpu.vector_store %arg15[%c0_7, %c0_8], %13 {strides = array<i32>} : memref<2x32xf32, #tpu.memory_space<vmem>>, vector<2x32xf32>,
    } else {
    }
    %c0 = arith.constant 0 : index
    %4 = memref.load %arg1[%c0] : memref<1xi32, #tpu.memory_space<smem>>
    %5 = arith.cmpi slt, %0, %4 : i32
    %6 = arith.extui %5 : i1 to i32
    %c0_i32_1 = arith.constant 0 : i32
    %7 = arith.cmpi ne, %6, %c0_i32_1 : i32
    scf.if %7 {
      %c0_4 = arith.constant 0 : index
      %c0_5 = arith.constant 0 : index
      %11 = vector.load %arg3[%c0_4, %c0_5] : memref<16x300xbf16, #tpu.memory_space<vmem>>, vector<16x300xbf16>
      %c0_6 = arith.constant 0 : index
      %c0_7 = arith.constant 0 : index
      %12 = vector.load %arg4[%c0_6, %c0_7] : memref<300x128xbf16, #tpu.memory_space<vmem>>, vector<300x128xbf16>
      %cst = arith.constant dense<0.000000e+00> : vector<16x128xf32>
      %13 = tpu.matmul %11, %12, %cst {dimension_numbers = #tpu.dot_dimension_numbers<[1], [0], [0], [1], [0, 0, 1, 1], [], []>} : vector<16x300xbf16>, vector<300x128xbf16>, vector<16x128xf32> -> vector<16x128xf32>
      %c0_8 = arith.constant 0 : index
      %c0_9 = arith.constant 0 : index
      %14 = vector.load %arg5[%c0_8, %c0_9] : memref<1x128xf32, #tpu.memory_space<vmem>>, vector<1x128xf32>
      %15 = vector.broadcast %14 : vector<1x128xf32> to vector<16x128xf32>
      %16 = arith.addf %13, %15 : vector<16x128xf32>
      %c0_10 = arith.constant 0 : index
      %c0_11 = arith.constant 0 : index
      %17 = vector.load %arg13[%c0_10, %c0_11] : memref<16x128xf32, #tpu.memory_space<vmem>>, vector<16x128xf32>
      tpu.vector_store %arg13[%c0_10, %c0_11], %16 {strides = array<i32>} : memref<16x128xf32, #tpu.memory_space<vmem>>, vector<16x128xf32>,
      %c0_12 = arith.constant 0 : index
      %c0_13 = arith.constant 0 : index
      %18 = vector.load %arg2[%c0_12, %c0_13] : memref<2x1xi32, #tpu.memory_space<vmem>>, vector<2x1xi32>
      %c0_14 = arith.constant 0 : index
      %c0_15 = arith.constant 0 : index
      %19 = vector.load %arg6[%c0_14, %c0_15] : memref<64x256xf32, #tpu.memory_space<vmem>>, vector<64x256xf32>
      %c0_16 = arith.constant 0 : index
      %c0_17 = arith.constant 0 : index
      %20 = vector.load %arg8[%c0_16, %c0_17] : memref<32x128xf32, #tpu.memory_space<vmem>>, vector<32x128xf32>
      %c0_18 = arith.constant 0 : index
      %c0_19 = arith.constant 0 : index
      %21 = vector.load %arg7[%c0_18, %c0_19] : memref<1x256xf32, #tpu.memory_space<vmem>>, vector<1x256xf32>
      %22 = vector.shape_cast %21 : vector<1x256xf32> to vector<1x256xf32>
      %23 = vector.broadcast %22 : vector<1x256xf32> to vector<2x256xf32>
      %c0_20 = arith.constant 0 : index
      %c0_21 = arith.constant 0 : index
      %24 = vector.load %arg9[%c0_20, %c0_21] : memref<1x128xf32, #tpu.memory_space<vmem>>, vector<1x128xf32>
      %25 = vector.shape_cast %24 : vector<1x128xf32> to vector<1x128xf32>
      %26 = vector.broadcast %25 : vector<1x128xf32> to vector<2x128xf32>
      %c0_22 = arith.constant 0 : index
      %c0_23 = arith.constant 0 : index
      %27 = vector.load %arg14[%c0_22, %c0_23] : memref<2x32xf32, #tpu.memory_space<vmem>>, vector<2x32xf32>
      %c0_24 = arith.constant 0 : index
      %c0_25 = arith.constant 0 : index
      %28 = vector.load %arg15[%c0_24, %c0_25] : memref<2x32xf32, #tpu.memory_space<vmem>>, vector<2x32xf32>
      %c0_i32_26 = arith.constant 0 : i32
      %29 = arith.addi %0, %c0_i32_26 : i32
      %30 = vector.broadcast %29 : i32 to vector<2x1xi32>
      %31 = arith.cmpi slt, %30, %18 : vector<2x1xi32>
      %c2_i32 = arith.constant 2 : i32
      %32 = arith.muli %c0_i32_26, %c2_i32 : i32
      %33 = tpu.assume_multiple %32, 2 : i32
      %34 = arith.index_cast %33 : i32 to index
      %c0_27 = arith.constant 0 : index
      %35 = vector.load %arg13[%34, %c0_27] : memref<16x128xf32, #tpu.memory_space<vmem>>, vector<2x128xf32>
      %36 = tpu.concatenate %27, %28 in 1 : vector<2x32xf32>, vector<2x32xf32> -> vector<2x64xf32>
      %cst_28 = arith.constant dense<0.000000e+00> : vector<2x256xf32>
      %37 = tpu.matmul %36, %19, %cst_28 {dimension_numbers = #tpu.dot_dimension_numbers<[1], [0], [0], [1], [0, 0, 1, 1], [], []>} : vector<2x64xf32>, vector<64x256xf32>, vector<2x256xf32> -> vector<2x256xf32>
      %38 = arith.addf %37, %23 : vector<2x256xf32>
      %39 = vector.extract_strided_slice %38 {offsets = [0, 0], sizes = [2, 128], strides = [1, 1]} : vector<2x256xf32> to vector<2x128xf32>
      %40 = vector.extract_strided_slice %38 {offsets = [0, 128], sizes = [2, 128], strides = [1, 1]} : vector<2x256xf32> to vector<2x128xf32>
      %41 = vector.extract_strided_slice %35 {offsets = [0, 0], sizes = [2, 32], strides = [1, 1]} : vector<2x128xf32> to vector<2x32xf32>
      %42 = vector.extract_strided_slice %39 {offsets = [0, 0], sizes = [2, 32], strides = [1, 1]} : vector<2x128xf32> to vector<2x32xf32>
      %43 = arith.addf %41, %42 : vector<2x32xf32>
      %44 = arith.negf %43 : vector<2x32xf32>
      %45 = math.exp %44 : vector<2x32xf32>
      %cst_29 = arith.constant 1.000000e+00 : f32
      %46 = vector.broadcast %cst_29 : f32 to vector<2x32xf32>
      %47 = arith.addf %46, %45 : vector<2x32xf32>
      %48 = arith.divf %46, %47 : vector<2x32xf32>
      %49 = vector.extract_strided_slice %35 {offsets = [0, 32], sizes = [2, 32], strides = [1, 1]} : vector<2x128xf32> to vector<2x32xf32>
      %50 = vector.extract_strided_slice %39 {offsets = [0, 32], sizes = [2, 32], strides = [1, 1]} : vector<2x128xf32> to vector<2x32xf32>
      %51 = arith.addf %49, %50 : vector<2x32xf32>
      %52 = arith.negf %51 : vector<2x32xf32>
      %53 = math.exp %52 : vector<2x32xf32>
      %cst_30 = arith.constant 1.000000e+00 : f32
      %54 = vector.broadcast %cst_30 : f32 to vector<2x32xf32>
      %55 = arith.addf %54, %53 : vector<2x32xf32>
      %56 = arith.divf %54, %55 : vector<2x32xf32>
      %57 = vector.extract_strided_slice %35 {offsets = [0, 64], sizes = [2, 32], strides = [1, 1]} : vector<2x128xf32> to vector<2x32xf32>
      %58 = vector.extract_strided_slice %39 {offsets = [0, 64], sizes = [2, 32], strides = [1, 1]} : vector<2x128xf32> to vector<2x32xf32>
      %59 = arith.mulf %48, %58 : vector<2x32xf32>
      %60 = arith.addf %57, %59 : vector<2x32xf32>
      %61 = math.tanh %60 : vector<2x32xf32>
      %cst_31 = arith.constant 1.000000e+00 : f32
      %62 = vector.broadcast %cst_31 : f32 to vector<2x32xf32>
      %63 = arith.subf %62, %56 : vector<2x32xf32>
      %64 = arith.mulf %63, %61 : vector<2x32xf32>
      %65 = arith.mulf %56, %27 : vector<2x32xf32>
      %66 = arith.addf %64, %65 : vector<2x32xf32>
      %67 = vector.shape_cast %31 : vector<2x1xi1> to vector<2x1xi1>
      %68 = vector.broadcast %67 : vector<2x1xi1> to vector<2x32xi1>
      %69 = arith.select %68, %66, %27 : vector<2x32xi1>, vector<2x32xf32>
      %cst_32 = arith.constant dense<0.000000e+00> : vector<2x128xf32>
      %70 = tpu.matmul %69, %20, %cst_32 {dimension_numbers = #tpu.dot_dimension_numbers<[1], [0], [0], [1], [0, 0, 1, 1], [], []>} : vector<2x32xf32>, vector<32x128xf32>, vector<2x128xf32> -> vector<2x128xf32>
      %71 = arith.addf %70, %26 : vector<2x128xf32>
      %72 = vector.extract_strided_slice %71 {offsets = [0, 0], sizes = [2, 32], strides = [1, 1]} : vector<2x128xf32> to vector<2x32xf32>
      %73 = vector.extract_strided_slice %40 {offsets = [0, 0], sizes = [2, 32], strides = [1, 1]} : vector<2x128xf32> to vector<2x32xf32>
      %74 = arith.addf %72, %73 : vector<2x32xf32>
      %75 = arith.negf %74 : vector<2x32xf32>
      %76 = math.exp %75 : vector<2x32xf32>
      %cst_33 = arith.constant 1.000000e+00 : f32
      %77 = vector.broadcast %cst_33 : f32 to vector<2x32xf32>
      %78 = arith.addf %77, %76 : vector<2x32xf32>
      %79 = arith.divf %77, %78 : vector<2x32xf32>
      %80 = vector.extract_strided_slice %71 {offsets = [0, 32], sizes = [2, 32], strides = [1, 1]} : vector<2x128xf32> to vector<2x32xf32>
      %81 = vector.extract_strided_slice %40 {offsets = [0, 32], sizes = [2, 32], strides = [1, 1]} : vector<2x128xf32> to vector<2x32xf32>
      %82 = arith.addf %80, %81 : vector<2x32xf32>
      %83 = arith.negf %82 : vector<2x32xf32>
      %84 = math.exp %83 : vector<2x32xf32>
      %cst_34 = arith.constant 1.000000e+00 : f32
      %85 = vector.broadcast %cst_34 : f32 to vector<2x32xf32>
      %86 = arith.addf %85, %84 : vector<2x32xf32>
      %87 = arith.divf %85, %86 : vector<2x32xf32>
      %88 = vector.extract_strided_slice %71 {offsets = [0, 64], sizes = [2, 32], strides = [1, 1]} : vector<2x128xf32> to vector<2x32xf32>
      %89 = vector.extract_strided_slice %40 {offsets = [0, 64], sizes = [2, 32], strides = [1, 1]} : vector<2x128xf32> to vector<2x32xf32>
      %90 = arith.mulf %79, %89 : vector<2x32xf32>
      %91 = arith.addf %88, %90 : vector<2x32xf32>
      %92 = math.tanh %91 : vector<2x32xf32>
      %cst_35 = arith.constant 1.000000e+00 : f32
      %93 = vector.broadcast %cst_35 : f32 to vector<2x32xf32>
      %94 = arith.subf %93, %87 : vector<2x32xf32>
      %95 = arith.mulf %94, %92 : vector<2x32xf32>
      %96 = arith.mulf %87, %28 : vector<2x32xf32>
      %97 = arith.addf %95, %96 : vector<2x32xf32>
      %98 = vector.shape_cast %31 : vector<2x1xi1> to vector<2x1xi1>
      %99 = vector.broadcast %98 : vector<2x1xi1> to vector<2x32xi1>
      %100 = arith.select %99, %97, %28 : vector<2x32xi1>, vector<2x32xf32>
      %c1_i32 = arith.constant 1 : i32
      %101 = arith.addi %0, %c1_i32 : i32
      %102 = vector.broadcast %101 : i32 to vector<2x1xi32>
      %103 = arith.cmpi slt, %102, %18 : vector<2x1xi32>
      %c2_i32_36 = arith.constant 2 : i32
      %104 = arith.muli %c1_i32, %c2_i32_36 : i32
      %105 = tpu.assume_multiple %104, 2 : i32
      %106 = arith.index_cast %105 : i32 to index
      %c0_37 = arith.constant 0 : index
      %107 = vector.load %arg13[%106, %c0_37] : memref<16x128xf32, #tpu.memory_space<vmem>>, vector<2x128xf32>
      %108 = tpu.concatenate %69, %100 in 1 : vector<2x32xf32>, vector<2x32xf32> -> vector<2x64xf32>
      %cst_38 = arith.constant dense<0.000000e+00> : vector<2x256xf32>
      %109 = tpu.matmul %108, %19, %cst_38 {dimension_numbers = #tpu.dot_dimension_numbers<[1], [0], [0], [1], [0, 0, 1, 1], [], []>} : vector<2x64xf32>, vector<64x256xf32>, vector<2x256xf32> -> vector<2x256xf32>
      %110 = arith.addf %109, %23 : vector<2x256xf32>
      %111 = vector.extract_strided_slice %110 {offsets = [0, 0], sizes = [2, 128], strides = [1, 1]} : vector<2x256xf32> to vector<2x128xf32>
      %112 = vector.extract_strided_slice %110 {offsets = [0, 128], sizes = [2, 128], strides = [1, 1]} : vector<2x256xf32> to vector<2x128xf32>
      %113 = vector.extract_strided_slice %107 {offsets = [0, 0], sizes = [2, 32], strides = [1, 1]} : vector<2x128xf32> to vector<2x32xf32>
      %114 = vector.extract_strided_slice %111 {offsets = [0, 0], sizes = [2, 32], strides = [1, 1]} : vector<2x128xf32> to vector<2x32xf32>
      %115 = arith.addf %113, %114 : vector<2x32xf32>
      %116 = arith.negf %115 : vector<2x32xf32>
      %117 = math.exp %116 : vector<2x32xf32>
      %cst_39 = arith.constant 1.000000e+00 : f32
      %118 = vector.broadcast %cst_39 : f32 to vector<2x32xf32>
      %119 = arith.addf %118, %117 : vector<2x32xf32>
      %120 = arith.divf %118, %119 : vector<2x32xf32>
      %121 = vector.extract_strided_slice %107 {offsets = [0, 32], sizes = [2, 32], strides = [1, 1]} : vector<2x128xf32> to vector<2x32xf32>
      %122 = vector.extract_strided_slice %111 {offsets = [0, 32], sizes = [2, 32], strides = [1, 1]} : vector<2x128xf32> to vector<2x32xf32>
      %123 = arith.addf %121, %122 : vector<2x32xf32>
      %124 = arith.negf %123 : vector<2x32xf32>
      %125 = math.exp %124 : vector<2x32xf32>
      %cst_40 = arith.constant 1.000000e+00 : f32
      %126 = vector.broadcast %cst_40 : f32 to vector<2x32xf32>
      %127 = arith.addf %126, %125 : vector<2x32xf32>
      %128 = arith.divf %126, %127 : vector<2x32xf32>
      %129 = vector.extract_strided_slice %107 {offsets = [0, 64], sizes = [2, 32], strides = [1, 1]} : vector<2x128xf32> to vector<2x32xf32>
      %130 = vector.extract_strided_slice %111 {offsets = [0, 64], sizes = [2, 32], strides = [1, 1]} : vector<2x128xf32> to vector<2x32xf32>
      %131 = arith.mulf %120, %130 : vector<2x32xf32>
      %132 = arith.addf %129, %131 : vector<2x32xf32>
      %133 = math.tanh %132 : vector<2x32xf32>
      %cst_41 = arith.constant 1.000000e+00 : f32
      %134 = vector.broadcast %cst_41 : f32 to vector<2x32xf32>
      %135 = arith.subf %134, %128 : vector<2x32xf32>
      %136 = arith.mulf %135, %133 : vector<2x32xf32>
      %137 = arith.mulf %128, %69 : vector<2x32xf32>
      %138 = arith.addf %136, %137 : vector<2x32xf32>
      %139 = vector.shape_cast %103 : vector<2x1xi1> to vector<2x1xi1>
      %140 = vector.broadcast %139 : vector<2x1xi1> to vector<2x32xi1>
      %141 = arith.select %140, %138, %69 : vector<2x32xi1>, vector<2x32xf32>
      %cst_42 = arith.constant dense<0.000000e+00> : vector<2x128xf32>
      %142 = tpu.matmul %141, %20, %cst_42 {dimension_numbers = #tpu.dot_dimension_numbers<[1], [0], [0], [1], [0, 0, 1, 1], [], []>} : vector<2x32xf32>, vector<32x128xf32>, vector<2x128xf32> -> vector<2x128xf32>
      %143 = arith.addf %142, %26 : vector<2x128xf32>
      %144 = vector.extract_strided_slice %143 {offsets = [0, 0], sizes = [2, 32], strides = [1, 1]} : vector<2x128xf32> to vector<2x32xf32>
      %145 = vector.extract_strided_slice %112 {offsets = [0, 0], sizes = [2, 32], strides = [1, 1]} : vector<2x128xf32> to vector<2x32xf32>
      %146 = arith.addf %144, %145 : vector<2x32xf32>
      %147 = arith.negf %146 : vector<2x32xf32>
      %148 = math.exp %147 : vector<2x32xf32>
      %cst_43 = arith.constant 1.000000e+00 : f32
      %149 = vector.broadcast %cst_43 : f32 to vector<2x32xf32>
      %150 = arith.addf %149, %148 : vector<2x32xf32>
      %151 = arith.divf %149, %150 : vector<2x32xf32>
      %152 = vector.extract_strided_slice %143 {offsets = [0, 32], sizes = [2, 32], strides = [1, 1]} : vector<2x128xf32> to vector<2x32xf32>
      %153 = vector.extract_strided_slice %112 {offsets = [0, 32], sizes = [2, 32], strides = [1, 1]} : vector<2x128xf32> to vector<2x32xf32>
      %154 = arith.addf %152, %153 : vector<2x32xf32>
      %155 = arith.negf %154 : vector<2x32xf32>
      %156 = math.exp %155 : vector<2x32xf32>
      %cst_44 = arith.constant 1.000000e+00 : f32
      %157 = vector.broadcast %cst_44 : f32 to vector<2x32xf32>
      %158 = arith.addf %157, %156 : vector<2x32xf32>
      %159 = arith.divf %157, %158 : vector<2x32xf32>
      %160 = vector.extract_strided_slice %143 {offsets = [0, 64], sizes = [2, 32], strides = [1, 1]} : vector<2x128xf32> to vector<2x32xf32>
      %161 = vector.extract_strided_slice %112 {offsets = [0, 64], sizes = [2, 32], strides = [1, 1]} : vector<2x128xf32> to vector<2x32xf32>
      %162 = arith.mulf %151, %161 : vector<2x32xf32>
      %163 = arith.addf %160, %162 : vector<2x32xf32>
      %164 = math.tanh %163 : vector<2x32xf32>
      %cst_45 = arith.constant 1.000000e+00 : f32
      %165 = vector.broadcast %cst_45 : f32 to vector<2x32xf32>
      %166 = arith.subf %165, %159 : vector<2x32xf32>
      %167 = arith.mulf %166, %164 : vector<2x32xf32>
      %168 = arith.mulf %159, %100 : vector<2x32xf32>
      %169 = arith.addf %167, %168 : vector<2x32xf32>
      %170 = vector.shape_cast %103 : vector<2x1xi1> to vector<2x1xi1>
      %171 = vector.broadcast %170 : vector<2x1xi1> to vector<2x32xi1>
      %172 = arith.select %171, %169, %100 : vector<2x32xi1>, vector<2x32xf32>
      %c2_i32_46 = arith.constant 2 : i32
      %173 = arith.addi %0, %c2_i32_46 : i32
      %174 = vector.broadcast %173 : i32 to vector<2x1xi32>
      %175 = arith.cmpi slt, %174, %18 : vector<2x1xi32>
      %c2_i32_47 = arith.constant 2 : i32
      %176 = arith.muli %c2_i32_46, %c2_i32_47 : i32
      %177 = tpu.assume_multiple %176, 2 : i32
      %178 = arith.index_cast %177 : i32 to index
      %c0_48 = arith.constant 0 : index
      %179 = vector.load %arg13[%178, %c0_48] : memref<16x128xf32, #tpu.memory_space<vmem>>, vector<2x128xf32>
      %180 = tpu.concatenate %141, %172 in 1 : vector<2x32xf32>, vector<2x32xf32> -> vector<2x64xf32>
      %cst_49 = arith.constant dense<0.000000e+00> : vector<2x256xf32>
      %181 = tpu.matmul %180, %19, %cst_49 {dimension_numbers = #tpu.dot_dimension_numbers<[1], [0], [0], [1], [0, 0, 1, 1], [], []>} : vector<2x64xf32>, vector<64x256xf32>, vector<2x256xf32> -> vector<2x256xf32>
      %182 = arith.addf %181, %23 : vector<2x256xf32>
      %183 = vector.extract_strided_slice %182 {offsets = [0, 0], sizes = [2, 128], strides = [1, 1]} : vector<2x256xf32> to vector<2x128xf32>
      %184 = vector.extract_strided_slice %182 {offsets = [0, 128], sizes = [2, 128], strides = [1, 1]} : vector<2x256xf32> to vector<2x128xf32>
      %185 = vector.extract_strided_slice %179 {offsets = [0, 0], sizes = [2, 32], strides = [1, 1]} : vector<2x128xf32> to vector<2x32xf32>
      %186 = vector.extract_strided_slice %183 {offsets = [0, 0], sizes = [2, 32], strides = [1, 1]} : vector<2x128xf32> to vector<2x32xf32>
      %187 = arith.addf %185, %186 : vector<2x32xf32>
      %188 = arith.negf %187 : vector<2x32xf32>
      %189 = math.exp %188 : vector<2x32xf32>
      %cst_50 = arith.constant 1.000000e+00 : f32
      %190 = vector.broadcast %cst_50 : f32 to vector<2x32xf32>
      %191 = arith.addf %190, %189 : vector<2x32xf32>
      %192 = arith.divf %190, %191 : vector<2x32xf32>
      %193 = vector.extract_strided_slice %179 {offsets = [0, 32], sizes = [2, 32], strides = [1, 1]} : vector<2x128xf32> to vector<2x32xf32>
      %194 = vector.extract_strided_slice %183 {offsets = [0, 32], sizes = [2, 32], strides = [1, 1]} : vector<2x128xf32> to vector<2x32xf32>
      %195 = arith.addf %193, %194 : vector<2x32xf32>
      %196 = arith.negf %195 : vector<2x32xf32>
      %197 = math.exp %196 : vector<2x32xf32>
      %cst_51 = arith.constant 1.000000e+00 : f32
      %198 = vector.broadcast %cst_51 : f32 to vector<2x32xf32>
      %199 = arith.addf %198, %197 : vector<2x32xf32>
      %200 = arith.divf %198, %199 : vector<2x32xf32>
      %201 = vector.extract_strided_slice %179 {offsets = [0, 64], sizes = [2, 32], strides = [1, 1]} : vector<2x128xf32> to vector<2x32xf32>
      %202 = vector.extract_strided_slice %183 {offsets = [0, 64], sizes = [2, 32], strides = [1, 1]} : vector<2x128xf32> to vector<2x32xf32>
      %203 = arith.mulf %192, %202 : vector<2x32xf32>
      %204 = arith.addf %201, %203 : vector<2x32xf32>
      %205 = math.tanh %204 : vector<2x32xf32>
      %cst_52 = arith.constant 1.000000e+00 : f32
      %206 = vector.broadcast %cst_52 : f32 to vector<2x32xf32>
      %207 = arith.subf %206, %200 : vector<2x32xf32>
      %208 = arith.mulf %207, %205 : vector<2x32xf32>
      %209 = arith.mulf %200, %141 : vector<2x32xf32>
      %210 = arith.addf %208, %209 : vector<2x32xf32>
      %211 = vector.shape_cast %175 : vector<2x1xi1> to vector<2x1xi1>
      %212 = vector.broadcast %211 : vector<2x1xi1> to vector<2x32xi1>
      %213 = arith.select %212, %210, %141 : vector<2x32xi1>, vector<2x32xf32>
      %cst_53 = arith.constant dense<0.000000e+00> : vector<2x128xf32>
      %214 = tpu.matmul %213, %20, %cst_53 {dimension_numbers = #tpu.dot_dimension_numbers<[1], [0], [0], [1], [0, 0, 1, 1], [], []>} : vector<2x32xf32>, vector<32x128xf32>, vector<2x128xf32> -> vector<2x128xf32>
      %215 = arith.addf %214, %26 : vector<2x128xf32>
      %216 = vector.extract_strided_slice %215 {offsets = [0, 0], sizes = [2, 32], strides = [1, 1]} : vector<2x128xf32> to vector<2x32xf32>
      %217 = vector.extract_strided_slice %184 {offsets = [0, 0], sizes = [2, 32], strides = [1, 1]} : vector<2x128xf32> to vector<2x32xf32>
      %218 = arith.addf %216, %217 : vector<2x32xf32>
      %219 = arith.negf %218 : vector<2x32xf32>
      %220 = math.exp %219 : vector<2x32xf32>
      %cst_54 = arith.constant 1.000000e+00 : f32
      %221 = vector.broadcast %cst_54 : f32 to vector<2x32xf32>
      %222 = arith.addf %221, %220 : vector<2x32xf32>
      %223 = arith.divf %221, %222 : vector<2x32xf32>
      %224 = vector.extract_strided_slice %215 {offsets = [0, 32], sizes = [2, 32], strides = [1, 1]} : vector<2x128xf32> to vector<2x32xf32>
      %225 = vector.extract_strided_slice %184 {offsets = [0, 32], sizes = [2, 32], strides = [1, 1]} : vector<2x128xf32> to vector<2x32xf32>
      %226 = arith.addf %224, %225 : vector<2x32xf32>
      %227 = arith.negf %226 : vector<2x32xf32>
      %228 = math.exp %227 : vector<2x32xf32>
      %cst_55 = arith.constant 1.000000e+00 : f32
      %229 = vector.broadcast %cst_55 : f32 to vector<2x32xf32>
      %230 = arith.addf %229, %228 : vector<2x32xf32>
      %231 = arith.divf %229, %230 : vector<2x32xf32>
      %232 = vector.extract_strided_slice %215 {offsets = [0, 64], sizes = [2, 32], strides = [1, 1]} : vector<2x128xf32> to vector<2x32xf32>
      %233 = vector.extract_strided_slice %184 {offsets = [0, 64], sizes = [2, 32], strides = [1, 1]} : vector<2x128xf32> to vector<2x32xf32>
      %234 = arith.mulf %223, %233 : vector<2x32xf32>
      %235 = arith.addf %232, %234 : vector<2x32xf32>
      %236 = math.tanh %235 : vector<2x32xf32>
      %cst_56 = arith.constant 1.000000e+00 : f32
      %237 = vector.broadcast %cst_56 : f32 to vector<2x32xf32>
      %238 = arith.subf %237, %231 : vector<2x32xf32>
      %239 = arith.mulf %238, %236 : vector<2x32xf32>
      %240 = arith.mulf %231, %172 : vector<2x32xf32>
      %241 = arith.addf %239, %240 : vector<2x32xf32>
      %242 = vector.shape_cast %175 : vector<2x1xi1> to vector<2x1xi1>
      %243 = vector.broadcast %242 : vector<2x1xi1> to vector<2x32xi1>
      %244 = arith.select %243, %241, %172 : vector<2x32xi1>, vector<2x32xf32>
      %c3_i32 = arith.constant 3 : i32
      %245 = arith.addi %0, %c3_i32 : i32
      %246 = vector.broadcast %245 : i32 to vector<2x1xi32>
      %247 = arith.cmpi slt, %246, %18 : vector<2x1xi32>
      %c2_i32_57 = arith.constant 2 : i32
      %248 = arith.muli %c3_i32, %c2_i32_57 : i32
      %249 = tpu.assume_multiple %248, 2 : i32
      %250 = arith.index_cast %249 : i32 to index
      %c0_58 = arith.constant 0 : index
      %251 = vector.load %arg13[%250, %c0_58] : memref<16x128xf32, #tpu.memory_space<vmem>>, vector<2x128xf32>
      %252 = tpu.concatenate %213, %244 in 1 : vector<2x32xf32>, vector<2x32xf32> -> vector<2x64xf32>
      %cst_59 = arith.constant dense<0.000000e+00> : vector<2x256xf32>
      %253 = tpu.matmul %252, %19, %cst_59 {dimension_numbers = #tpu.dot_dimension_numbers<[1], [0], [0], [1], [0, 0, 1, 1], [], []>} : vector<2x64xf32>, vector<64x256xf32>, vector<2x256xf32> -> vector<2x256xf32>
      %254 = arith.addf %253, %23 : vector<2x256xf32>
      %255 = vector.extract_strided_slice %254 {offsets = [0, 0], sizes = [2, 128], strides = [1, 1]} : vector<2x256xf32> to vector<2x128xf32>
      %256 = vector.extract_strided_slice %254 {offsets = [0, 128], sizes = [2, 128], strides = [1, 1]} : vector<2x256xf32> to vector<2x128xf32>
      %257 = vector.extract_strided_slice %251 {offsets = [0, 0], sizes = [2, 32], strides = [1, 1]} : vector<2x128xf32> to vector<2x32xf32>
      %258 = vector.extract_strided_slice %255 {offsets = [0, 0], sizes = [2, 32], strides = [1, 1]} : vector<2x128xf32> to vector<2x32xf32>
      %259 = arith.addf %257, %258 : vector<2x32xf32>
      %260 = arith.negf %259 : vector<2x32xf32>
      %261 = math.exp %260 : vector<2x32xf32>
      %cst_60 = arith.constant 1.000000e+00 : f32
      %262 = vector.broadcast %cst_60 : f32 to vector<2x32xf32>
      %263 = arith.addf %262, %261 : vector<2x32xf32>
      %264 = arith.divf %262, %263 : vector<2x32xf32>
      %265 = vector.extract_strided_slice %251 {offsets = [0, 32], sizes = [2, 32], strides = [1, 1]} : vector<2x128xf32> to vector<2x32xf32>
      %266 = vector.extract_strided_slice %255 {offsets = [0, 32], sizes = [2, 32], strides = [1, 1]} : vector<2x128xf32> to vector<2x32xf32>
      %267 = arith.addf %265, %266 : vector<2x32xf32>
      %268 = arith.negf %267 : vector<2x32xf32>
      %269 = math.exp %268 : vector<2x32xf32>
      %cst_61 = arith.constant 1.000000e+00 : f32
      %270 = vector.broadcast %cst_61 : f32 to vector<2x32xf32>
      %271 = arith.addf %270, %269 : vector<2x32xf32>
      %272 = arith.divf %270, %271 : vector<2x32xf32>
      %273 = vector.extract_strided_slice %251 {offsets = [0, 64], sizes = [2, 32], strides = [1, 1]} : vector<2x128xf32> to vector<2x32xf32>
      %274 = vector.extract_strided_slice %255 {offsets = [0, 64], sizes = [2, 32], strides = [1, 1]} : vector<2x128xf32> to vector<2x32xf32>
      %275 = arith.mulf %264, %274 : vector<2x32xf32>
      %276 = arith.addf %273, %275 : vector<2x32xf32>
      %277 = math.tanh %276 : vector<2x32xf32>
      %cst_62 = arith.constant 1.000000e+00 : f32
      %278 = vector.broadcast %cst_62 : f32 to vector<2x32xf32>
      %279 = arith.subf %278, %272 : vector<2x32xf32>
      %280 = arith.mulf %279, %277 : vector<2x32xf32>
      %281 = arith.mulf %272, %213 : vector<2x32xf32>
      %282 = arith.addf %280, %281 : vector<2x32xf32>
      %283 = vector.shape_cast %247 : vector<2x1xi1> to vector<2x1xi1>
      %284 = vector.broadcast %283 : vector<2x1xi1> to vector<2x32xi1>
      %285 = arith.select %284, %282, %213 : vector<2x32xi1>, vector<2x32xf32>
      %cst_63 = arith.constant dense<0.000000e+00> : vector<2x128xf32>
      %286 = tpu.matmul %285, %20, %cst_63 {dimension_numbers = #tpu.dot_dimension_numbers<[1], [0], [0], [1], [0, 0, 1, 1], [], []>} : vector<2x32xf32>, vector<32x128xf32>, vector<2x128xf32> -> vector<2x128xf32>
      %287 = arith.addf %286, %26 : vector<2x128xf32>
      %288 = vector.extract_strided_slice %287 {offsets = [0, 0], sizes = [2, 32], strides = [1, 1]} : vector<2x128xf32> to vector<2x32xf32>
      %289 = vector.extract_strided_slice %256 {offsets = [0, 0], sizes = [2, 32], strides = [1, 1]} : vector<2x128xf32> to vector<2x32xf32>
      %290 = arith.addf %288, %289 : vector<2x32xf32>
      %291 = arith.negf %290 : vector<2x32xf32>
      %292 = math.exp %291 : vector<2x32xf32>
      %cst_64 = arith.constant 1.000000e+00 : f32
      %293 = vector.broadcast %cst_64 : f32 to vector<2x32xf32>
      %294 = arith.addf %293, %292 : vector<2x32xf32>
      %295 = arith.divf %293, %294 : vector<2x32xf32>
      %296 = vector.extract_strided_slice %287 {offsets = [0, 32], sizes = [2, 32], strides = [1, 1]} : vector<2x128xf32> to vector<2x32xf32>
      %297 = vector.extract_strided_slice %256 {offsets = [0, 32], sizes = [2, 32], strides = [1, 1]} : vector<2x128xf32> to vector<2x32xf32>
      %298 = arith.addf %296, %297 : vector<2x32xf32>
      %299 = arith.negf %298 : vector<2x32xf32>
      %300 = math.exp %299 : vector<2x32xf32>
      %cst_65 = arith.constant 1.000000e+00 : f32
      %301 = vector.broadcast %cst_65 : f32 to vector<2x32xf32>
      %302 = arith.addf %301, %300 : vector<2x32xf32>
      %303 = arith.divf %301, %302 : vector<2x32xf32>
      %304 = vector.extract_strided_slice %287 {offsets = [0, 64], sizes = [2, 32], strides = [1, 1]} : vector<2x128xf32> to vector<2x32xf32>
      %305 = vector.extract_strided_slice %256 {offsets = [0, 64], sizes = [2, 32], strides = [1, 1]} : vector<2x128xf32> to vector<2x32xf32>
      %306 = arith.mulf %295, %305 : vector<2x32xf32>
      %307 = arith.addf %304, %306 : vector<2x32xf32>
      %308 = math.tanh %307 : vector<2x32xf32>
      %cst_66 = arith.constant 1.000000e+00 : f32
      %309 = vector.broadcast %cst_66 : f32 to vector<2x32xf32>
      %310 = arith.subf %309, %303 : vector<2x32xf32>
      %311 = arith.mulf %310, %308 : vector<2x32xf32>
      %312 = arith.mulf %303, %244 : vector<2x32xf32>
      %313 = arith.addf %311, %312 : vector<2x32xf32>
      %314 = vector.shape_cast %247 : vector<2x1xi1> to vector<2x1xi1>
      %315 = vector.broadcast %314 : vector<2x1xi1> to vector<2x32xi1>
      %316 = arith.select %315, %313, %244 : vector<2x32xi1>, vector<2x32xf32>
      %c4_i32 = arith.constant 4 : i32
      %317 = arith.addi %0, %c4_i32 : i32
      %318 = vector.broadcast %317 : i32 to vector<2x1xi32>
      %319 = arith.cmpi slt, %318, %18 : vector<2x1xi32>
      %c2_i32_67 = arith.constant 2 : i32
      %320 = arith.muli %c4_i32, %c2_i32_67 : i32
      %321 = tpu.assume_multiple %320, 2 : i32
      %322 = arith.index_cast %321 : i32 to index
      %c0_68 = arith.constant 0 : index
      %323 = vector.load %arg13[%322, %c0_68] : memref<16x128xf32, #tpu.memory_space<vmem>>, vector<2x128xf32>
      %324 = tpu.concatenate %285, %316 in 1 : vector<2x32xf32>, vector<2x32xf32> -> vector<2x64xf32>
      %cst_69 = arith.constant dense<0.000000e+00> : vector<2x256xf32>
      %325 = tpu.matmul %324, %19, %cst_69 {dimension_numbers = #tpu.dot_dimension_numbers<[1], [0], [0], [1], [0, 0, 1, 1], [], []>} : vector<2x64xf32>, vector<64x256xf32>, vector<2x256xf32> -> vector<2x256xf32>
      %326 = arith.addf %325, %23 : vector<2x256xf32>
      %327 = vector.extract_strided_slice %326 {offsets = [0, 0], sizes = [2, 128], strides = [1, 1]} : vector<2x256xf32> to vector<2x128xf32>
      %328 = vector.extract_strided_slice %326 {offsets = [0, 128], sizes = [2, 128], strides = [1, 1]} : vector<2x256xf32> to vector<2x128xf32>
      %329 = vector.extract_strided_slice %323 {offsets = [0, 0], sizes = [2, 32], strides = [1, 1]} : vector<2x128xf32> to vector<2x32xf32>
      %330 = vector.extract_strided_slice %327 {offsets = [0, 0], sizes = [2, 32], strides = [1, 1]} : vector<2x128xf32> to vector<2x32xf32>
      %331 = arith.addf %329, %330 : vector<2x32xf32>
      %332 = arith.negf %331 : vector<2x32xf32>
      %333 = math.exp %332 : vector<2x32xf32>
      %cst_70 = arith.constant 1.000000e+00 : f32
      %334 = vector.broadcast %cst_70 : f32 to vector<2x32xf32>
      %335 = arith.addf %334, %333 : vector<2x32xf32>
      %336 = arith.divf %334, %335 : vector<2x32xf32>
      %337 = vector.extract_strided_slice %323 {offsets = [0, 32], sizes = [2, 32], strides = [1, 1]} : vector<2x128xf32> to vector<2x32xf32>
      %338 = vector.extract_strided_slice %327 {offsets = [0, 32], sizes = [2, 32], strides = [1, 1]} : vector<2x128xf32> to vector<2x32xf32>
      %339 = arith.addf %337, %338 : vector<2x32xf32>
      %340 = arith.negf %339 : vector<2x32xf32>
      %341 = math.exp %340 : vector<2x32xf32>
      %cst_71 = arith.constant 1.000000e+00 : f32
      %342 = vector.broadcast %cst_71 : f32 to vector<2x32xf32>
      %343 = arith.addf %342, %341 : vector<2x32xf32>
      %344 = arith.divf %342, %343 : vector<2x32xf32>
      %345 = vector.extract_strided_slice %323 {offsets = [0, 64], sizes = [2, 32], strides = [1, 1]} : vector<2x128xf32> to vector<2x32xf32>
      %346 = vector.extract_strided_slice %327 {offsets = [0, 64], sizes = [2, 32], strides = [1, 1]} : vector<2x128xf32> to vector<2x32xf32>
      %347 = arith.mulf %336, %346 : vector<2x32xf32>
      %348 = arith.addf %345, %347 : vector<2x32xf32>
      %349 = math.tanh %348 : vector<2x32xf32>
      %cst_72 = arith.constant 1.000000e+00 : f32
      %350 = vector.broadcast %cst_72 : f32 to vector<2x32xf32>
      %351 = arith.subf %350, %344 : vector<2x32xf32>
      %352 = arith.mulf %351, %349 : vector<2x32xf32>
      %353 = arith.mulf %344, %285 : vector<2x32xf32>
      %354 = arith.addf %352, %353 : vector<2x32xf32>
      %355 = vector.shape_cast %319 : vector<2x1xi1> to vector<2x1xi1>
      %356 = vector.broadcast %355 : vector<2x1xi1> to vector<2x32xi1>
      %357 = arith.select %356, %354, %285 : vector<2x32xi1>, vector<2x32xf32>
      %cst_73 = arith.constant dense<0.000000e+00> : vector<2x128xf32>
      %358 = tpu.matmul %357, %20, %cst_73 {dimension_numbers = #tpu.dot_dimension_numbers<[1], [0], [0], [1], [0, 0, 1, 1], [], []>} : vector<2x32xf32>, vector<32x128xf32>, vector<2x128xf32> -> vector<2x128xf32>
      %359 = arith.addf %358, %26 : vector<2x128xf32>
      %360 = vector.extract_strided_slice %359 {offsets = [0, 0], sizes = [2, 32], strides = [1, 1]} : vector<2x128xf32> to vector<2x32xf32>
      %361 = vector.extract_strided_slice %328 {offsets = [0, 0], sizes = [2, 32], strides = [1, 1]} : vector<2x128xf32> to vector<2x32xf32>
      %362 = arith.addf %360, %361 : vector<2x32xf32>
      %363 = arith.negf %362 : vector<2x32xf32>
      %364 = math.exp %363 : vector<2x32xf32>
      %cst_74 = arith.constant 1.000000e+00 : f32
      %365 = vector.broadcast %cst_74 : f32 to vector<2x32xf32>
      %366 = arith.addf %365, %364 : vector<2x32xf32>
      %367 = arith.divf %365, %366 : vector<2x32xf32>
      %368 = vector.extract_strided_slice %359 {offsets = [0, 32], sizes = [2, 32], strides = [1, 1]} : vector<2x128xf32> to vector<2x32xf32>
      %369 = vector.extract_strided_slice %328 {offsets = [0, 32], sizes = [2, 32], strides = [1, 1]} : vector<2x128xf32> to vector<2x32xf32>
      %370 = arith.addf %368, %369 : vector<2x32xf32>
      %371 = arith.negf %370 : vector<2x32xf32>
      %372 = math.exp %371 : vector<2x32xf32>
      %cst_75 = arith.constant 1.000000e+00 : f32
      %373 = vector.broadcast %cst_75 : f32 to vector<2x32xf32>
      %374 = arith.addf %373, %372 : vector<2x32xf32>
      %375 = arith.divf %373, %374 : vector<2x32xf32>
      %376 = vector.extract_strided_slice %359 {offsets = [0, 64], sizes = [2, 32], strides = [1, 1]} : vector<2x128xf32> to vector<2x32xf32>
      %377 = vector.extract_strided_slice %328 {offsets = [0, 64], sizes = [2, 32], strides = [1, 1]} : vector<2x128xf32> to vector<2x32xf32>
      %378 = arith.mulf %367, %377 : vector<2x32xf32>
      %379 = arith.addf %376, %378 : vector<2x32xf32>
      %380 = math.tanh %379 : vector<2x32xf32>
      %cst_76 = arith.constant 1.000000e+00 : f32
      %381 = vector.broadcast %cst_76 : f32 to vector<2x32xf32>
      %382 = arith.subf %381, %375 : vector<2x32xf32>
      %383 = arith.mulf %382, %380 : vector<2x32xf32>
      %384 = arith.mulf %375, %316 : vector<2x32xf32>
      %385 = arith.addf %383, %384 : vector<2x32xf32>
      %386 = vector.shape_cast %319 : vector<2x1xi1> to vector<2x1xi1>
      %387 = vector.broadcast %386 : vector<2x1xi1> to vector<2x32xi1>
      %388 = arith.select %387, %385, %316 : vector<2x32xi1>, vector<2x32xf32>
      %c5_i32 = arith.constant 5 : i32
      %389 = arith.addi %0, %c5_i32 : i32
      %390 = vector.broadcast %389 : i32 to vector<2x1xi32>
      %391 = arith.cmpi slt, %390, %18 : vector<2x1xi32>
      %c2_i32_77 = arith.constant 2 : i32
      %392 = arith.muli %c5_i32, %c2_i32_77 : i32
      %393 = tpu.assume_multiple %392, 2 : i32
      %394 = arith.index_cast %393 : i32 to index
      %c0_78 = arith.constant 0 : index
      %395 = vector.load %arg13[%394, %c0_78] : memref<16x128xf32, #tpu.memory_space<vmem>>, vector<2x128xf32>
      %396 = tpu.concatenate %357, %388 in 1 : vector<2x32xf32>, vector<2x32xf32> -> vector<2x64xf32>
      %cst_79 = arith.constant dense<0.000000e+00> : vector<2x256xf32>
      %397 = tpu.matmul %396, %19, %cst_79 {dimension_numbers = #tpu.dot_dimension_numbers<[1], [0], [0], [1], [0, 0, 1, 1], [], []>} : vector<2x64xf32>, vector<64x256xf32>, vector<2x256xf32> -> vector<2x256xf32>
      %398 = arith.addf %397, %23 : vector<2x256xf32>
      %399 = vector.extract_strided_slice %398 {offsets = [0, 0], sizes = [2, 128], strides = [1, 1]} : vector<2x256xf32> to vector<2x128xf32>
      %400 = vector.extract_strided_slice %398 {offsets = [0, 128], sizes = [2, 128], strides = [1, 1]} : vector<2x256xf32> to vector<2x128xf32>
      %401 = vector.extract_strided_slice %395 {offsets = [0, 0], sizes = [2, 32], strides = [1, 1]} : vector<2x128xf32> to vector<2x32xf32>
      %402 = vector.extract_strided_slice %399 {offsets = [0, 0], sizes = [2, 32], strides = [1, 1]} : vector<2x128xf32> to vector<2x32xf32>
      %403 = arith.addf %401, %402 : vector<2x32xf32>
      %404 = arith.negf %403 : vector<2x32xf32>
      %405 = math.exp %404 : vector<2x32xf32>
      %cst_80 = arith.constant 1.000000e+00 : f32
      %406 = vector.broadcast %cst_80 : f32 to vector<2x32xf32>
      %407 = arith.addf %406, %405 : vector<2x32xf32>
      %408 = arith.divf %406, %407 : vector<2x32xf32>
      %409 = vector.extract_strided_slice %395 {offsets = [0, 32], sizes = [2, 32], strides = [1, 1]} : vector<2x128xf32> to vector<2x32xf32>
      %410 = vector.extract_strided_slice %399 {offsets = [0, 32], sizes = [2, 32], strides = [1, 1]} : vector<2x128xf32> to vector<2x32xf32>
      %411 = arith.addf %409, %410 : vector<2x32xf32>
      %412 = arith.negf %411 : vector<2x32xf32>
      %413 = math.exp %412 : vector<2x32xf32>
      %cst_81 = arith.constant 1.000000e+00 : f32
      %414 = vector.broadcast %cst_81 : f32 to vector<2x32xf32>
      %415 = arith.addf %414, %413 : vector<2x32xf32>
      %416 = arith.divf %414, %415 : vector<2x32xf32>
      %417 = vector.extract_strided_slice %395 {offsets = [0, 64], sizes = [2, 32], strides = [1, 1]} : vector<2x128xf32> to vector<2x32xf32>
      %418 = vector.extract_strided_slice %399 {offsets = [0, 64], sizes = [2, 32], strides = [1, 1]} : vector<2x128xf32> to vector<2x32xf32>
      %419 = arith.mulf %408, %418 : vector<2x32xf32>
      %420 = arith.addf %417, %419 : vector<2x32xf32>
      %421 = math.tanh %420 : vector<2x32xf32>
      %cst_82 = arith.constant 1.000000e+00 : f32
      %422 = vector.broadcast %cst_82 : f32 to vector<2x32xf32>
      %423 = arith.subf %422, %416 : vector<2x32xf32>
      %424 = arith.mulf %423, %421 : vector<2x32xf32>
      %425 = arith.mulf %416, %357 : vector<2x32xf32>
      %426 = arith.addf %424, %425 : vector<2x32xf32>
      %427 = vector.shape_cast %391 : vector<2x1xi1> to vector<2x1xi1>
      %428 = vector.broadcast %427 : vector<2x1xi1> to vector<2x32xi1>
      %429 = arith.select %428, %426, %357 : vector<2x32xi1>, vector<2x32xf32>
      %cst_83 = arith.constant dense<0.000000e+00> : vector<2x128xf32>
      %430 = tpu.matmul %429, %20, %cst_83 {dimension_numbers = #tpu.dot_dimension_numbers<[1], [0], [0], [1], [0, 0, 1, 1], [], []>} : vector<2x32xf32>, vector<32x128xf32>, vector<2x128xf32> -> vector<2x128xf32>
      %431 = arith.addf %430, %26 : vector<2x128xf32>
      %432 = vector.extract_strided_slice %431 {offsets = [0, 0], sizes = [2, 32], strides = [1, 1]} : vector<2x128xf32> to vector<2x32xf32>
      %433 = vector.extract_strided_slice %400 {offsets = [0, 0], sizes = [2, 32], strides = [1, 1]} : vector<2x128xf32> to vector<2x32xf32>
      %434 = arith.addf %432, %433 : vector<2x32xf32>
      %435 = arith.negf %434 : vector<2x32xf32>
      %436 = math.exp %435 : vector<2x32xf32>
      %cst_84 = arith.constant 1.000000e+00 : f32
      %437 = vector.broadcast %cst_84 : f32 to vector<2x32xf32>
      %438 = arith.addf %437, %436 : vector<2x32xf32>
      %439 = arith.divf %437, %438 : vector<2x32xf32>
      %440 = vector.extract_strided_slice %431 {offsets = [0, 32], sizes = [2, 32], strides = [1, 1]} : vector<2x128xf32> to vector<2x32xf32>
      %441 = vector.extract_strided_slice %400 {offsets = [0, 32], sizes = [2, 32], strides = [1, 1]} : vector<2x128xf32> to vector<2x32xf32>
      %442 = arith.addf %440, %441 : vector<2x32xf32>
      %443 = arith.negf %442 : vector<2x32xf32>
      %444 = math.exp %443 : vector<2x32xf32>
      %cst_85 = arith.constant 1.000000e+00 : f32
      %445 = vector.broadcast %cst_85 : f32 to vector<2x32xf32>
      %446 = arith.addf %445, %444 : vector<2x32xf32>
      %447 = arith.divf %445, %446 : vector<2x32xf32>
      %448 = vector.extract_strided_slice %431 {offsets = [0, 64], sizes = [2, 32], strides = [1, 1]} : vector<2x128xf32> to vector<2x32xf32>
      %449 = vector.extract_strided_slice %400 {offsets = [0, 64], sizes = [2, 32], strides = [1, 1]} : vector<2x128xf32> to vector<2x32xf32>
      %450 = arith.mulf %439, %449 : vector<2x32xf32>
      %451 = arith.addf %448, %450 : vector<2x32xf32>
      %452 = math.tanh %451 : vector<2x32xf32>
      %cst_86 = arith.constant 1.000000e+00 : f32
      %453 = vector.broadcast %cst_86 : f32 to vector<2x32xf32>
      %454 = arith.subf %453, %447 : vector<2x32xf32>
      %455 = arith.mulf %454, %452 : vector<2x32xf32>
      %456 = arith.mulf %447, %388 : vector<2x32xf32>
      %457 = arith.addf %455, %456 : vector<2x32xf32>
      %458 = vector.shape_cast %391 : vector<2x1xi1> to vector<2x1xi1>
      %459 = vector.broadcast %458 : vector<2x1xi1> to vector<2x32xi1>
      %460 = arith.select %459, %457, %388 : vector<2x32xi1>, vector<2x32xf32>
      %c6_i32 = arith.constant 6 : i32
      %461 = arith.addi %0, %c6_i32 : i32
      %462 = vector.broadcast %461 : i32 to vector<2x1xi32>
      %463 = arith.cmpi slt, %462, %18 : vector<2x1xi32>
      %c2_i32_87 = arith.constant 2 : i32
      %464 = arith.muli %c6_i32, %c2_i32_87 : i32
      %465 = tpu.assume_multiple %464, 2 : i32
      %466 = arith.index_cast %465 : i32 to index
      %c0_88 = arith.constant 0 : index
      %467 = vector.load %arg13[%466, %c0_88] : memref<16x128xf32, #tpu.memory_space<vmem>>, vector<2x128xf32>
      %468 = tpu.concatenate %429, %460 in 1 : vector<2x32xf32>, vector<2x32xf32> -> vector<2x64xf32>
      %cst_89 = arith.constant dense<0.000000e+00> : vector<2x256xf32>
      %469 = tpu.matmul %468, %19, %cst_89 {dimension_numbers = #tpu.dot_dimension_numbers<[1], [0], [0], [1], [0, 0, 1, 1], [], []>} : vector<2x64xf32>, vector<64x256xf32>, vector<2x256xf32> -> vector<2x256xf32>
      %470 = arith.addf %469, %23 : vector<2x256xf32>
      %471 = vector.extract_strided_slice %470 {offsets = [0, 0], sizes = [2, 128], strides = [1, 1]} : vector<2x256xf32> to vector<2x128xf32>
      %472 = vector.extract_strided_slice %470 {offsets = [0, 128], sizes = [2, 128], strides = [1, 1]} : vector<2x256xf32> to vector<2x128xf32>
      %473 = vector.extract_strided_slice %467 {offsets = [0, 0], sizes = [2, 32], strides = [1, 1]} : vector<2x128xf32> to vector<2x32xf32>
      %474 = vector.extract_strided_slice %471 {offsets = [0, 0], sizes = [2, 32], strides = [1, 1]} : vector<2x128xf32> to vector<2x32xf32>
      %475 = arith.addf %473, %474 : vector<2x32xf32>
      %476 = arith.negf %475 : vector<2x32xf32>
      %477 = math.exp %476 : vector<2x32xf32>
      %cst_90 = arith.constant 1.000000e+00 : f32
      %478 = vector.broadcast %cst_90 : f32 to vector<2x32xf32>
      %479 = arith.addf %478, %477 : vector<2x32xf32>
      %480 = arith.divf %478, %479 : vector<2x32xf32>
      %481 = vector.extract_strided_slice %467 {offsets = [0, 32], sizes = [2, 32], strides = [1, 1]} : vector<2x128xf32> to vector<2x32xf32>
      %482 = vector.extract_strided_slice %471 {offsets = [0, 32], sizes = [2, 32], strides = [1, 1]} : vector<2x128xf32> to vector<2x32xf32>
      %483 = arith.addf %481, %482 : vector<2x32xf32>
      %484 = arith.negf %483 : vector<2x32xf32>
      %485 = math.exp %484 : vector<2x32xf32>
      %cst_91 = arith.constant 1.000000e+00 : f32
      %486 = vector.broadcast %cst_91 : f32 to vector<2x32xf32>
      %487 = arith.addf %486, %485 : vector<2x32xf32>
      %488 = arith.divf %486, %487 : vector<2x32xf32>
      %489 = vector.extract_strided_slice %467 {offsets = [0, 64], sizes = [2, 32], strides = [1, 1]} : vector<2x128xf32> to vector<2x32xf32>
      %490 = vector.extract_strided_slice %471 {offsets = [0, 64], sizes = [2, 32], strides = [1, 1]} : vector<2x128xf32> to vector<2x32xf32>
      %491 = arith.mulf %480, %490 : vector<2x32xf32>
      %492 = arith.addf %489, %491 : vector<2x32xf32>
      %493 = math.tanh %492 : vector<2x32xf32>
      %cst_92 = arith.constant 1.000000e+00 : f32
      %494 = vector.broadcast %cst_92 : f32 to vector<2x32xf32>
      %495 = arith.subf %494, %488 : vector<2x32xf32>
      %496 = arith.mulf %495, %493 : vector<2x32xf32>
      %497 = arith.mulf %488, %429 : vector<2x32xf32>
      %498 = arith.addf %496, %497 : vector<2x32xf32>
      %499 = vector.shape_cast %463 : vector<2x1xi1> to vector<2x1xi1>
      %500 = vector.broadcast %499 : vector<2x1xi1> to vector<2x32xi1>
      %501 = arith.select %500, %498, %429 : vector<2x32xi1>, vector<2x32xf32>
      %cst_93 = arith.constant dense<0.000000e+00> : vector<2x128xf32>
      %502 = tpu.matmul %501, %20, %cst_93 {dimension_numbers = #tpu.dot_dimension_numbers<[1], [0], [0], [1], [0, 0, 1, 1], [], []>} : vector<2x32xf32>, vector<32x128xf32>, vector<2x128xf32> -> vector<2x128xf32>
      %503 = arith.addf %502, %26 : vector<2x128xf32>
      %504 = vector.extract_strided_slice %503 {offsets = [0, 0], sizes = [2, 32], strides = [1, 1]} : vector<2x128xf32> to vector<2x32xf32>
      %505 = vector.extract_strided_slice %472 {offsets = [0, 0], sizes = [2, 32], strides = [1, 1]} : vector<2x128xf32> to vector<2x32xf32>
      %506 = arith.addf %504, %505 : vector<2x32xf32>
      %507 = arith.negf %506 : vector<2x32xf32>
      %508 = math.exp %507 : vector<2x32xf32>
      %cst_94 = arith.constant 1.000000e+00 : f32
      %509 = vector.broadcast %cst_94 : f32 to vector<2x32xf32>
      %510 = arith.addf %509, %508 : vector<2x32xf32>
      %511 = arith.divf %509, %510 : vector<2x32xf32>
      %512 = vector.extract_strided_slice %503 {offsets = [0, 32], sizes = [2, 32], strides = [1, 1]} : vector<2x128xf32> to vector<2x32xf32>
      %513 = vector.extract_strided_slice %472 {offsets = [0, 32], sizes = [2, 32], strides = [1, 1]} : vector<2x128xf32> to vector<2x32xf32>
      %514 = arith.addf %512, %513 : vector<2x32xf32>
      %515 = arith.negf %514 : vector<2x32xf32>
      %516 = math.exp %515 : vector<2x32xf32>
      %cst_95 = arith.constant 1.000000e+00 : f32
      %517 = vector.broadcast %cst_95 : f32 to vector<2x32xf32>
      %518 = arith.addf %517, %516 : vector<2x32xf32>
      %519 = arith.divf %517, %518 : vector<2x32xf32>
      %520 = vector.extract_strided_slice %503 {offsets = [0, 64], sizes = [2, 32], strides = [1, 1]} : vector<2x128xf32> to vector<2x32xf32>
      %521 = vector.extract_strided_slice %472 {offsets = [0, 64], sizes = [2, 32], strides = [1, 1]} : vector<2x128xf32> to vector<2x32xf32>
      %522 = arith.mulf %511, %521 : vector<2x32xf32>
      %523 = arith.addf %520, %522 : vector<2x32xf32>
      %524 = math.tanh %523 : vector<2x32xf32>
      %cst_96 = arith.constant 1.000000e+00 : f32
      %525 = vector.broadcast %cst_96 : f32 to vector<2x32xf32>
      %526 = arith.subf %525, %519 : vector<2x32xf32>
      %527 = arith.mulf %526, %524 : vector<2x32xf32>
      %528 = arith.mulf %519, %460 : vector<2x32xf32>
      %529 = arith.addf %527, %528 : vector<2x32xf32>
      %530 = vector.shape_cast %463 : vector<2x1xi1> to vector<2x1xi1>
      %531 = vector.broadcast %530 : vector<2x1xi1> to vector<2x32xi1>
      %532 = arith.select %531, %529, %460 : vector<2x32xi1>, vector<2x32xf32>
      %c7_i32 = arith.constant 7 : i32
      %533 = arith.addi %0, %c7_i32 : i32
      %534 = vector.broadcast %533 : i32 to vector<2x1xi32>
      %535 = arith.cmpi slt, %534, %18 : vector<2x1xi32>
      %c2_i32_97 = arith.constant 2 : i32
      %536 = arith.muli %c7_i32, %c2_i32_97 : i32
      %537 = tpu.assume_multiple %536, 2 : i32
      %538 = arith.index_cast %537 : i32 to index
      %c0_98 = arith.constant 0 : index
      %539 = vector.load %arg13[%538, %c0_98] : memref<16x128xf32, #tpu.memory_space<vmem>>, vector<2x128xf32>
      %540 = tpu.concatenate %501, %532 in 1 : vector<2x32xf32>, vector<2x32xf32> -> vector<2x64xf32>
      %cst_99 = arith.constant dense<0.000000e+00> : vector<2x256xf32>
      %541 = tpu.matmul %540, %19, %cst_99 {dimension_numbers = #tpu.dot_dimension_numbers<[1], [0], [0], [1], [0, 0, 1, 1], [], []>} : vector<2x64xf32>, vector<64x256xf32>, vector<2x256xf32> -> vector<2x256xf32>
      %542 = arith.addf %541, %23 : vector<2x256xf32>
      %543 = vector.extract_strided_slice %542 {offsets = [0, 0], sizes = [2, 128], strides = [1, 1]} : vector<2x256xf32> to vector<2x128xf32>
      %544 = vector.extract_strided_slice %542 {offsets = [0, 128], sizes = [2, 128], strides = [1, 1]} : vector<2x256xf32> to vector<2x128xf32>
      %545 = vector.extract_strided_slice %539 {offsets = [0, 0], sizes = [2, 32], strides = [1, 1]} : vector<2x128xf32> to vector<2x32xf32>
      %546 = vector.extract_strided_slice %543 {offsets = [0, 0], sizes = [2, 32], strides = [1, 1]} : vector<2x128xf32> to vector<2x32xf32>
      %547 = arith.addf %545, %546 : vector<2x32xf32>
      %548 = arith.negf %547 : vector<2x32xf32>
      %549 = math.exp %548 : vector<2x32xf32>
      %cst_100 = arith.constant 1.000000e+00 : f32
      %550 = vector.broadcast %cst_100 : f32 to vector<2x32xf32>
      %551 = arith.addf %550, %549 : vector<2x32xf32>
      %552 = arith.divf %550, %551 : vector<2x32xf32>
      %553 = vector.extract_strided_slice %539 {offsets = [0, 32], sizes = [2, 32], strides = [1, 1]} : vector<2x128xf32> to vector<2x32xf32>
      %554 = vector.extract_strided_slice %543 {offsets = [0, 32], sizes = [2, 32], strides = [1, 1]} : vector<2x128xf32> to vector<2x32xf32>
      %555 = arith.addf %553, %554 : vector<2x32xf32>
      %556 = arith.negf %555 : vector<2x32xf32>
      %557 = math.exp %556 : vector<2x32xf32>
      %cst_101 = arith.constant 1.000000e+00 : f32
      %558 = vector.broadcast %cst_101 : f32 to vector<2x32xf32>
      %559 = arith.addf %558, %557 : vector<2x32xf32>
      %560 = arith.divf %558, %559 : vector<2x32xf32>
      %561 = vector.extract_strided_slice %539 {offsets = [0, 64], sizes = [2, 32], strides = [1, 1]} : vector<2x128xf32> to vector<2x32xf32>
      %562 = vector.extract_strided_slice %543 {offsets = [0, 64], sizes = [2, 32], strides = [1, 1]} : vector<2x128xf32> to vector<2x32xf32>
      %563 = arith.mulf %552, %562 : vector<2x32xf32>
      %564 = arith.addf %561, %563 : vector<2x32xf32>
      %565 = math.tanh %564 : vector<2x32xf32>
      %cst_102 = arith.constant 1.000000e+00 : f32
      %566 = vector.broadcast %cst_102 : f32 to vector<2x32xf32>
      %567 = arith.subf %566, %560 : vector<2x32xf32>
      %568 = arith.mulf %567, %565 : vector<2x32xf32>
      %569 = arith.mulf %560, %501 : vector<2x32xf32>
      %570 = arith.addf %568, %569 : vector<2x32xf32>
      %571 = vector.shape_cast %535 : vector<2x1xi1> to vector<2x1xi1>
      %572 = vector.broadcast %571 : vector<2x1xi1> to vector<2x32xi1>
      %573 = arith.select %572, %570, %501 : vector<2x32xi1>, vector<2x32xf32>
      %cst_103 = arith.constant dense<0.000000e+00> : vector<2x128xf32>
      %574 = tpu.matmul %573, %20, %cst_103 {dimension_numbers = #tpu.dot_dimension_numbers<[1], [0], [0], [1], [0, 0, 1, 1], [], []>} : vector<2x32xf32>, vector<32x128xf32>, vector<2x128xf32> -> vector<2x128xf32>
      %575 = arith.addf %574, %26 : vector<2x128xf32>
      %576 = vector.extract_strided_slice %575 {offsets = [0, 0], sizes = [2, 32], strides = [1, 1]} : vector<2x128xf32> to vector<2x32xf32>
      %577 = vector.extract_strided_slice %544 {offsets = [0, 0], sizes = [2, 32], strides = [1, 1]} : vector<2x128xf32> to vector<2x32xf32>
      %578 = arith.addf %576, %577 : vector<2x32xf32>
      %579 = arith.negf %578 : vector<2x32xf32>
      %580 = math.exp %579 : vector<2x32xf32>
      %cst_104 = arith.constant 1.000000e+00 : f32
      %581 = vector.broadcast %cst_104 : f32 to vector<2x32xf32>
      %582 = arith.addf %581, %580 : vector<2x32xf32>
      %583 = arith.divf %581, %582 : vector<2x32xf32>
      %584 = vector.extract_strided_slice %575 {offsets = [0, 32], sizes = [2, 32], strides = [1, 1]} : vector<2x128xf32> to vector<2x32xf32>
      %585 = vector.extract_strided_slice %544 {offsets = [0, 32], sizes = [2, 32], strides = [1, 1]} : vector<2x128xf32> to vector<2x32xf32>
      %586 = arith.addf %584, %585 : vector<2x32xf32>
      %587 = arith.negf %586 : vector<2x32xf32>
      %588 = math.exp %587 : vector<2x32xf32>
      %cst_105 = arith.constant 1.000000e+00 : f32
      %589 = vector.broadcast %cst_105 : f32 to vector<2x32xf32>
      %590 = arith.addf %589, %588 : vector<2x32xf32>
      %591 = arith.divf %589, %590 : vector<2x32xf32>
      %592 = vector.extract_strided_slice %575 {offsets = [0, 64], sizes = [2, 32], strides = [1, 1]} : vector<2x128xf32> to vector<2x32xf32>
      %593 = vector.extract_strided_slice %544 {offsets = [0, 64], sizes = [2, 32], strides = [1, 1]} : vector<2x128xf32> to vector<2x32xf32>
      %594 = arith.mulf %583, %593 : vector<2x32xf32>
      %595 = arith.addf %592, %594 : vector<2x32xf32>
      %596 = math.tanh %595 : vector<2x32xf32>
      %cst_106 = arith.constant 1.000000e+00 : f32
      %597 = vector.broadcast %cst_106 : f32 to vector<2x32xf32>
      %598 = arith.subf %597, %591 : vector<2x32xf32>
      %599 = arith.mulf %598, %596 : vector<2x32xf32>
      %600 = arith.mulf %591, %532 : vector<2x32xf32>
      %601 = arith.addf %599, %600 : vector<2x32xf32>
      %602 = vector.shape_cast %535 : vector<2x1xi1> to vector<2x1xi1>
      %603 = vector.broadcast %602 : vector<2x1xi1> to vector<2x32xi1>
      %604 = arith.select %603, %601, %532 : vector<2x32xi1>, vector<2x32xf32>
      %c8_i32_107 = arith.constant 8 : i32
      %c0_108 = arith.constant 0 : index
      %c0_109 = arith.constant 0 : index
      %605 = vector.load %arg14[%c0_108, %c0_109] : memref<2x32xf32, #tpu.memory_space<vmem>>, vector<2x32xf32>
      tpu.vector_store %arg14[%c0_108, %c0_109], %573 {strides = array<i32>} : memref<2x32xf32, #tpu.memory_space<vmem>>, vector<2x32xf32>,
      %c0_110 = arith.constant 0 : index
      %c0_111 = arith.constant 0 : index
      %606 = vector.load %arg15[%c0_110, %c0_111] : memref<2x32xf32, #tpu.memory_space<vmem>>, vector<2x32xf32>
      tpu.vector_store %arg15[%c0_110, %c0_111], %604 {strides = array<i32>} : memref<2x32xf32, #tpu.memory_space<vmem>>, vector<2x32xf32>,
    } else {
    }
    %c0_i32_2 = arith.constant 0 : i32
    %8 = arith.cmpi eq, %arg0, %c0_i32_2 : i32
    %9 = arith.extui %8 : i1 to i32
    %c0_i32_3 = arith.constant 0 : i32
    %10 = arith.cmpi ne, %9, %c0_i32_3 : i32
    scf.if %10 {
      %c0_4 = arith.constant 0 : index
      %c0_5 = arith.constant 0 : index
      %11 = vector.load %arg15[%c0_4, %c0_5] : memref<2x32xf32, #tpu.memory_space<vmem>>, vector<2x32xf32>
      %c0_6 = arith.constant 0 : index
      %c0_7 = arith.constant 0 : index
      %12 = vector.load %arg10[%c0_6, %c0_7] : memref<32x12xf32, #tpu.memory_space<vmem>>, vector<32x12xf32>
      %cst = arith.constant dense<0.000000e+00> : vector<2x12xf32>
      %13 = tpu.matmul %11, %12, %cst {dimension_numbers = #tpu.dot_dimension_numbers<[1], [0], [0], [1], [0, 0, 1, 1], [], []>} : vector<2x32xf32>, vector<32x12xf32>, vector<2x12xf32> -> vector<2x12xf32>
      %c0_8 = arith.constant 0 : index
      %c0_9 = arith.constant 0 : index
      %14 = vector.load %arg11[%c0_8, %c0_9] : memref<1x12xf32, #tpu.memory_space<vmem>>, vector<1x12xf32>
      %15 = vector.broadcast %14 : vector<1x12xf32> to vector<2x12xf32>
      %16 = arith.addf %13, %15 : vector<2x12xf32>
      %c0_10 = arith.constant 0 : index
      %c0_11 = arith.constant 0 : index
      %17 = vector.load %arg12[%c0_10, %c0_11] : memref<2x12xf32, #tpu.memory_space<vmem>>, vector<2x12xf32>
      tpu.vector_store %arg12[%c0_10, %c0_11], %16 {strides = array<i32>} : memref<2x12xf32, #tpu.memory_space<vmem>>, vector<2x12xf32>,
    } else {
    }
    return
  }
  func.func @transform_0(%arg0: i32, %arg1: memref<1xi32, #tpu.memory_space<smem>>) -> (i32, i32) {
    %c0_i32 = arith.constant 0 : i32
    %c0_i32_0 = arith.constant 0 : i32
    %c0_i32_1 = arith.constant 0 : i32
    return %c0_i32, %c0_i32_0 : i32, i32
  }
  func.func @transform_1(%arg0: i32, %arg1: memref<1xi32, #tpu.memory_space<smem>>) -> (i32, i32) {
    %c0_i32 = arith.constant 0 : i32
    %c0_i32_0 = arith.constant 0 : i32
    return %arg0, %c0_i32 : i32, i32
  }
  func.func @transform_2(%arg0: i32, %arg1: memref<1xi32, #tpu.memory_space<smem>>) -> (i32, i32) {
    %c0_i32 = arith.constant 0 : i32
    %c0_i32_0 = arith.constant 0 : i32
    %c0_i32_1 = arith.constant 0 : i32
    return %c0_i32, %c0_i32_0 : i32, i32
  }
  func.func @transform_3(%arg0: i32, %arg1: memref<1xi32, #tpu.memory_space<smem>>) -> (i32, i32) {
    %c0_i32 = arith.constant 0 : i32
    %c0_i32_0 = arith.constant 0 : i32
    %c0_i32_1 = arith.constant 0 : i32
    return %c0_i32, %c0_i32_0 : i32, i32
  }
  func.func @transform_4(%arg0: i32, %arg1: memref<1xi32, #tpu.memory_space<smem>>) -> (i32, i32) {
    %c0_i32 = arith.constant 0 : i32
    %c0_i32_0 = arith.constant 0 : i32
    %c0_i32_1 = arith.constant 0 : i32
    return %c0_i32, %c0_i32_0 : i32, i32
  }
  func.func @transform_5(%arg0: i32, %arg1: memref<1xi32, #tpu.memory_space<smem>>) -> (i32, i32) {
    %c0_i32 = arith.constant 0 : i32
    %c0_i32_0 = arith.constant 0 : i32
    %c0_i32_1 = arith.constant 0 : i32
    return %c0_i32, %c0_i32_0 : i32, i32
  }
  func.func @transform_6(%arg0: i32, %arg1: memref<1xi32, #tpu.memory_space<smem>>) -> (i32, i32) {
    %c0_i32 = arith.constant 0 : i32
    %c0_i32_0 = arith.constant 0 : i32
    %c0_i32_1 = arith.constant 0 : i32
    return %c0_i32, %c0_i32_0 : i32, i32
  }
  func.func @transform_7(%arg0: i32, %arg1: memref<1xi32, #tpu.memory_space<smem>>) -> (i32, i32) {
    %c0_i32 = arith.constant 0 : i32
    %c0_i32_0 = arith.constant 0 : i32
    %c0_i32_1 = arith.constant 0 : i32
    return %c0_i32, %c0_i32_0 : i32, i32
  }
  func.func @transform_8(%arg0: i32, %arg1: memref<1xi32, #tpu.memory_space<smem>>) -> (i32, i32) {
    %c0_i32 = arith.constant 0 : i32
    %c0_i32_0 = arith.constant 0 : i32
    %c0_i32_1 = arith.constant 0 : i32
    return %c0_i32, %c0_i32_0 : i32, i32
  }
  func.func @transform_9(%arg0: i32, %arg1: memref<1xi32, #tpu.memory_space<smem>>) -> (i32, i32) {
    %c0_i32 = arith.constant 0 : i32
    %c0_i32_0 = arith.constant 0 : i32
    %c0_i32_1 = arith.constant 0 : i32
    return %c0_i32, %c0_i32_0 : i32, i32
  }
  func.func @transform_10(%arg0: i32, %arg1: memref<1xi32, #tpu.memory_space<smem>>) -> (i32, i32) {
    %c0_i32 = arith.constant 0 : i32
    %c0_i32_0 = arith.constant 0 : i32
    %c0_i32_1 = arith.constant 0 : i32
    return %c0_i32, %c0_i32_0 : i32, i32
  }
}

</mosaic_0001>

<llo_original>
// kernel: tpu_custom_call.1
$region0: #{tpu_custom_call.1}
  #allocation0 [shape = 'u32[]', space=smem, size = 0x4, offset = 0x4, fixed_abs, tag = 'smem constant byte address 0x4 - core index']
  #allocation1 [shape = 'u32[144,128]{1,0:T(1,128)}', space=vmem, size = 0x12000, scoped, tag = 'internal scratch']
  #allocation2 [shape = 'f32[16,128]{1,0:T(8,128)}', space=vmem, size = 0x2000, scoped, tag = 'scratch operand']
  #allocation3 [shape = 'f32[2,32]{1,0:T(2,128)}', space=vmem, size = 0x400, scoped, tag = 'scratch operand']
  #allocation4 [shape = 'f32[2,32]{1,0:T(2,128)}', space=vmem, size = 0x400, scoped, tag = 'scratch operand']
  #allocation5 [shape = 's32[1]{0}', space=sflag, size = 0x4, scoped, tag = 'scoped memory for tpu_custom_call.1']
  #allocation6 [shape = 's32[1]{0:T(128)S(6)}', space=smem, size = 0x200, scoped, tag = 'prefetched SMEM operand 0']
  %s0 = inlined_call_operand.<no memory space> [shape: s32[1], index: 0, kind: input, shape index: {}]
  %s1 = inlined_call_operand.vmem [shape: s32[2,1], index: 1, kind: input, shape index: {}]
  %s2 = inlined_call_operand.vmem [shape: bf16[16,300], index: 2, kind: input, shape index: {}]
  %s3 = inlined_call_operand.hbm [shape: bf16[300,128], index: 3, kind: input, shape index: {}]
  %s4 = inlined_call_operand.vmem [shape: f32[1,128], index: 4, kind: input, shape index: {}]
  %s5 = inlined_call_operand.hbm [shape: f32[64,256], index: 5, kind: input, shape index: {}]
  %s6 = inlined_call_operand.vmem [shape: f32[1,256], index: 6, kind: input, shape index: {}]
  %s7 = inlined_call_operand.vmem [shape: f32[32,128], index: 7, kind: input, shape index: {}]
  %s8 = inlined_call_operand.vmem [shape: f32[1,128], index: 8, kind: input, shape index: {}]
  %s9 = inlined_call_operand.vmem [shape: f32[32,12], index: 9, kind: input, shape index: {}]
  %s10 = inlined_call_operand.vmem [shape: f32[1,12], index: 10, kind: input, shape index: {}]
  %s11 = inlined_call_operand.hbm [shape: f32[2,12], index: 11, kind: output, shape index: {}]
  %s12 = sld [smem:[#allocation0]]
  $region70: #{tpu_custom_call.1} parent=0
    _
  %s14 = ssub.s32 1, %s12
  %s15 = scalar_select 0, %s14, %s12
  %16 = sst [smem:[#allocation6]] %s0
  $region1: #{tpu_custom_call.1} parent=0
    #allocation7 [shape = 'u8[77824]{0}', space=vmem, size = 0x13000, scoped, tag = 'input window, operand 3, single buffered']
    #allocation8 [shape = 's32[1]{0}', space=sflag, size = 0x4, scoped, tag = 'scoped memory for tpu_custom_call.1']
    #allocation9 [shape = 's32[1]{0}', space=sflag, size = 0x4, scoped, tag = 'scoped memory for tpu_custom_call.1']
    #allocation10 [shape = 'u8[65536]{0}', space=vmem, size = 0x10000, scoped, tag = 'input window, operand 5, single buffered']
    #allocation11 [shape = 's32[1]{0}', space=sflag, size = 0x4, scoped, tag = 'scoped memory for tpu_custom_call.1']
    #allocation12 [shape = 'u8[1024]{0}', space=vmem, size = 0x400, scoped, tag = 'output window, operand 0, single buffered']
    %17 = vsyncpa [#allocation8], 0
    %18 = vsyncpa [#allocation11], 0
    %19 = vsyncpa [#allocation9], 0
    // Predicated region
    $region2: #{tpu_custom_call.1} parent=1 // pred_check
      _
    $region3: #{tpu_custom_call.1} parent=1 // pred_check_branch
      %21 = sbr.rel (0) target = $region5
    $region4: #{tpu_custom_call.1} parent=1 // pred_region
      _
    $region5: #{tpu_custom_call.1} parent=1 // pred_fallthru
      _
    // Predicated region
    $region6: #{tpu_custom_call.1} parent=1 // pred_check
      _
    $region7: #{tpu_custom_call.1} parent=1 // pred_check_branch
      %23 = sbr.rel (0) target = $region9
    $region8: #{tpu_custom_call.1} parent=1 // pred_region
      _
    $region9: #{tpu_custom_call.1} parent=1 // pred_fallthru
      _
    // Predicated region
    $region10: #{tpu_custom_call.1} parent=1 // pred_check
      _
    $region11: #{tpu_custom_call.1} parent=1 // pred_check_branch
      %25 = sbr.rel (0) target = $region13
    $region12: #{tpu_custom_call.1} parent=1 // pred_region
      %s27 = ssub.s32 2432, 2432
      %28 = vsyncadd [#allocation8], %s27
      %s29 = sshll.u32 [#allocation7], 4
      %s30 = int_to_ptr.vmem [resolvable:$true] %s29
      %35 = dma.hbm_to_vmem [thread:$0]  %s3, 2432, %s30, [#allocation8], 64, 64, 4
    $region13: #{tpu_custom_call.1} parent=1 // pred_fallthru
      _
    // Predicated region
    $region14: #{tpu_custom_call.1} parent=1 // pred_check
      _
    $region15: #{tpu_custom_call.1} parent=1 // pred_check_branch
      %37 = sbr.rel (0) target = $region17
    $region16: #{tpu_custom_call.1} parent=1 // pred_region
      _
    $region17: #{tpu_custom_call.1} parent=1 // pred_fallthru
      _
    // Predicated region
    $region18: #{tpu_custom_call.1} parent=1 // pred_check
      _
    $region19: #{tpu_custom_call.1} parent=1 // pred_check_branch
      %39 = sbr.rel (0) target = $region21
    $region20: #{tpu_custom_call.1} parent=1 // pred_region
      %s41 = ssub.s32 2048, 2048
      %42 = vsyncadd [#allocation11], %s41
      %s43 = sshll.u32 [#allocation10], 4
      %s44 = int_to_ptr.vmem [resolvable:$true] %s43
      %49 = dma.hbm_to_vmem [thread:$0]  %s5, 2048, %s44, [#allocation11], 256, 256, 16
    $region21: #{tpu_custom_call.1} parent=1 // pred_fallthru
      _
    // Predicated region
    $region22: #{tpu_custom_call.1} parent=1 // pred_check
      _
    $region23: #{tpu_custom_call.1} parent=1 // pred_check_branch
      %51 = sbr.rel (0) target = $region25
    $region24: #{tpu_custom_call.1} parent=1 // pred_region
      _
    $region25: #{tpu_custom_call.1} parent=1 // pred_fallthru
      _
    // Predicated region
    $region26: #{tpu_custom_call.1} parent=1 // pred_check
      _
    $region27: #{tpu_custom_call.1} parent=1 // pred_check_branch
      %53 = sbr.rel (0) target = $region29
    $region28: #{tpu_custom_call.1} parent=1 // pred_region
      _
    $region29: #{tpu_custom_call.1} parent=1 // pred_fallthru
      _
    // Predicated region
    $region30: #{tpu_custom_call.1} parent=1 // pred_check
      _
    $region31: #{tpu_custom_call.1} parent=1 // pred_check_branch
      %55 = sbr.rel (0) target = $region33
    $region32: #{tpu_custom_call.1} parent=1 // pred_region
      _
    $region33: #{tpu_custom_call.1} parent=1 // pred_fallthru
      _
    // Predicated region
    $region34: #{tpu_custom_call.1} parent=1 // pred_check
      _
    $region35: #{tpu_custom_call.1} parent=1 // pred_check_branch
      %57 = sbr.rel (0) target = $region37
    $region36: #{tpu_custom_call.1} parent=1 // pred_region
      _
    $region37: #{tpu_custom_call.1} parent=1 // pred_fallthru
      _
    // Predicated region
    $region38: #{tpu_custom_call.1} parent=1 // pred_check
      _
    $region39: #{tpu_custom_call.1} parent=1 // pred_check_branch
      %59 = sbr.rel (0) target = $region41
    $region40: #{tpu_custom_call.1} parent=1 // pred_region
      _
    $region41: #{tpu_custom_call.1} parent=1 // pred_fallthru
      _
    // Predicated region
    $region42: #{tpu_custom_call.1} parent=1 // pred_check
      _
    $region43: #{tpu_custom_call.1} parent=1 // pred_check_branch
      %61 = sbr.rel (0) target = $region45
    $region44: #{tpu_custom_call.1} parent=1 // pred_region
      %62 = dma.done [#allocation8], 2432
    $region45: #{tpu_custom_call.1} parent=1 // pred_fallthru
      _
    // Predicated region
    $region46: #{tpu_custom_call.1} parent=1 // pred_check
      _
    $region47: #{tpu_custom_call.1} parent=1 // pred_check_branch
      %64 = sbr.rel (0) target = $region49
    $region48: #{tpu_custom_call.1} parent=1 // pred_region
      %65 = dma.done [#allocation11], 2048
    $region49: #{tpu_custom_call.1} parent=1 // pred_fallthru
      _
    %s67 = smul.u32 0, 8
    %p68 = scmp.eq.s32.totalorder 0, 0
    // Predicated region
    $region50: #{tpu_custom_call.1} parent=1 // pred_check
      %p69 = pneg %p68
    $region51: #{tpu_custom_call.1} parent=1 // pred_check_branch
      %71 = sbr.rel (%p69) target = $region53
    $region52: #{tpu_custom_call.1} parent=1 // pred_region
      %vm72 = vcmask 254976
      %73 = vst.msk [vmem:[#allocation3] sm:$0x3] %vm72, 0.0
      %74 = vst.msk [vmem:[#allocation4] sm:$0x3] %vm72, 0.0
    $region53: #{tpu_custom_call.1} parent=1 // pred_fallthru
      _
    %s75 = sld [smem:[#allocation6]]
    %p76 = scmp.lt.s32.totalorder %s67, %s75
    // Predicated region
    $region54: #{tpu_custom_call.1} parent=1 // pred_check
      %p77 = pneg %p76
    $region55: #{tpu_custom_call.1} parent=1 // pred_check_branch
      %79 = sbr.rel (%p77) target = $region57
    $region56: #{tpu_custom_call.1} parent=1 // pred_region
      %v80 = vld [vmem:[%s2] sm:$0xff]
      %v81 = vld [vmem:[%s2 + $0x8] sm:$0xf]
      %v82 = vld [vmem:[%s2 + $0xc] sm:$0xff]
      %v83 = vld [vmem:[%s2 + $0x14] sm:$0xf]
      %v84 = vld [vmem:[#allocation7] sm:$0xf]
      %v85 = vld [vmem:[#allocation7 + $0x4] sm:$0xf]
      %v86 = vld [vmem:[#allocation7 + $0x8] sm:$0xf]
      %v87 = vld [vmem:[#allocation7 + $0xc] sm:$0xf]
      %v88 = vld [vmem:[#allocation7 + $0x10] sm:$0xf]
      %v89 = vld [vmem:[#allocation7 + $0x14] sm:$0xf]
      %v90 = vld [vmem:[#allocation7 + $0x18] sm:$0xf]
      %v91 = vld [vmem:[#allocation7 + $0x1c] sm:$0xf]
      %v92 = vld [vmem:[#allocation7 + $0x20] sm:$0xf]
      %v93 = vld [vmem:[#allocation7 + $0x24] sm:$0xf]
      %v94 = vld [vmem:[#allocation7 + $0x28] sm:$0xf]
      %v95 = vld [vmem:[#allocation7 + $0x2c] sm:$0xf]
      %v96 = vld [vmem:[#allocation7 + $0x30] sm:$0xf]
      %v97 = vld [vmem:[#allocation7 + $0x34] sm:$0xf]
      %v98 = vld [vmem:[#allocation7 + $0x38] sm:$0xf]
      %v99 = vld [vmem:[#allocation7 + $0x3c] sm:$0xf]
      %v100 = vld [vmem:[#allocation7 + $0x40] sm:$0xf]
      %v101 = vld [vmem:[#allocation7 + $0x44] sm:$0xf]
      %v102 = vld [vmem:[#allocation7 + $0x48] sm:$0xf]
      %v103 = vld [vmem:[#allocation7 + $0x4c] sm:$0xf]
      %v104 = vld [vmem:[#allocation7 + $0x50] sm:$0xf]
      %v105 = vld [vmem:[#allocation7 + $0x54] sm:$0xf]
      %v106 = vld [vmem:[#allocation7 + $0x58] sm:$0xf]
      %v107 = vld [vmem:[#allocation7 + $0x5c] sm:$0xf]
      %v108 = vld [vmem:[#allocation7 + $0x60] sm:$0xf]
      %v109 = vld [vmem:[#allocation7 + $0x64] sm:$0xf]
      %v110 = vld [vmem:[#allocation7 + $0x68] sm:$0xf]
      %v111 = vld [vmem:[#allocation7 + $0x6c] sm:$0xf]
      %v112 = vld [vmem:[#allocation7 + $0x70] sm:$0xf]
      %v113 = vld [vmem:[#allocation7 + $0x74] sm:$0xf]
      %v114 = vld [vmem:[#allocation7 + $0x78] sm:$0xf]
      %v115 = vld [vmem:[#allocation7 + $0x7c] sm:$0xf]
      %v116 = vld [vmem:[#allocation7 + $0x80] sm:$0xf]
      %v117 = vld [vmem:[#allocation7 + $0x84] sm:$0xf]
      %v118 = vld [vmem:[#allocation7 + $0x88] sm:$0xf]
      %v119 = vld [vmem:[#allocation7 + $0x8c] sm:$0xf]
      %v120 = vld [vmem:[#allocation7 + $0x90] sm:$0xf]
      %v121 = vld [vmem:[#allocation7 + $0x94] sm:$0x3]
      %v122 = vld [vmem:[%s4] sm:$0x1]
      %v124 = vlaneseq
      %v125 = vshrl.u32 %v124, 7
      %v126 = vsub.s32 0, %v125
      %v127 = vrot.slane %v122, %v126
      %v133 = vunpack.c.l.b16 %v80
      %v134 = vunpack.c.h.b16 %v80
      %v135 = vunpack.c.l.b16 %v81
      %v136 = vunpack.c.l.b16 %v82
      %v137 = vunpack.c.h.b16 %v82
      %v138 = vunpack.c.l.b16 %v83
      %v139 = vpack.c.b16 %v136, %v133
      %v140 = vpack.c.b16 %v137, %v134
      %v141 = vpack.c.b16 %v138, %v135
      %v182 = vunpack.c.l.b16 %v84
      %v183 = vunpack.c.l.b16 %v85
      %v184 = vunpack.c.l.b16 %v86
      %v185 = vunpack.c.l.b16 %v87
      %v186 = vunpack.c.l.b16 %v88
      %v187 = vunpack.c.l.b16 %v89
      %v188 = vunpack.c.l.b16 %v90
      %v189 = vunpack.c.l.b16 %v91
      %v190 = vunpack.c.l.b16 %v92
      %v191 = vunpack.c.l.b16 %v93
      %v192 = vunpack.c.l.b16 %v94
      %v193 = vunpack.c.l.b16 %v95
      %v194 = vunpack.c.l.b16 %v96
      %v195 = vunpack.c.l.b16 %v97
      %v196 = vunpack.c.l.b16 %v98
      %v197 = vunpack.c.l.b16 %v99
      %v198 = vunpack.c.l.b16 %v100
      %v199 = vunpack.c.l.b16 %v101
      %v200 = vunpack.c.l.b16 %v102
      %v201 = vunpack.c.l.b16 %v103
      %v202 = vunpack.c.l.b16 %v104
      %v203 = vunpack.c.l.b16 %v105
      %v204 = vunpack.c.l.b16 %v106
      %v205 = vunpack.c.l.b16 %v107
      %v206 = vunpack.c.l.b16 %v108
      %v207 = vunpack.c.l.b16 %v109
      %v208 = vunpack.c.l.b16 %v110
      %v209 = vunpack.c.l.b16 %v111
      %v210 = vunpack.c.l.b16 %v112
      %v211 = vunpack.c.l.b16 %v113
      %v212 = vunpack.c.l.b16 %v114
      %v213 = vunpack.c.l.b16 %v115
      %v214 = vunpack.c.l.b16 %v116
      %v215 = vunpack.c.l.b16 %v117
      %v216 = vunpack.c.l.b16 %v118
      %v217 = vunpack.c.l.b16 %v119
      %v218 = vunpack.c.l.b16 %v120
      %v219 = vunpack.c.l.b16 %v121
      %v220 = vpack.c.b16 %v183, %v182
      %v221 = vpack.c.b16 %v185, %v184
      %v222 = vpack.c.b16 %v187, %v186
      %v223 = vpack.c.b16 %v189, %v188
      %v224 = vpack.c.b16 %v191, %v190
      %v225 = vpack.c.b16 %v193, %v192
      %v226 = vpack.c.b16 %v195, %v194
      %v227 = vpack.c.b16 %v197, %v196
      %v228 = vpack.c.b16 %v199, %v198
      %v229 = vpack.c.b16 %v201, %v200
      %v230 = vpack.c.b16 %v203, %v202
      %v231 = vpack.c.b16 %v205, %v204
      %v232 = vpack.c.b16 %v207, %v206
      %v233 = vpack.c.b16 %v209, %v208
      %v234 = vpack.c.b16 %v211, %v210
      %v235 = vpack.c.b16 %v213, %v212
      %v236 = vpack.c.b16 %v215, %v214
      %v237 = vpack.c.b16 %v217, %v216
      %v238 = vpack.c.b16 %v219, %v218
      %vm257 = vcmask 359424
      %v259 = vsel %vm257, %v141, 0
      %vm261 = vcmask 1045504
      %v263 = vsel %vm261, %v238, 0
      %265 = vmatprep.subr.bf16.mxu0 0
      %266 = vmatpush1.bf16.msra.mxu0 %v220
      %267 = vmatprep.subr.bf16.mxu0 0
      %268 = vmatpush1.bf16.msra.mxu0 %v221
      %269 = vmatprep.subr.bf16.mxu0 0
      %270 = vmatpush1.bf16.msra.mxu0 %v222
      %271 = vmatprep.subr.bf16.mxu0 0
      %272 = vmatpush1.bf16.msra.mxu0 %v223
      %273 = vmatprep.subr.bf16.mxu0 0
      %274 = vmatpush1.bf16.msra.mxu0 %v224
      %275 = vmatprep.subr.bf16.mxu0 0
      %276 = vmatpush1.bf16.msra.mxu0 %v225
      %277 = vmatprep.subr.bf16.mxu0 0
      %278 = vmatpush1.bf16.msra.mxu0 %v226
      %279 = vmatprep.subr.bf16.mxu0 0
      %280 = vmatpush1.bf16.msra.mxu0 %v227
      %281 = vmatprep.subr.bf16.mxu0 0
      %282 = vmatpush1.bf16.msra.mxu0 %v228
      %283 = vmatprep.subr.bf16.mxu0 0
      %284 = vmatpush1.bf16.msra.mxu0 %v229
      %285 = vmatprep.subr.bf16.mxu0 0
      %286 = vmatpush1.bf16.msra.mxu0 %v230
      %287 = vmatprep.subr.bf16.mxu0 0
      %288 = vmatpush1.bf16.msra.mxu0 %v231
      %289 = vmatprep.subr.bf16.mxu0 0
      %290 = vmatpush1.bf16.msra.mxu0 %v232
      %291 = vmatprep.subr.bf16.mxu0 0
      %292 = vmatpush1.bf16.msra.mxu0 %v233
      %293 = vmatprep.subr.bf16.mxu0 0
      %294 = vmatpush1.bf16.msra.mxu0 %v234
      %295 = vmatprep.subr.bf16.mxu0 0
      %296 = vmatpush1.bf16.msra.mxu0 %v235
      %297 = vmatprep.mubr.bf16.mxu0 %v140
      %298 = vmatmul.mubr.bf16.gmra.mrb[0].mxu0 %v139
      %v299 = vpop.f32.mrb[0].mxu0
      %v300 = vadd.f32 %v127, %v299
      %v301 = vpop.f32.mrb[0].mxu0
      %v302 = vpop.f32.mrb[0].mxu0
      %v303 = vadd.f32 %v127, %v302
      %v304 = vpop.f32.mrb[0].mxu0
      %305 = vdwg.mxu0
      %306 = vmatprep.subr.bf16.mxu0 0
      %307 = vmatpush1.bf16.msra.mxu0 %v236
      %308 = vmatprep.subr.bf16.mxu0 0
      %309 = vmatpush1.bf16.msra.mxu0 %v237
      %310 = vmatprep.subr.bf16.mxu0 0
      %311 = vmatpush1.bf16.msra.mxu0 %v263
      %312 = vmatprep.subr.bf16.mxu0 0
      %313 = vmatpush1.bf16.msra.mxu0 0
      %314 = vmatprep.subr.bf16.mxu0 0
      %315 = vmatpush1.bf16.msra.mxu0 0
      %316 = vmatprep.subr.bf16.mxu0 0
      %317 = vmatpush1.bf16.msra.mxu0 0
      %318 = vmatprep.subr.bf16.mxu0 0
      %319 = vmatpush1.bf16.msra.mxu0 0
      %320 = vmatprep.subr.bf16.mxu0 0
      %321 = vmatpush1.bf16.msra.mxu0 0
      %322 = vmatprep.subr.bf16.mxu0 0
      %323 = vmatpush1.bf16.msra.mxu0 0
      %324 = vmatprep.subr.bf16.mxu0 0
      %325 = vmatpush1.bf16.msra.mxu0 0
      %326 = vmatprep.subr.bf16.mxu0 0
      %327 = vmatpush1.bf16.msra.mxu0 0
      %328 = vmatprep.subr.bf16.mxu0 0
      %329 = vmatpush1.bf16.msra.mxu0 0
      %330 = vmatprep.subr.bf16.mxu0 0
      %331 = vmatpush1.bf16.msra.mxu0 0
      %332 = vmatprep.subr.bf16.mxu0 0
      %333 = vmatpush1.bf16.msra.mxu0 0
      %334 = vmatprep.subr.bf16.mxu0 0
      %335 = vmatpush1.bf16.msra.mxu0 0
      %336 = vmatprep.subr.bf16.mxu0 0
      %337 = vmatpush1.bf16.msra.mxu0 0
      %338 = vmatprep.mubr.bf16.mxu0 0
      %339 = vmatmul.mubr.bf16.gmra.mrb[0].mxu0 %v259
      %v340 = vpop.f32.mrb[0].mxu0
      %v341 = vadd.f32 %v300, %v340
      %v342 = vpop.f32.mrb[0].mxu0
      %v343 = vpop.f32.mrb[0].mxu0
      %v344 = vadd.f32 %v303, %v343
      %v345 = vpop.f32.mrb[0].mxu0
      %346 = vdwg.mxu0
      %347 = vst [vmem:[#allocation2] sm:$0xff] %v341
      %348 = vst [vmem:[#allocation2 + $0x8] sm:$0xff] %v344
      %v349 = vld [vmem:[%s1] sm:$0x3]
      %v350 = vld [vmem:[#allocation10] sm:$0xff]
      %v351 = vld [vmem:[#allocation10 + $0x8] sm:$0xff]
      %v352 = vld [vmem:[#allocation10 + $0x10] sm:$0xff]
      %v353 = vld [vmem:[#allocation10 + $0x18] sm:$0xff]
      %v354 = vld [vmem:[#allocation10 + $0x20] sm:$0xff]
      %v355 = vld [vmem:[#allocation10 + $0x28] sm:$0xff]
      %v356 = vld [vmem:[#allocation10 + $0x30] sm:$0xff]
      %v357 = vld [vmem:[#allocation10 + $0x38] sm:$0xff]
      %v358 = vld [vmem:[#allocation10 + $0x40] sm:$0xff]
      %v359 = vld [vmem:[#allocation10 + $0x48] sm:$0xff]
      %v360 = vld [vmem:[#allocation10 + $0x50] sm:$0xff]
      %v361 = vld [vmem:[#allocation10 + $0x58] sm:$0xff]
      %v362 = vld [vmem:[#allocation10 + $0x60] sm:$0xff]
      %v363 = vld [vmem:[#allocation10 + $0x68] sm:$0xff]
      %v364 = vld [vmem:[#allocation10 + $0x70] sm:$0xff]
      %v365 = vld [vmem:[#allocation10 + $0x78] sm:$0xff]
      %v366 = vld [vmem:[%s7] sm:$0xff]
      %v367 = vld [vmem:[%s7 + $0x8] sm:$0xff]
      %v368 = vld [vmem:[%s7 + $0x10] sm:$0xff]
      %v369 = vld [vmem:[%s7 + $0x18] sm:$0xff]
      %v370 = vld [vmem:[%s6] sm:$0x3]
      %v372 = vlaneseq
      %v373 = vshrl.u32 %v372, 7
      %v374 = vsub.s32 0, %v373
      %v375 = vrot.slane %v370, %v374
      %v376 = vlaneseq
      %v377 = vshrl.u32 %v376, 7
      %v378 = vsub.s32 1, %v377
      %v379 = vrot.slane %v370, %v378
      %v382 = vld [vmem:[%s8] sm:$0x1]
      %v384 = vlaneseq
      %v385 = vshrl.u32 %v384, 7
      %v386 = vsub.s32 0, %v385
      %v387 = vrot.slane %v382, %v386
      %v389 = vld [vmem:[#allocation3] sm:$0x3]
      %v390 = vld [vmem:[#allocation4] sm:$0x3]
      %v391 = vstv %s67
      %vm392 = vcmp.lt.s32.totalorder %v391, %v349
      %v393 = vld [vmem:[#allocation2] sm:$0x3]
      %395 = vrot.lane.b32.xlu0 %v390, 32
      %v396 = vpop.permute.xlu0 %395
      %vm398 = vcmask 261120
      %v399 = vsel %vm398, %v389, %v396
      %vm400 = vcmask 523264
      %v402 = vsel %vm400, %v399, 0
      %404 = vmatprep.subr.mxu0 %v351
      %405 = vmatpush1.msra.mxu0 %v350
      %406 = vmatprep.subr.mxu0 %v353
      %407 = vmatpush1.msra.mxu0 %v352
      %408 = vmatprep.subr.mxu0 %v355
      %409 = vmatpush1.msra.mxu0 %v354
      %410 = vmatprep.subr.mxu0 %v357
      %411 = vmatpush1.msra.mxu0 %v356
      %412 = vmatprep.subr.mxu0 %v359
      %413 = vmatpush1.msra.mxu0 %v358
      %414 = vmatprep.subr.mxu0 %v361
      %415 = vmatpush1.msra.mxu0 %v360
      %416 = vmatprep.subr.mxu0 %v363
      %417 = vmatpush1.msra.mxu0 %v362
      %418 = vmatprep.subr.mxu0 %v365
      %419 = vmatpush1.msra.mxu0 %v364
      %420 = vmatprep.subr.mxu0 0.0
      %421 = vmatpush1.msra.mxu0 0.0
      %422 = vmatprep.subr.mxu0 0.0
      %423 = vmatpush1.msra.mxu0 0.0
      %424 = vmatprep.subr.mxu0 0.0
      %425 = vmatpush1.msra.mxu0 0.0
      %426 = vmatprep.subr.mxu0 0.0
      %427 = vmatpush1.msra.mxu0 0.0
      %428 = vmatprep.subr.mxu0 0.0
      %429 = vmatpush1.msra.mxu0 0.0
      %430 = vmatprep.subr.mxu0 0.0
      %431 = vmatpush1.msra.mxu0 0.0
      %432 = vmatprep.subr.mxu0 0.0
      %433 = vmatpush1.msra.mxu0 0.0
      %434 = vmatprep.subr.mxu0 0.0
      %435 = vmatpush1.msra.mxu0 0.0
      %436 = vmatprep.subr.mxu0 0.0
      %437 = vmatpush1.msra.mxu0 0.0
      %438 = vmatprep.subr.mxu0 0.0
      %439 = vmatpush1.msra.mxu0 0.0
      %440 = vmatprep.subr.mxu0 0.0
      %441 = vmatpush1.msra.mxu0 0.0
      %442 = vmatprep.subr.mxu0 0.0
      %443 = vmatpush1.msra.mxu0 0.0
      %444 = vmatprep.subr.mxu0 0.0
      %445 = vmatpush1.msra.mxu0 0.0
      %446 = vmatprep.subr.mxu0 0.0
      %447 = vmatpush1.msra.mxu0 0.0
      %448 = vmatprep.subr.mxu0 0.0
      %449 = vmatpush1.msra.mxu0 0.0
      %450 = vmatprep.subr.mxu0 0.0
      %451 = vmatpush1.msra.mxu0 0.0
      %452 = vmatprep.subr.mxu0 0.0
      %453 = vmatpush1.msra.mxu0 0.0
      %454 = vmatprep.subr.mxu0 0.0
      %455 = vmatpush1.msra.mxu0 0.0
      %456 = vmatprep.subr.mxu0 0.0
      %457 = vmatpush1.msra.mxu0 0.0
      %458 = vmatprep.subr.mxu0 0.0
      %459 = vmatpush1.msra.mxu0 0.0
      %460 = vmatprep.subr.mxu0 0.0
      %461 = vmatpush1.msra.mxu0 0.0
      %462 = vmatprep.subr.mxu0 0.0
      %463 = vmatpush1.msra.mxu0 0.0
      %464 = vmatprep.subr.mxu0 0.0
      %465 = vmatpush1.msra.mxu0 0.0
      %466 = vmatprep.subr.mxu0 0.0
      %467 = vmatpush1.msra.mxu0 0.0
      %468 = vmatprep.mubr.f32.mxu0 0.0
      %469 = vmatmul.mubr.f32.gmra.mrb[0].mxu0 %v402
      %v470 = vpop.f32.mrb[0].mxu0
      %v471 = vadd.f32 %v375, %v470
      %v472 = vpop.f32.mrb[0].mxu0
      %v473 = vadd.f32 %v379, %v472
      %474 = vdwg.mxu0
      %v475 = vadd.f32 %v393, %v471
      %v476 = vxor.u32 %v475, 2147483648
      %v477 = vmul.f32 %v476, 1.442695
      %v478 = vpow.pop %v477
      %v479 = vadd.f32 %v478, 1.0
      %v480 = vrcp.pop %v479
      %v481 = vmul.f32 1.0, %v480
      %483 = vrot.lane.b32.xlu0 %v471, 64
      %v484 = vpop.permute.xlu0 %483
      %v486 = vmul.f32 %v481, %v484
      %488 = vrot.lane.b32.xlu0 %v486, 64
      %v489 = vpop.permute.xlu0 %488
      %v491 = vadd.f32 %v393, %v489
      %v492 = vtanh.pop %v491
      %v493 = vsub.f32 1.0, %v481
      %495 = vrot.lane.b32.xlu0 %v492, 96
      %v496 = vpop.permute.xlu0 %495
      %v498 = vmul.f32 %v493, %v496
      %500 = vrot.lane.b32.xlu0 %v389, 32
      %v501 = vpop.permute.xlu0 %500
      %v503 = vmul.f32 %v481, %v501
      %v504 = vadd.f32 %v498, %v503
      %v505 = vsel %vm392, 1, 0
      %506 = vset.pattern.permute.xlu0 0
      %507 = vperm.xlu0 %506, %v505
      %v508 = vpop.permute.xlu0 %507
      %vm509 = vcmp.eq.s32.totalorder %v508, 1
      %v510 = vsel %vm509, %v504, %v501
      %512 = vrot.lane.b32.xlu0 %v510, 96
      %v513 = vpop.permute.xlu0 %512
      %v514 = vsel %vm398, %v513, 0
      %516 = vmatprep.subr.mxu0 0.0
      %517 = vmatpush1.msra.mxu0 %v366
      %518 = vmatprep.subr.mxu0 0.0
      %519 = vmatpush1.msra.mxu0 %v367
      %520 = vmatprep.subr.mxu0 0.0
      %521 = vmatpush1.msra.mxu0 %v368
      %522 = vmatprep.subr.mxu0 0.0
      %523 = vmatpush1.msra.mxu0 %v369
      %524 = vmatprep.subr.mxu0 0.0
      %525 = vmatpush1.msra.mxu0 0.0
      %526 = vmatprep.subr.mxu0 0.0
      %527 = vmatpush1.msra.mxu0 0.0
      %528 = vmatprep.subr.mxu0 0.0
      %529 = vmatpush1.msra.mxu0 0.0
      %530 = vmatprep.subr.mxu0 0.0
      %531 = vmatpush1.msra.mxu0 0.0
      %532 = vmatprep.subr.mxu0 0.0
      %533 = vmatpush1.msra.mxu0 0.0
      %534 = vmatprep.subr.mxu0 0.0
      %535 = vmatpush1.msra.mxu0 0.0
      %536 = vmatprep.subr.mxu0 0.0
      %537 = vmatpush1.msra.mxu0 0.0
      %538 = vmatprep.subr.mxu0 0.0
      %539 = vmatpush1.msra.mxu0 0.0
      %540 = vmatprep.subr.mxu0 0.0
      %541 = vmatpush1.msra.mxu0 0.0
      %542 = vmatprep.subr.mxu0 0.0
      %543 = vmatpush1.msra.mxu0 0.0
      %544 = vmatprep.subr.mxu0 0.0
      %545 = vmatpush1.msra.mxu0 0.0
      %546 = vmatprep.subr.mxu0 0.0
      %547 = vmatpush1.msra.mxu0 0.0
      %548 = vmatprep.subr.mxu0 0.0
      %549 = vmatpush1.msra.mxu0 0.0
      %550 = vmatprep.subr.mxu0 0.0
      %551 = vmatpush1.msra.mxu0 0.0
      %552 = vmatprep.subr.mxu0 0.0
      %553 = vmatpush1.msra.mxu0 0.0
      %554 = vmatprep.subr.mxu0 0.0
      %555 = vmatpush1.msra.mxu0 0.0
      %556 = vmatprep.subr.mxu0 0.0
      %557 = vmatpush1.msra.mxu0 0.0
      %558 = vmatprep.subr.mxu0 0.0
      %559 = vmatpush1.msra.mxu0 0.0
      %560 = vmatprep.subr.mxu0 0.0
      %561 = vmatpush1.msra.mxu0 0.0
      %562 = vmatprep.subr.mxu0 0.0
      %563 = vmatpush1.msra.mxu0 0.0
      %564 = vmatprep.subr.mxu0 0.0
      %565 = vmatpush1.msra.mxu0 0.0
      %566 = vmatprep.subr.mxu0 0.0
      %567 = vmatpush1.msra.mxu0 0.0
      %568 = vmatprep.subr.mxu0 0.0
      %569 = vmatpush1.msra.mxu0 0.0
      %570 = vmatprep.subr.mxu0 0.0
      %571 = vmatpush1.msra.mxu0 0.0
      %572 = vmatprep.subr.mxu0 0.0
      %573 = vmatpush1.msra.mxu0 0.0
      %574 = vmatprep.subr.mxu0 0.0
      %575 = vmatpush1.msra.mxu0 0.0
      %576 = vmatprep.subr.mxu0 0.0
      %577 = vmatpush1.msra.mxu0 0.0
      %578 = vmatprep.subr.mxu0 0.0
      %579 = vmatpush1.msra.mxu0 0.0
      %580 = vmatprep.mubr.f32.mxu0 0.0
      %581 = vmatmul.mubr.f32.gmra.mrb[0].mxu0 %v514
      %v582 = vpop.f32.mrb[0].mxu0
      %v583 = vadd.f32 %v387, %v582
      %v584 = vpop.f32.mrb[0].mxu0
      %585 = vdwg.mxu0
      %v586 = vadd.f32 %v583, %v473
      %v587 = vxor.u32 %v586, 2147483648
      %v588 = vmul.f32 %v587, 1.442695
      %v589 = vpow.pop %v588
      %v590 = vadd.f32 %v589, 1.0
      %v591 = vrcp.pop %v590
      %v592 = vmul.f32 1.0, %v591
      %594 = vrot.lane.b32.xlu0 %v473, 64
      %v595 = vpop.permute.xlu0 %594
      %v597 = vmul.f32 %v592, %v595
      %599 = vrot.lane.b32.xlu0 %v597, 64
      %v600 = vpop.permute.xlu0 %599
      %v602 = vadd.f32 %v583, %v600
      %v603 = vtanh.pop %v602
      %v604 = vsub.f32 1.0, %v592
      %606 = vrot.lane.b32.xlu0 %v603, 96
      %v607 = vpop.permute.xlu0 %606
      %v609 = vmul.f32 %v604, %v607
      %v610 = vmul.f32 %v592, %v396
      %v611 = vadd.f32 %v609, %v610
      %v612 = vsel %vm509, %v611, %v396
      %s613 = sadd.s32 %s67, 1
      %v614 = vstv %s613
      %vm615 = vcmp.lt.s32.totalorder %v614, %v349
      %s616 = scalar_lea.vmem [#allocation2], 2
      %v617 = vld [vmem:[%s616] sm:$0x3]
      %v619 = vsel %vm398, %v513, %v612
      %v621 = vsel %vm400, %v619, 0
      %623 = vmatprep.subr.mxu0 %v351
      %624 = vmatpush1.msra.mxu0 %v350
      %625 = vmatprep.subr.mxu0 %v353
      %626 = vmatpush1.msra.mxu0 %v352
      %627 = vmatprep.subr.mxu0 %v355
      %628 = vmatpush1.msra.mxu0 %v354
      %629 = vmatprep.subr.mxu0 %v357
      %630 = vmatpush1.msra.mxu0 %v356
      %631 = vmatprep.subr.mxu0 %v359
      %632 = vmatpush1.msra.mxu0 %v358
      %633 = vmatprep.subr.mxu0 %v361
      %634 = vmatpush1.msra.mxu0 %v360
      %635 = vmatprep.subr.mxu0 %v363
      %636 = vmatpush1.msra.mxu0 %v362
      %637 = vmatprep.subr.mxu0 %v365
      %638 = vmatpush1.msra.mxu0 %v364
      %639 = vmatprep.subr.mxu0 0.0
      %640 = vmatpush1.msra.mxu0 0.0
      %641 = vmatprep.subr.mxu0 0.0
      %642 = vmatpush1.msra.mxu0 0.0
      %643 = vmatprep.subr.mxu0 0.0
      %644 = vmatpush1.msra.mxu0 0.0
      %645 = vmatprep.subr.mxu0 0.0
      %646 = vmatpush1.msra.mxu0 0.0
      %647 = vmatprep.subr.mxu0 0.0
      %648 = vmatpush1.msra.mxu0 0.0
      %649 = vmatprep.subr.mxu0 0.0
      %650 = vmatpush1.msra.mxu0 0.0
      %651 = vmatprep.subr.mxu0 0.0
      %652 = vmatpush1.msra.mxu0 0.0
      %653 = vmatprep.subr.mxu0 0.0
      %654 = vmatpush1.msra.mxu0 0.0
      %655 = vmatprep.subr.mxu0 0.0
      %656 = vmatpush1.msra.mxu0 0.0
      %657 = vmatprep.subr.mxu0 0.0
      %658 = vmatpush1.msra.mxu0 0.0
      %659 = vmatprep.subr.mxu0 0.0
      %660 = vmatpush1.msra.mxu0 0.0
      %661 = vmatprep.subr.mxu0 0.0
      %662 = vmatpush1.msra.mxu0 0.0
      %663 = vmatprep.subr.mxu0 0.0
      %664 = vmatpush1.msra.mxu0 0.0
      %665 = vmatprep.subr.mxu0 0.0
      %666 = vmatpush1.msra.mxu0 0.0
      %667 = vmatprep.subr.mxu0 0.0
      %668 = vmatpush1.msra.mxu0 0.0
      %669 = vmatprep.subr.mxu0 0.0
      %670 = vmatpush1.msra.mxu0 0.0
      %671 = vmatprep.subr.mxu0 0.0
      %672 = vmatpush1.msra.mxu0 0.0
      %673 = vmatprep.subr.mxu0 0.0
      %674 = vmatpush1.msra.mxu0 0.0
      %675 = vmatprep.subr.mxu0 0.0
      %676 = vmatpush1.msra.mxu0 0.0
      %677 = vmatprep.subr.mxu0 0.0
      %678 = vmatpush1.msra.mxu0 0.0
      %679 = vmatprep.subr.mxu0 0.0
      %680 = vmatpush1.msra.mxu0 0.0
      %681 = vmatprep.subr.mxu0 0.0
      %682 = vmatpush1.msra.mxu0 0.0
      %683 = vmatprep.subr.mxu0 0.0
      %684 = vmatpush1.msra.mxu0 0.0
      %685 = vmatprep.subr.mxu0 0.0
      %686 = vmatpush1.msra.mxu0 0.0
      %687 = vmatprep.mubr.f32.mxu0 0.0
      %688 = vmatmul.mubr.f32.gmra.mrb[0].mxu0 %v621
      %v689 = vpop.f32.mrb[0].mxu0
      %v690 = vadd.f32 %v375, %v689
      %v691 = vpop.f32.mrb[0].mxu0
      %v692 = vadd.f32 %v379, %v691
      %693 = vdwg.mxu0
      %v694 = vadd.f32 %v617, %v690
      %v695 = vxor.u32 %v694, 2147483648
      %v696 = vmul.f32 %v695, 1.442695
      %v697 = vpow.pop %v696
      %v698 = vadd.f32 %v697, 1.0
      %v699 = vrcp.pop %v698
      %v700 = vmul.f32 1.0, %v699
      %702 = vrot.lane.b32.xlu0 %v690, 64
      %v703 = vpop.permute.xlu0 %702
      %v705 = vmul.f32 %v700, %v703
      %707 = vrot.lane.b32.xlu0 %v705, 64
      %v708 = vpop.permute.xlu0 %707
      %v710 = vadd.f32 %v617, %v708
      %v711 = vtanh.pop %v710
      %v712 = vsub.f32 1.0, %v700
      %714 = vrot.lane.b32.xlu0 %v711, 96
      %v715 = vpop.permute.xlu0 %714
      %v717 = vmul.f32 %v712, %v715
      %v718 = vmul.f32 %v700, %v510
      %v719 = vadd.f32 %v717, %v718
      %v720 = vsel %vm615, 1, 0
      %721 = vset.pattern.permute.xlu0 0
      %722 = vperm.xlu0 %721, %v720
      %v723 = vpop.permute.xlu0 %722
      %vm724 = vcmp.eq.s32.totalorder %v723, 1
      %v725 = vsel %vm724, %v719, %v510
      %727 = vrot.lane.b32.xlu0 %v725, 96
      %v728 = vpop.permute.xlu0 %727
      %v729 = vsel %vm398, %v728, 0
      %731 = vmatprep.subr.mxu0 0.0
      %732 = vmatpush1.msra.mxu0 %v366
      %733 = vmatprep.subr.mxu0 0.0
      %734 = vmatpush1.msra.mxu0 %v367
      %735 = vmatprep.subr.mxu0 0.0
      %736 = vmatpush1.msra.mxu0 %v368
      %737 = vmatprep.subr.mxu0 0.0
      %738 = vmatpush1.msra.mxu0 %v369
      %739 = vmatprep.subr.mxu0 0.0
      %740 = vmatpush1.msra.mxu0 0.0
      %741 = vmatprep.subr.mxu0 0.0
      %742 = vmatpush1.msra.mxu0 0.0
      %743 = vmatprep.subr.mxu0 0.0
      %744 = vmatpush1.msra.mxu0 0.0
      %745 = vmatprep.subr.mxu0 0.0
      %746 = vmatpush1.msra.mxu0 0.0
      %747 = vmatprep.subr.mxu0 0.0
      %748 = vmatpush1.msra.mxu0 0.0
      %749 = vmatprep.subr.mxu0 0.0
      %750 = vmatpush1.msra.mxu0 0.0
      %751 = vmatprep.subr.mxu0 0.0
      %752 = vmatpush1.msra.mxu0 0.0
      %753 = vmatprep.subr.mxu0 0.0
      %754 = vmatpush1.msra.mxu0 0.0
      %755 = vmatprep.subr.mxu0 0.0
      %756 = vmatpush1.msra.mxu0 0.0
      %757 = vmatprep.subr.mxu0 0.0
      %758 = vmatpush1.msra.mxu0 0.0
      %759 = vmatprep.subr.mxu0 0.0
      %760 = vmatpush1.msra.mxu0 0.0
      %761 = vmatprep.subr.mxu0 0.0
      %762 = vmatpush1.msra.mxu0 0.0
      %763 = vmatprep.subr.mxu0 0.0
      %764 = vmatpush1.msra.mxu0 0.0
      %765 = vmatprep.subr.mxu0 0.0
      %766 = vmatpush1.msra.mxu0 0.0
      %767 = vmatprep.subr.mxu0 0.0
      %768 = vmatpush1.msra.mxu0 0.0
      %769 = vmatprep.subr.mxu0 0.0
      %770 = vmatpush1.msra.mxu0 0.0
      %771 = vmatprep.subr.mxu0 0.0
      %772 = vmatpush1.msra.mxu0 0.0
      %773 = vmatprep.subr.mxu0 0.0
      %774 = vmatpush1.msra.mxu0 0.0
      %775 = vmatprep.subr.mxu0 0.0
      %776 = vmatpush1.msra.mxu0 0.0
      %777 = vmatprep.subr.mxu0 0.0
      %778 = vmatpush1.msra.mxu0 0.0
      %779 = vmatprep.subr.mxu0 0.0
      %780 = vmatpush1.msra.mxu0 0.0
      %781 = vmatprep.subr.mxu0 0.0
      %782 = vmatpush1.msra.mxu0 0.0
      %783 = vmatprep.subr.mxu0 0.0
      %784 = vmatpush1.msra.mxu0 0.0
      %785 = vmatprep.subr.mxu0 0.0
      %786 = vmatpush1.msra.mxu0 0.0
      %787 = vmatprep.subr.mxu0 0.0
      %788 = vmatpush1.msra.mxu0 0.0
      %789 = vmatprep.subr.mxu0 0.0
      %790 = vmatpush1.msra.mxu0 0.0
      %791 = vmatprep.subr.mxu0 0.0
      %792 = vmatpush1.msra.mxu0 0.0
      %793 = vmatprep.subr.mxu0 0.0
      %794 = vmatpush1.msra.mxu0 0.0
      %795 = vmatprep.mubr.f32.mxu0 0.0
      %796 = vmatmul.mubr.f32.gmra.mrb[0].mxu0 %v729
      %v797 = vpop.f32.mrb[0].mxu0
      %v798 = vadd.f32 %v387, %v797
      %v799 = vpop.f32.mrb[0].mxu0
      %800 = vdwg.mxu0
      %v801 = vadd.f32 %v798, %v692
      %v802 = vxor.u32 %v801, 2147483648
      %v803 = vmul.f32 %v802, 1.442695
      %v804 = vpow.pop %v803
      %v805 = vadd.f32 %v804, 1.0
      %v806 = vrcp.pop %v805
      %v807 = vmul.f32 1.0, %v806
      %809 = vrot.lane.b32.xlu0 %v692, 64
      %v810 = vpop.permute.xlu0 %809
      %v812 = vmul.f32 %v807, %v810
      %814 = vrot.lane.b32.xlu0 %v812, 64
      %v815 = vpop.permute.xlu0 %814
      %v817 = vadd.f32 %v798, %v815
      %v818 = vtanh.pop %v817
      %v819 = vsub.f32 1.0, %v807
      %821 = vrot.lane.b32.xlu0 %v818, 96
      %v822 = vpop.permute.xlu0 %821
      %v824 = vmul.f32 %v819, %v822
      %v825 = vmul.f32 %v807, %v612
      %v826 = vadd.f32 %v824, %v825
      %v827 = vsel %vm724, %v826, %v612
      %s828 = sadd.s32 %s67, 2
      %v829 = vstv %s828
      %vm830 = vcmp.lt.s32.totalorder %v829, %v349
      %s831 = scalar_lea.vmem [#allocation2], 4
      %v832 = vld [vmem:[%s831] sm:$0x3]
      %v834 = vsel %vm398, %v728, %v827
      %v836 = vsel %vm400, %v834, 0
      %838 = vmatprep.subr.mxu0 %v351
      %839 = vmatpush1.msra.mxu0 %v350
      %840 = vmatprep.subr.mxu0 %v353
      %841 = vmatpush1.msra.mxu0 %v352
      %842 = vmatprep.subr.mxu0 %v355
      %843 = vmatpush1.msra.mxu0 %v354
      %844 = vmatprep.subr.mxu0 %v357
      %845 = vmatpush1.msra.mxu0 %v356
      %846 = vmatprep.subr.mxu0 %v359
      %847 = vmatpush1.msra.mxu0 %v358
      %848 = vmatprep.subr.mxu0 %v361
      %849 = vmatpush1.msra.mxu0 %v360
      %850 = vmatprep.subr.mxu0 %v363
      %851 = vmatpush1.msra.mxu0 %v362
      %852 = vmatprep.subr.mxu0 %v365
      %853 = vmatpush1.msra.mxu0 %v364
      %854 = vmatprep.subr.mxu0 0.0
      %855 = vmatpush1.msra.mxu0 0.0
      %856 = vmatprep.subr.mxu0 0.0
      %857 = vmatpush1.msra.mxu0 0.0
      %858 = vmatprep.subr.mxu0 0.0
      %859 = vmatpush1.msra.mxu0 0.0
      %860 = vmatprep.subr.mxu0 0.0
      %861 = vmatpush1.msra.mxu0 0.0
      %862 = vmatprep.subr.mxu0 0.0
      %863 = vmatpush1.msra.mxu0 0.0
      %864 = vmatprep.subr.mxu0 0.0
      %865 = vmatpush1.msra.mxu0 0.0
      %866 = vmatprep.subr.mxu0 0.0
      %867 = vmatpush1.msra.mxu0 0.0
      %868 = vmatprep.subr.mxu0 0.0
      %869 = vmatpush1.msra.mxu0 0.0
      %870 = vmatprep.subr.mxu0 0.0
      %871 = vmatpush1.msra.mxu0 0.0
      %872 = vmatprep.subr.mxu0 0.0
      %873 = vmatpush1.msra.mxu0 0.0
      %874 = vmatprep.subr.mxu0 0.0
      %875 = vmatpush1.msra.mxu0 0.0
      %876 = vmatprep.subr.mxu0 0.0
      %877 = vmatpush1.msra.mxu0 0.0
      %878 = vmatprep.subr.mxu0 0.0
      %879 = vmatpush1.msra.mxu0 0.0
      %880 = vmatprep.subr.mxu0 0.0
      %881 = vmatpush1.msra.mxu0 0.0
      %882 = vmatprep.subr.mxu0 0.0
      %883 = vmatpush1.msra.mxu0 0.0
      %884 = vmatprep.subr.mxu0 0.0
      %885 = vmatpush1.msra.mxu0 0.0
      %886 = vmatprep.subr.mxu0 0.0
      %887 = vmatpush1.msra.mxu0 0.0
      %888 = vmatprep.subr.mxu0 0.0
      %889 = vmatpush1.msra.mxu0 0.0
      %890 = vmatprep.subr.mxu0 0.0
      %891 = vmatpush1.msra.mxu0 0.0
      %892 = vmatprep.subr.mxu0 0.0
      %893 = vmatpush1.msra.mxu0 0.0
      %894 = vmatprep.subr.mxu0 0.0
      %895 = vmatpush1.msra.mxu0 0.0
      %896 = vmatprep.subr.mxu0 0.0
      %897 = vmatpush1.msra.mxu0 0.0
      %898 = vmatprep.subr.mxu0 0.0
      %899 = vmatpush1.msra.mxu0 0.0
      %900 = vmatprep.subr.mxu0 0.0
      %901 = vmatpush1.msra.mxu0 0.0
      %902 = vmatprep.mubr.f32.mxu0 0.0
      %903 = vmatmul.mubr.f32.gmra.mrb[0].mxu0 %v836
      %v904 = vpop.f32.mrb[0].mxu0
      %v905 = vadd.f32 %v375, %v904
      %v906 = vpop.f32.mrb[0].mxu0
      %v907 = vadd.f32 %v379, %v906
      %908 = vdwg.mxu0
      %v909 = vadd.f32 %v832, %v905
      %v910 = vxor.u32 %v909, 2147483648
      %v911 = vmul.f32 %v910, 1.442695
      %v912 = vpow.pop %v911
      %v913 = vadd.f32 %v912, 1.0
      %v914 = vrcp.pop %v913
      %v915 = vmul.f32 1.0, %v914
      %917 = vrot.lane.b32.xlu0 %v905, 64
      %v918 = vpop.permute.xlu0 %917
      %v920 = vmul.f32 %v915, %v918
      %922 = vrot.lane.b32.xlu0 %v920, 64
      %v923 = vpop.permute.xlu0 %922
      %v925 = vadd.f32 %v832, %v923
      %v926 = vtanh.pop %v925
      %v927 = vsub.f32 1.0, %v915
      %929 = vrot.lane.b32.xlu0 %v926, 96
      %v930 = vpop.permute.xlu0 %929
      %v932 = vmul.f32 %v927, %v930
      %v933 = vmul.f32 %v915, %v725
      %v934 = vadd.f32 %v932, %v933
      %v935 = vsel %vm830, 1, 0
      %936 = vset.pattern.permute.xlu0 0
      %937 = vperm.xlu0 %936, %v935
      %v938 = vpop.permute.xlu0 %937
      %vm939 = vcmp.eq.s32.totalorder %v938, 1
      %v940 = vsel %vm939, %v934, %v725
      %942 = vrot.lane.b32.xlu0 %v940, 96
      %v943 = vpop.permute.xlu0 %942
      %v944 = vsel %vm398, %v943, 0
      %946 = vmatprep.subr.mxu0 0.0
      %947 = vmatpush1.msra.mxu0 %v366
      %948 = vmatprep.subr.mxu0 0.0
      %949 = vmatpush1.msra.mxu0 %v367
      %950 = vmatprep.subr.mxu0 0.0
      %951 = vmatpush1.msra.mxu0 %v368
      %952 = vmatprep.subr.mxu0 0.0
      %953 = vmatpush1.msra.mxu0 %v369
      %954 = vmatprep.subr.mxu0 0.0
      %955 = vmatpush1.msra.mxu0 0.0
      %956 = vmatprep.subr.mxu0 0.0
      %957 = vmatpush1.msra.mxu0 0.0
      %958 = vmatprep.subr.mxu0 0.0
      %959 = vmatpush1.msra.mxu0 0.0
      %960 = vmatprep.subr.mxu0 0.0
      %961 = vmatpush1.msra.mxu0 0.0
      %962 = vmatprep.subr.mxu0 0.0
      %963 = vmatpush1.msra.mxu0 0.0
      %964 = vmatprep.subr.mxu0 0.0
      %965 = vmatpush1.msra.mxu0 0.0
      %966 = vmatprep.subr.mxu0 0.0
      %967 = vmatpush1.msra.mxu0 0.0
      %968 = vmatprep.subr.mxu0 0.0
      %969 = vmatpush1.msra.mxu0 0.0
      %970 = vmatprep.subr.mxu0 0.0
      %971 = vmatpush1.msra.mxu0 0.0
      %972 = vmatprep.subr.mxu0 0.0
      %973 = vmatpush1.msra.mxu0 0.0
      %974 = vmatprep.subr.mxu0 0.0
      %975 = vmatpush1.msra.mxu0 0.0
      %976 = vmatprep.subr.mxu0 0.0
      %977 = vmatpush1.msra.mxu0 0.0
      %978 = vmatprep.subr.mxu0 0.0
      %979 = vmatpush1.msra.mxu0 0.0
      %980 = vmatprep.subr.mxu0 0.0
      %981 = vmatpush1.msra.mxu0 0.0
      %982 = vmatprep.subr.mxu0 0.0
      %983 = vmatpush1.msra.mxu0 0.0
      %984 = vmatprep.subr.mxu0 0.0
      %985 = vmatpush1.msra.mxu0 0.0
      %986 = vmatprep.subr.mxu0 0.0
      %987 = vmatpush1.msra.mxu0 0.0
      %988 = vmatprep.subr.mxu0 0.0
      %989 = vmatpush1.msra.mxu0 0.0
      %990 = vmatprep.subr.mxu0 0.0
      %991 = vmatpush1.msra.mxu0 0.0
      %992 = vmatprep.subr.mxu0 0.0
      %993 = vmatpush1.msra.mxu0 0.0
      %994 = vmatprep.subr.mxu0 0.0
      %995 = vmatpush1.msra.mxu0 0.0
      %996 = vmatprep.subr.mxu0 0.0
      %997 = vmatpush1.msra.mxu0 0.0
      %998 = vmatprep.subr.mxu0 0.0
      %999 = vmatpush1.msra.mxu0 0.0
      %1000 = vmatprep.subr.mxu0 0.0
      %1001 = vmatpush1.msra.mxu0 0.0
      %1002 = vmatprep.subr.mxu0 0.0
      %1003 = vmatpush1.msra.mxu0 0.0
      %1004 = vmatprep.subr.mxu0 0.0
      %1005 = vmatpush1.msra.mxu0 0.0
      %1006 = vmatprep.subr.mxu0 0.0
      %1007 = vmatpush1.msra.mxu0 0.0
      %1008 = vmatprep.subr.mxu0 0.0
      %1009 = vmatpush1.msra.mxu0 0.0
      %1010 = vmatprep.mubr.f32.mxu0 0.0
      %1011 = vmatmul.mubr.f32.gmra.mrb[0].mxu0 %v944
      %v1012 = vpop.f32.mrb[0].mxu0
      %v1013 = vadd.f32 %v387, %v1012
      %v1014 = vpop.f32.mrb[0].mxu0
      %1015 = vdwg.mxu0
      %v1016 = vadd.f32 %v1013, %v907
      %v1017 = vxor.u32 %v1016, 2147483648
      %v1018 = vmul.f32 %v1017, 1.442695
      %v1019 = vpow.pop %v1018
      %v1020 = vadd.f32 %v1019, 1.0
      %v1021 = vrcp.pop %v1020
      %v1022 = vmul.f32 1.0, %v1021
      %1024 = vrot.lane.b32.xlu0 %v907, 64
      %v1025 = vpop.permute.xlu0 %1024
      %v1027 = vmul.f32 %v1022, %v1025
      %1029 = vrot.lane.b32.xlu0 %v1027, 64
      %v1030 = vpop.permute.xlu0 %1029
      %v1032 = vadd.f32 %v1013, %v1030
      %v1033 = vtanh.pop %v1032
      %v1034 = vsub.f32 1.0, %v1022
      %1036 = vrot.lane.b32.xlu0 %v1033, 96
      %v1037 = vpop.permute.xlu0 %1036
      %v1039 = vmul.f32 %v1034, %v1037
      %v1040 = vmul.f32 %v1022, %v827
      %v1041 = vadd.f32 %v1039, %v1040
      %v1042 = vsel %vm939, %v1041, %v827
      %s1043 = sadd.s32 %s67, 3
      %v1044 = vstv %s1043
      %vm1045 = vcmp.lt.s32.totalorder %v1044, %v349
      %s1046 = scalar_lea.vmem [#allocation2], 6
      %v1047 = vld [vmem:[%s1046] sm:$0x3]
      %v1049 = vsel %vm398, %v943, %v1042
      %v1051 = vsel %vm400, %v1049, 0
      %1053 = vmatprep.subr.mxu0 %v351
      %1054 = vmatpush1.msra.mxu0 %v350
      %1055 = vmatprep.subr.mxu0 %v353
      %1056 = vmatpush1.msra.mxu0 %v352
      %1057 = vmatprep.subr.mxu0 %v355
      %1058 = vmatpush1.msra.mxu0 %v354
      %1059 = vmatprep.subr.mxu0 %v357
      %1060 = vmatpush1.msra.mxu0 %v356
      %1061 = vmatprep.subr.mxu0 %v359
      %1062 = vmatpush1.msra.mxu0 %v358
      %1063 = vmatprep.subr.mxu0 %v361
      %1064 = vmatpush1.msra.mxu0 %v360
      %1065 = vmatprep.subr.mxu0 %v363
      %1066 = vmatpush1.msra.mxu0 %v362
      %1067 = vmatprep.subr.mxu0 %v365
      %1068 = vmatpush1.msra.mxu0 %v364
      %1069 = vmatprep.subr.mxu0 0.0
      %1070 = vmatpush1.msra.mxu0 0.0
      %1071 = vmatprep.subr.mxu0 0.0
      %1072 = vmatpush1.msra.mxu0 0.0
      %1073 = vmatprep.subr.mxu0 0.0
      %1074 = vmatpush1.msra.mxu0 0.0
      %1075 = vmatprep.subr.mxu0 0.0
      %1076 = vmatpush1.msra.mxu0 0.0
      %1077 = vmatprep.subr.mxu0 0.0
      %1078 = vmatpush1.msra.mxu0 0.0
      %1079 = vmatprep.subr.mxu0 0.0
      %1080 = vmatpush1.msra.mxu0 0.0
      %1081 = vmatprep.subr.mxu0 0.0
      %1082 = vmatpush1.msra.mxu0 0.0
      %1083 = vmatprep.subr.mxu0 0.0
      %1084 = vmatpush1.msra.mxu0 0.0
      %1085 = vmatprep.subr.mxu0 0.0
      %1086 = vmatpush1.msra.mxu0 0.0
      %1087 = vmatprep.subr.mxu0 0.0
      %1088 = vmatpush1.msra.mxu0 0.0
      %1089 = vmatprep.subr.mxu0 0.0
      %1090 = vmatpush1.msra.mxu0 0.0
      %1091 = vmatprep.subr.mxu0 0.0
      %1092 = vmatpush1.msra.mxu0 0.0
      %1093 = vmatprep.subr.mxu0 0.0
      %1094 = vmatpush1.msra.mxu0 0.0
      %1095 = vmatprep.subr.mxu0 0.0
      %1096 = vmatpush1.msra.mxu0 0.0
      %1097 = vmatprep.subr.mxu0 0.0
      %1098 = vmatpush1.msra.mxu0 0.0
      %1099 = vmatprep.subr.mxu0 0.0
      %1100 = vmatpush1.msra.mxu0 0.0
      %1101 = vmatprep.subr.mxu0 0.0
      %1102 = vmatpush1.msra.mxu0 0.0
      %1103 = vmatprep.subr.mxu0 0.0
      %1104 = vmatpush1.msra.mxu0 0.0
      %1105 = vmatprep.subr.mxu0 0.0
      %1106 = vmatpush1.msra.mxu0 0.0
      %1107 = vmatprep.subr.mxu0 0.0
      %1108 = vmatpush1.msra.mxu0 0.0
      %1109 = vmatprep.subr.mxu0 0.0
      %1110 = vmatpush1.msra.mxu0 0.0
      %1111 = vmatprep.subr.mxu0 0.0
      %1112 = vmatpush1.msra.mxu0 0.0
      %1113 = vmatprep.subr.mxu0 0.0
      %1114 = vmatpush1.msra.mxu0 0.0
      %1115 = vmatprep.subr.mxu0 0.0
      %1116 = vmatpush1.msra.mxu0 0.0
      %1117 = vmatprep.mubr.f32.mxu0 0.0
      %1118 = vmatmul.mubr.f32.gmra.mrb[0].mxu0 %v1051
      %v1119 = vpop.f32.mrb[0].mxu0
      %v1120 = vadd.f32 %v375, %v1119
      %v1121 = vpop.f32.mrb[0].mxu0
      %v1122 = vadd.f32 %v379, %v1121
      %1123 = vdwg.mxu0
      %v1124 = vadd.f32 %v1047, %v1120
      %v1125 = vxor.u32 %v1124, 2147483648
      %v1126 = vmul.f32 %v1125, 1.442695
      %v1127 = vpow.pop %v1126
      %v1128 = vadd.f32 %v1127, 1.0
      %v1129 = vrcp.pop %v1128
      %v1130 = vmul.f32 1.0, %v1129
      %1132 = vrot.lane.b32.xlu0 %v1120, 64
      %v1133 = vpop.permute.xlu0 %1132
      %v1135 = vmul.f32 %v1130, %v1133
      %1137 = vrot.lane.b32.xlu0 %v1135, 64
      %v1138 = vpop.permute.xlu0 %1137
      %v1140 = vadd.f32 %v1047, %v1138
      %v1141 = vtanh.pop %v1140
      %v1142 = vsub.f32 1.0, %v1130
      %1144 = vrot.lane.b32.xlu0 %v1141, 96
      %v1145 = vpop.permute.xlu0 %1144
      %v1147 = vmul.f32 %v1142, %v1145
      %v1148 = vmul.f32 %v1130, %v940
      %v1149 = vadd.f32 %v1147, %v1148
      %v1150 = vsel %vm1045, 1, 0
      %1151 = vset.pattern.permute.xlu0 0
      %1152 = vperm.xlu0 %1151, %v1150
      %v1153 = vpop.permute.xlu0 %1152
      %vm1154 = vcmp.eq.s32.totalorder %v1153, 1
      %v1155 = vsel %vm1154, %v1149, %v940
      %1157 = vrot.lane.b32.xlu0 %v1155, 96
      %v1158 = vpop.permute.xlu0 %1157
      %v1159 = vsel %vm398, %v1158, 0
      %1161 = vmatprep.subr.mxu0 0.0
      %1162 = vmatpush1.msra.mxu0 %v366
      %1163 = vmatprep.subr.mxu0 0.0
      %1164 = vmatpush1.msra.mxu0 %v367
      %1165 = vmatprep.subr.mxu0 0.0
      %1166 = vmatpush1.msra.mxu0 %v368
      %1167 = vmatprep.subr.mxu0 0.0
      %1168 = vmatpush1.msra.mxu0 %v369
      %1169 = vmatprep.subr.mxu0 0.0
      %1170 = vmatpush1.msra.mxu0 0.0
      %1171 = vmatprep.subr.mxu0 0.0
      %1172 = vmatpush1.msra.mxu0 0.0
      %1173 = vmatprep.subr.mxu0 0.0
      %1174 = vmatpush1.msra.mxu0 0.0
      %1175 = vmatprep.subr.mxu0 0.0
      %1176 = vmatpush1.msra.mxu0 0.0
      %1177 = vmatprep.subr.mxu0 0.0
      %1178 = vmatpush1.msra.mxu0 0.0
      %1179 = vmatprep.subr.mxu0 0.0
      %1180 = vmatpush1.msra.mxu0 0.0
      %1181 = vmatprep.subr.mxu0 0.0
      %1182 = vmatpush1.msra.mxu0 0.0
      %1183 = vmatprep.subr.mxu0 0.0
      %1184 = vmatpush1.msra.mxu0 0.0
      %1185 = vmatprep.subr.mxu0 0.0
      %1186 = vmatpush1.msra.mxu0 0.0
      %1187 = vmatprep.subr.mxu0 0.0
      %1188 = vmatpush1.msra.mxu0 0.0
      %1189 = vmatprep.subr.mxu0 0.0
      %1190 = vmatpush1.msra.mxu0 0.0
      %1191 = vmatprep.subr.mxu0 0.0
      %1192 = vmatpush1.msra.mxu0 0.0
      %1193 = vmatprep.subr.mxu0 0.0
      %1194 = vmatpush1.msra.mxu0 0.0
      %1195 = vmatprep.subr.mxu0 0.0
      %1196 = vmatpush1.msra.mxu0 0.0
      %1197 = vmatprep.subr.mxu0 0.0
      %1198 = vmatpush1.msra.mxu0 0.0
      %1199 = vmatprep.subr.mxu0 0.0
      %1200 = vmatpush1.msra.mxu0 0.0
      %1201 = vmatprep.subr.mxu0 0.0
      %1202 = vmatpush1.msra.mxu0 0.0
      %1203 = vmatprep.subr.mxu0 0.0
      %1204 = vmatpush1.msra.mxu0 0.0
      %1205 = vmatprep.subr.mxu0 0.0
      %1206 = vmatpush1.msra.mxu0 0.0
      %1207 = vmatprep.subr.mxu0 0.0
      %1208 = vmatpush1.msra.mxu0 0.0
      %1209 = vmatprep.subr.mxu0 0.0
      %1210 = vmatpush1.msra.mxu0 0.0
      %1211 = vmatprep.subr.mxu0 0.0
      %1212 = vmatpush1.msra.mxu0 0.0
      %1213 = vmatprep.subr.mxu0 0.0
      %1214 = vmatpush1.msra.mxu0 0.0
      %1215 = vmatprep.subr.mxu0 0.0
      %1216 = vmatpush1.msra.mxu0 0.0
      %1217 = vmatprep.subr.mxu0 0.0
      %1218 = vmatpush1.msra.mxu0 0.0
      %1219 = vmatprep.subr.mxu0 0.0
      %1220 = vmatpush1.msra.mxu0 0.0
      %1221 = vmatprep.subr.mxu0 0.0
      %1222 = vmatpush1.msra.mxu0 0.0
      %1223 = vmatprep.subr.mxu0 0.0
      %1224 = vmatpush1.msra.mxu0 0.0
      %1225 = vmatprep.mubr.f32.mxu0 0.0
      %1226 = vmatmul.mubr.f32.gmra.mrb[0].mxu0 %v1159
      %v1227 = vpop.f32.mrb[0].mxu0
      %v1228 = vadd.f32 %v387, %v1227
      %v1229 = vpop.f32.mrb[0].mxu0
      %1230 = vdwg.mxu0
      %v1231 = vadd.f32 %v1228, %v1122
      %v1232 = vxor.u32 %v1231, 2147483648
      %v1233 = vmul.f32 %v1232, 1.442695
      %v1234 = vpow.pop %v1233
      %v1235 = vadd.f32 %v1234, 1.0
      %v1236 = vrcp.pop %v1235
      %v1237 = vmul.f32 1.0, %v1236
      %1239 = vrot.lane.b32.xlu0 %v1122, 64
      %v1240 = vpop.permute.xlu0 %1239
      %v1242 = vmul.f32 %v1237, %v1240
      %1244 = vrot.lane.b32.xlu0 %v1242, 64
      %v1245 = vpop.permute.xlu0 %1244
      %v1247 = vadd.f32 %v1228, %v1245
      %v1248 = vtanh.pop %v1247
      %v1249 = vsub.f32 1.0, %v1237
      %1251 = vrot.lane.b32.xlu0 %v1248, 96
      %v1252 = vpop.permute.xlu0 %1251
      %v1254 = vmul.f32 %v1249, %v1252
      %v1255 = vmul.f32 %v1237, %v1042
      %v1256 = vadd.f32 %v1254, %v1255
      %v1257 = vsel %vm1154, %v1256, %v1042
      %s1258 = sadd.s32 %s67, 4
      %v1259 = vstv %s1258
      %vm1260 = vcmp.lt.s32.totalorder %v1259, %v349
      %s1261 = scalar_lea.vmem [#allocation2], 8
      %v1262 = vld [vmem:[%s1261] sm:$0x3]
      %v1264 = vsel %vm398, %v1158, %v1257
      %v1266 = vsel %vm400, %v1264, 0
      %1268 = vmatprep.subr.mxu0 %v351
      %1269 = vmatpush1.msra.mxu0 %v350
      %1270 = vmatprep.subr.mxu0 %v353
      %1271 = vmatpush1.msra.mxu0 %v352
      %1272 = vmatprep.subr.mxu0 %v355
      %1273 = vmatpush1.msra.mxu0 %v354
      %1274 = vmatprep.subr.mxu0 %v357
      %1275 = vmatpush1.msra.mxu0 %v356
      %1276 = vmatprep.subr.mxu0 %v359
      %1277 = vmatpush1.msra.mxu0 %v358
      %1278 = vmatprep.subr.mxu0 %v361
      %1279 = vmatpush1.msra.mxu0 %v360
      %1280 = vmatprep.subr.mxu0 %v363
      %1281 = vmatpush1.msra.mxu0 %v362
      %1282 = vmatprep.subr.mxu0 %v365
      %1283 = vmatpush1.msra.mxu0 %v364
      %1284 = vmatprep.subr.mxu0 0.0
      %1285 = vmatpush1.msra.mxu0 0.0
      %1286 = vmatprep.subr.mxu0 0.0
      %1287 = vmatpush1.msra.mxu0 0.0
      %1288 = vmatprep.subr.mxu0 0.0
      %1289 = vmatpush1.msra.mxu0 0.0
      %1290 = vmatprep.subr.mxu0 0.0
      %1291 = vmatpush1.msra.mxu0 0.0
      %1292 = vmatprep.subr.mxu0 0.0
      %1293 = vmatpush1.msra.mxu0 0.0
      %1294 = vmatprep.subr.mxu0 0.0
      %1295 = vmatpush1.msra.mxu0 0.0
      %1296 = vmatprep.subr.mxu0 0.0
      %1297 = vmatpush1.msra.mxu0 0.0
      %1298 = vmatprep.subr.mxu0 0.0
      %1299 = vmatpush1.msra.mxu0 0.0
      %1300 = vmatprep.subr.mxu0 0.0
      %1301 = vmatpush1.msra.mxu0 0.0
      %1302 = vmatprep.subr.mxu0 0.0
      %1303 = vmatpush1.msra.mxu0 0.0
      %1304 = vmatprep.subr.mxu0 0.0
      %1305 = vmatpush1.msra.mxu0 0.0
      %1306 = vmatprep.subr.mxu0 0.0
      %1307 = vmatpush1.msra.mxu0 0.0
      %1308 = vmatprep.subr.mxu0 0.0
      %1309 = vmatpush1.msra.mxu0 0.0
      %1310 = vmatprep.subr.mxu0 0.0
      %1311 = vmatpush1.msra.mxu0 0.0
      %1312 = vmatprep.subr.mxu0 0.0
      %1313 = vmatpush1.msra.mxu0 0.0
      %1314 = vmatprep.subr.mxu0 0.0
      %1315 = vmatpush1.msra.mxu0 0.0
      %1316 = vmatprep.subr.mxu0 0.0
      %1317 = vmatpush1.msra.mxu0 0.0
      %1318 = vmatprep.subr.mxu0 0.0
      %1319 = vmatpush1.msra.mxu0 0.0
      %1320 = vmatprep.subr.mxu0 0.0
      %1321 = vmatpush1.msra.mxu0 0.0
      %1322 = vmatprep.subr.mxu0 0.0
      %1323 = vmatpush1.msra.mxu0 0.0
      %1324 = vmatprep.subr.mxu0 0.0
      %1325 = vmatpush1.msra.mxu0 0.0
      %1326 = vmatprep.subr.mxu0 0.0
      %1327 = vmatpush1.msra.mxu0 0.0
      %1328 = vmatprep.subr.mxu0 0.0
      %1329 = vmatpush1.msra.mxu0 0.0
      %1330 = vmatprep.subr.mxu0 0.0
      %1331 = vmatpush1.msra.mxu0 0.0
      %1332 = vmatprep.mubr.f32.mxu0 0.0
      %1333 = vmatmul.mubr.f32.gmra.mrb[0].mxu0 %v1266
      %v1334 = vpop.f32.mrb[0].mxu0
      %v1335 = vadd.f32 %v375, %v1334
      %v1336 = vpop.f32.mrb[0].mxu0
      %v1337 = vadd.f32 %v379, %v1336
      %1338 = vdwg.mxu0
      %v1339 = vadd.f32 %v1262, %v1335
      %v1340 = vxor.u32 %v1339, 2147483648
      %v1341 = vmul.f32 %v1340, 1.442695
      %v1342 = vpow.pop %v1341
      %v1343 = vadd.f32 %v1342, 1.0
      %v1344 = vrcp.pop %v1343
      %v1345 = vmul.f32 1.0, %v1344
      %1347 = vrot.lane.b32.xlu0 %v1335, 64
      %v1348 = vpop.permute.xlu0 %1347
      %v1350 = vmul.f32 %v1345, %v1348
      %1352 = vrot.lane.b32.xlu0 %v1350, 64
      %v1353 = vpop.permute.xlu0 %1352
      %v1355 = vadd.f32 %v1262, %v1353
      %v1356 = vtanh.pop %v1355
      %v1357 = vsub.f32 1.0, %v1345
      %1359 = vrot.lane.b32.xlu0 %v1356, 96
      %v1360 = vpop.permute.xlu0 %1359
      %v1362 = vmul.f32 %v1357, %v1360
      %v1363 = vmul.f32 %v1345, %v1155
      %v1364 = vadd.f32 %v1362, %v1363
      %v1365 = vsel %vm1260, 1, 0
      %1366 = vset.pattern.permute.xlu0 0
      %1367 = vperm.xlu0 %1366, %v1365
      %v1368 = vpop.permute.xlu0 %1367
      %vm1369 = vcmp.eq.s32.totalorder %v1368, 1
      %v1370 = vsel %vm1369, %v1364, %v1155
      %1372 = vrot.lane.b32.xlu0 %v1370, 96
      %v1373 = vpop.permute.xlu0 %1372
      %v1374 = vsel %vm398, %v1373, 0
      %1376 = vmatprep.subr.mxu0 0.0
      %1377 = vmatpush1.msra.mxu0 %v366
      %1378 = vmatprep.subr.mxu0 0.0
      %1379 = vmatpush1.msra.mxu0 %v367
      %1380 = vmatprep.subr.mxu0 0.0
      %1381 = vmatpush1.msra.mxu0 %v368
      %1382 = vmatprep.subr.mxu0 0.0
      %1383 = vmatpush1.msra.mxu0 %v369
      %1384 = vmatprep.subr.mxu0 0.0
      %1385 = vmatpush1.msra.mxu0 0.0
      %1386 = vmatprep.subr.mxu0 0.0
      %1387 = vmatpush1.msra.mxu0 0.0
      %1388 = vmatprep.subr.mxu0 0.0
      %1389 = vmatpush1.msra.mxu0 0.0
      %1390 = vmatprep.subr.mxu0 0.0
      %1391 = vmatpush1.msra.mxu0 0.0
      %1392 = vmatprep.subr.mxu0 0.0
      %1393 = vmatpush1.msra.mxu0 0.0
      %1394 = vmatprep.subr.mxu0 0.0
      %1395 = vmatpush1.msra.mxu0 0.0
      %1396 = vmatprep.subr.mxu0 0.0
      %1397 = vmatpush1.msra.mxu0 0.0
      %1398 = vmatprep.subr.mxu0 0.0
      %1399 = vmatpush1.msra.mxu0 0.0
      %1400 = vmatprep.subr.mxu0 0.0
      %1401 = vmatpush1.msra.mxu0 0.0
      %1402 = vmatprep.subr.mxu0 0.0
      %1403 = vmatpush1.msra.mxu0 0.0
      %1404 = vmatprep.subr.mxu0 0.0
      %1405 = vmatpush1.msra.mxu0 0.0
      %1406 = vmatprep.subr.mxu0 0.0
      %1407 = vmatpush1.msra.mxu0 0.0
      %1408 = vmatprep.subr.mxu0 0.0
      %1409 = vmatpush1.msra.mxu0 0.0
      %1410 = vmatprep.subr.mxu0 0.0
      %1411 = vmatpush1.msra.mxu0 0.0
      %1412 = vmatprep.subr.mxu0 0.0
      %1413 = vmatpush1.msra.mxu0 0.0
      %1414 = vmatprep.subr.mxu0 0.0
      %1415 = vmatpush1.msra.mxu0 0.0
      %1416 = vmatprep.subr.mxu0 0.0
      %1417 = vmatpush1.msra.mxu0 0.0
      %1418 = vmatprep.subr.mxu0 0.0
      %1419 = vmatpush1.msra.mxu0 0.0
      %1420 = vmatprep.subr.mxu0 0.0
      %1421 = vmatpush1.msra.mxu0 0.0
      %1422 = vmatprep.subr.mxu0 0.0
      %1423 = vmatpush1.msra.mxu0 0.0
      %1424 = vmatprep.subr.mxu0 0.0
      %1425 = vmatpush1.msra.mxu0 0.0
      %1426 = vmatprep.subr.mxu0 0.0
      %1427 = vmatpush1.msra.mxu0 0.0
      %1428 = vmatprep.subr.mxu0 0.0
      %1429 = vmatpush1.msra.mxu0 0.0
      %1430 = vmatprep.subr.mxu0 0.0
      %1431 = vmatpush1.msra.mxu0 0.0
      %1432 = vmatprep.subr.mxu0 0.0
      %1433 = vmatpush1.msra.mxu0 0.0
      %1434 = vmatprep.subr.mxu0 0.0
      %1435 = vmatpush1.msra.mxu0 0.0
      %1436 = vmatprep.subr.mxu0 0.0
      %1437 = vmatpush1.msra.mxu0 0.0
      %1438 = vmatprep.subr.mxu0 0.0
      %1439 = vmatpush1.msra.mxu0 0.0
      %1440 = vmatprep.mubr.f32.mxu0 0.0
      %1441 = vmatmul.mubr.f32.gmra.mrb[0].mxu0 %v1374
      %v1442 = vpop.f32.mrb[0].mxu0
      %v1443 = vadd.f32 %v387, %v1442
      %v1444 = vpop.f32.mrb[0].mxu0
      %1445 = vdwg.mxu0
      %v1446 = vadd.f32 %v1443, %v1337
      %v1447 = vxor.u32 %v1446, 2147483648
      %v1448 = vmul.f32 %v1447, 1.442695
      %v1449 = vpow.pop %v1448
      %v1450 = vadd.f32 %v1449, 1.0
      %v1451 = vrcp.pop %v1450
      %v1452 = vmul.f32 1.0, %v1451
      %1454 = vrot.lane.b32.xlu0 %v1337, 64
      %v1455 = vpop.permute.xlu0 %1454
      %v1457 = vmul.f32 %v1452, %v1455
      %1459 = vrot.lane.b32.xlu0 %v1457, 64
      %v1460 = vpop.permute.xlu0 %1459
      %v1462 = vadd.f32 %v1443, %v1460
      %v1463 = vtanh.pop %v1462
      %v1464 = vsub.f32 1.0, %v1452
      %1466 = vrot.lane.b32.xlu0 %v1463, 96
      %v1467 = vpop.permute.xlu0 %1466
      %v1469 = vmul.f32 %v1464, %v1467
      %v1470 = vmul.f32 %v1452, %v1257
      %v1471 = vadd.f32 %v1469, %v1470
      %v1472 = vsel %vm1369, %v1471, %v1257
      %s1473 = sadd.s32 %s67, 5
      %v1474 = vstv %s1473
      %vm1475 = vcmp.lt.s32.totalorder %v1474, %v349
      %s1476 = scalar_lea.vmem [#allocation2], 10
      %v1477 = vld [vmem:[%s1476] sm:$0x3]
      %v1479 = vsel %vm398, %v1373, %v1472
      %v1481 = vsel %vm400, %v1479, 0
      %1483 = vmatprep.subr.mxu0 %v351
      %1484 = vmatpush1.msra.mxu0 %v350
      %1485 = vmatprep.subr.mxu0 %v353
      %1486 = vmatpush1.msra.mxu0 %v352
      %1487 = vmatprep.subr.mxu0 %v355
      %1488 = vmatpush1.msra.mxu0 %v354
      %1489 = vmatprep.subr.mxu0 %v357
      %1490 = vmatpush1.msra.mxu0 %v356
      %1491 = vmatprep.subr.mxu0 %v359
      %1492 = vmatpush1.msra.mxu0 %v358
      %1493 = vmatprep.subr.mxu0 %v361
      %1494 = vmatpush1.msra.mxu0 %v360
      %1495 = vmatprep.subr.mxu0 %v363
      %1496 = vmatpush1.msra.mxu0 %v362
      %1497 = vmatprep.subr.mxu0 %v365
      %1498 = vmatpush1.msra.mxu0 %v364
      %1499 = vmatprep.subr.mxu0 0.0
      %1500 = vmatpush1.msra.mxu0 0.0
      %1501 = vmatprep.subr.mxu0 0.0
      %1502 = vmatpush1.msra.mxu0 0.0
      %1503 = vmatprep.subr.mxu0 0.0
      %1504 = vmatpush1.msra.mxu0 0.0
      %1505 = vmatprep.subr.mxu0 0.0
      %1506 = vmatpush1.msra.mxu0 0.0
      %1507 = vmatprep.subr.mxu0 0.0
      %1508 = vmatpush1.msra.mxu0 0.0
      %1509 = vmatprep.subr.mxu0 0.0
      %1510 = vmatpush1.msra.mxu0 0.0
      %1511 = vmatprep.subr.mxu0 0.0
      %1512 = vmatpush1.msra.mxu0 0.0
      %1513 = vmatprep.subr.mxu0 0.0
      %1514 = vmatpush1.msra.mxu0 0.0
      %1515 = vmatprep.subr.mxu0 0.0
      %1516 = vmatpush1.msra.mxu0 0.0
      %1517 = vmatprep.subr.mxu0 0.0
      %1518 = vmatpush1.msra.mxu0 0.0
      %1519 = vmatprep.subr.mxu0 0.0
      %1520 = vmatpush1.msra.mxu0 0.0
      %1521 = vmatprep.subr.mxu0 0.0
      %1522 = vmatpush1.msra.mxu0 0.0
      %1523 = vmatprep.subr.mxu0 0.0
      %1524 = vmatpush1.msra.mxu0 0.0
      %1525 = vmatprep.subr.mxu0 0.0
      %1526 = vmatpush1.msra.mxu0 0.0
      %1527 = vmatprep.subr.mxu0 0.0
      %1528 = vmatpush1.msra.mxu0 0.0
      %1529 = vmatprep.subr.mxu0 0.0
      %1530 = vmatpush1.msra.mxu0 0.0
      %1531 = vmatprep.subr.mxu0 0.0
      %1532 = vmatpush1.msra.mxu0 0.0
      %1533 = vmatprep.subr.mxu0 0.0
      %1534 = vmatpush1.msra.mxu0 0.0
      %1535 = vmatprep.subr.mxu0 0.0
      %1536 = vmatpush1.msra.mxu0 0.0
      %1537 = vmatprep.subr.mxu0 0.0
      %1538 = vmatpush1.msra.mxu0 0.0
      %1539 = vmatprep.subr.mxu0 0.0
      %1540 = vmatpush1.msra.mxu0 0.0
      %1541 = vmatprep.subr.mxu0 0.0
      %1542 = vmatpush1.msra.mxu0 0.0
      %1543 = vmatprep.subr.mxu0 0.0
      %1544 = vmatpush1.msra.mxu0 0.0
      %1545 = vmatprep.subr.mxu0 0.0
      %1546 = vmatpush1.msra.mxu0 0.0
      %1547 = vmatprep.mubr.f32.mxu0 0.0
      %1548 = vmatmul.mubr.f32.gmra.mrb[0].mxu0 %v1481
      %v1549 = vpop.f32.mrb[0].mxu0
      %v1550 = vadd.f32 %v375, %v1549
      %v1551 = vpop.f32.mrb[0].mxu0
      %v1552 = vadd.f32 %v379, %v1551
      %1553 = vdwg.mxu0
      %v1554 = vadd.f32 %v1477, %v1550
      %v1555 = vxor.u32 %v1554, 2147483648
      %v1556 = vmul.f32 %v1555, 1.442695
      %v1557 = vpow.pop %v1556
      %v1558 = vadd.f32 %v1557, 1.0
      %v1559 = vrcp.pop %v1558
      %v1560 = vmul.f32 1.0, %v1559
      %1562 = vrot.lane.b32.xlu0 %v1550, 64
      %v1563 = vpop.permute.xlu0 %1562
      %v1565 = vmul.f32 %v1560, %v1563
      %1567 = vrot.lane.b32.xlu0 %v1565, 64
      %v1568 = vpop.permute.xlu0 %1567
      %v1570 = vadd.f32 %v1477, %v1568
      %v1571 = vtanh.pop %v1570
      %v1572 = vsub.f32 1.0, %v1560
      %1574 = vrot.lane.b32.xlu0 %v1571, 96
      %v1575 = vpop.permute.xlu0 %1574
      %v1577 = vmul.f32 %v1572, %v1575
      %v1578 = vmul.f32 %v1560, %v1370
      %v1579 = vadd.f32 %v1577, %v1578
      %v1580 = vsel %vm1475, 1, 0
      %1581 = vset.pattern.permute.xlu0 0
      %1582 = vperm.xlu0 %1581, %v1580
      %v1583 = vpop.permute.xlu0 %1582
      %vm1584 = vcmp.eq.s32.totalorder %v1583, 1
      %v1585 = vsel %vm1584, %v1579, %v1370
      %1587 = vrot.lane.b32.xlu0 %v1585, 96
      %v1588 = vpop.permute.xlu0 %1587
      %v1589 = vsel %vm398, %v1588, 0
      %1591 = vmatprep.subr.mxu0 0.0
      %1592 = vmatpush1.msra.mxu0 %v366
      %1593 = vmatprep.subr.mxu0 0.0
      %1594 = vmatpush1.msra.mxu0 %v367
      %1595 = vmatprep.subr.mxu0 0.0
      %1596 = vmatpush1.msra.mxu0 %v368
      %1597 = vmatprep.subr.mxu0 0.0
      %1598 = vmatpush1.msra.mxu0 %v369
      %1599 = vmatprep.subr.mxu0 0.0
      %1600 = vmatpush1.msra.mxu0 0.0
      %1601 = vmatprep.subr.mxu0 0.0
      %1602 = vmatpush1.msra.mxu0 0.0
      %1603 = vmatprep.subr.mxu0 0.0
      %1604 = vmatpush1.msra.mxu0 0.0
      %1605 = vmatprep.subr.mxu0 0.0
      %1606 = vmatpush1.msra.mxu0 0.0
      %1607 = vmatprep.subr.mxu0 0.0
      %1608 = vmatpush1.msra.mxu0 0.0
      %1609 = vmatprep.subr.mxu0 0.0
      %1610 = vmatpush1.msra.mxu0 0.0
      %1611 = vmatprep.subr.mxu0 0.0
      %1612 = vmatpush1.msra.mxu0 0.0
      %1613 = vmatprep.subr.mxu0 0.0
      %1614 = vmatpush1.msra.mxu0 0.0
      %1615 = vmatprep.subr.mxu0 0.0
      %1616 = vmatpush1.msra.mxu0 0.0
      %1617 = vmatprep.subr.mxu0 0.0
      %1618 = vmatpush1.msra.mxu0 0.0
      %1619 = vmatprep.subr.mxu0 0.0
      %1620 = vmatpush1.msra.mxu0 0.0
      %1621 = vmatprep.subr.mxu0 0.0
      %1622 = vmatpush1.msra.mxu0 0.0
      %1623 = vmatprep.subr.mxu0 0.0
      %1624 = vmatpush1.msra.mxu0 0.0
      %1625 = vmatprep.subr.mxu0 0.0
      %1626 = vmatpush1.msra.mxu0 0.0
      %1627 = vmatprep.subr.mxu0 0.0
      %1628 = vmatpush1.msra.mxu0 0.0
      %1629 = vmatprep.subr.mxu0 0.0
      %1630 = vmatpush1.msra.mxu0 0.0
      %1631 = vmatprep.subr.mxu0 0.0
      %1632 = vmatpush1.msra.mxu0 0.0
      %1633 = vmatprep.subr.mxu0 0.0
      %1634 = vmatpush1.msra.mxu0 0.0
      %1635 = vmatprep.subr.mxu0 0.0
      %1636 = vmatpush1.msra.mxu0 0.0
      %1637 = vmatprep.subr.mxu0 0.0
      %1638 = vmatpush1.msra.mxu0 0.0
      %1639 = vmatprep.subr.mxu0 0.0
      %1640 = vmatpush1.msra.mxu0 0.0
      %1641 = vmatprep.subr.mxu0 0.0
      %1642 = vmatpush1.msra.mxu0 0.0
      %1643 = vmatprep.subr.mxu0 0.0
      %1644 = vmatpush1.msra.mxu0 0.0
      %1645 = vmatprep.subr.mxu0 0.0
      %1646 = vmatpush1.msra.mxu0 0.0
      %1647 = vmatprep.subr.mxu0 0.0
      %1648 = vmatpush1.msra.mxu0 0.0
      %1649 = vmatprep.subr.mxu0 0.0
      %1650 = vmatpush1.msra.mxu0 0.0
      %1651 = vmatprep.subr.mxu0 0.0
      %1652 = vmatpush1.msra.mxu0 0.0
      %1653 = vmatprep.subr.mxu0 0.0
      %1654 = vmatpush1.msra.mxu0 0.0
      %1655 = vmatprep.mubr.f32.mxu0 0.0
      %1656 = vmatmul.mubr.f32.gmra.mrb[0].mxu0 %v1589
      %v1657 = vpop.f32.mrb[0].mxu0
      %v1658 = vadd.f32 %v387, %v1657
      %v1659 = vpop.f32.mrb[0].mxu0
      %1660 = vdwg.mxu0
      %v1661 = vadd.f32 %v1658, %v1552
      %v1662 = vxor.u32 %v1661, 2147483648
      %v1663 = vmul.f32 %v1662, 1.442695
      %v1664 = vpow.pop %v1663
      %v1665 = vadd.f32 %v1664, 1.0
      %v1666 = vrcp.pop %v1665
      %v1667 = vmul.f32 1.0, %v1666
      %1669 = vrot.lane.b32.xlu0 %v1552, 64
      %v1670 = vpop.permute.xlu0 %1669
      %v1672 = vmul.f32 %v1667, %v1670
      %1674 = vrot.lane.b32.xlu0 %v1672, 64
      %v1675 = vpop.permute.xlu0 %1674
      %v1677 = vadd.f32 %v1658, %v1675
      %v1678 = vtanh.pop %v1677
      %v1679 = vsub.f32 1.0, %v1667
      %1681 = vrot.lane.b32.xlu0 %v1678, 96
      %v1682 = vpop.permute.xlu0 %1681
      %v1684 = vmul.f32 %v1679, %v1682
      %v1685 = vmul.f32 %v1667, %v1472
      %v1686 = vadd.f32 %v1684, %v1685
      %v1687 = vsel %vm1584, %v1686, %v1472
      %s1688 = sadd.s32 %s67, 6
      %v1689 = vstv %s1688
      %vm1690 = vcmp.lt.s32.totalorder %v1689, %v349
      %s1691 = scalar_lea.vmem [#allocation2], 12
      %v1692 = vld [vmem:[%s1691] sm:$0x3]
      %v1694 = vsel %vm398, %v1588, %v1687
      %v1696 = vsel %vm400, %v1694, 0
      %1698 = vmatprep.subr.mxu0 %v351
      %1699 = vmatpush1.msra.mxu0 %v350
      %1700 = vmatprep.subr.mxu0 %v353
      %1701 = vmatpush1.msra.mxu0 %v352
      %1702 = vmatprep.subr.mxu0 %v355
      %1703 = vmatpush1.msra.mxu0 %v354
      %1704 = vmatprep.subr.mxu0 %v357
      %1705 = vmatpush1.msra.mxu0 %v356
      %1706 = vmatprep.subr.mxu0 %v359
      %1707 = vmatpush1.msra.mxu0 %v358
      %1708 = vmatprep.subr.mxu0 %v361
      %1709 = vmatpush1.msra.mxu0 %v360
      %1710 = vmatprep.subr.mxu0 %v363
      %1711 = vmatpush1.msra.mxu0 %v362
      %1712 = vmatprep.subr.mxu0 %v365
      %1713 = vmatpush1.msra.mxu0 %v364
      %1714 = vmatprep.subr.mxu0 0.0
      %1715 = vmatpush1.msra.mxu0 0.0
      %1716 = vmatprep.subr.mxu0 0.0
      %1717 = vmatpush1.msra.mxu0 0.0
      %1718 = vmatprep.subr.mxu0 0.0
      %1719 = vmatpush1.msra.mxu0 0.0
      %1720 = vmatprep.subr.mxu0 0.0
      %1721 = vmatpush1.msra.mxu0 0.0
      %1722 = vmatprep.subr.mxu0 0.0
      %1723 = vmatpush1.msra.mxu0 0.0
      %1724 = vmatprep.subr.mxu0 0.0
      %1725 = vmatpush1.msra.mxu0 0.0
      %1726 = vmatprep.subr.mxu0 0.0
      %1727 = vmatpush1.msra.mxu0 0.0
      %1728 = vmatprep.subr.mxu0 0.0
      %1729 = vmatpush1.msra.mxu0 0.0
      %1730 = vmatprep.subr.mxu0 0.0
      %1731 = vmatpush1.msra.mxu0 0.0
      %1732 = vmatprep.subr.mxu0 0.0
      %1733 = vmatpush1.msra.mxu0 0.0
      %1734 = vmatprep.subr.mxu0 0.0
      %1735 = vmatpush1.msra.mxu0 0.0
      %1736 = vmatprep.subr.mxu0 0.0
      %1737 = vmatpush1.msra.mxu0 0.0
      %1738 = vmatprep.subr.mxu0 0.0
      %1739 = vmatpush1.msra.mxu0 0.0
      %1740 = vmatprep.subr.mxu0 0.0
      %1741 = vmatpush1.msra.mxu0 0.0
      %1742 = vmatprep.subr.mxu0 0.0
      %1743 = vmatpush1.msra.mxu0 0.0
      %1744 = vmatprep.subr.mxu0 0.0
      %1745 = vmatpush1.msra.mxu0 0.0
      %1746 = vmatprep.subr.mxu0 0.0
      %1747 = vmatpush1.msra.mxu0 0.0
      %1748 = vmatprep.subr.mxu0 0.0
      %1749 = vmatpush1.msra.mxu0 0.0
      %1750 = vmatprep.subr.mxu0 0.0
      %1751 = vmatpush1.msra.mxu0 0.0
      %1752 = vmatprep.subr.mxu0 0.0
      %1753 = vmatpush1.msra.mxu0 0.0
      %1754 = vmatprep.subr.mxu0 0.0
      %1755 = vmatpush1.msra.mxu0 0.0
      %1756 = vmatprep.subr.mxu0 0.0
      %1757 = vmatpush1.msra.mxu0 0.0
      %1758 = vmatprep.subr.mxu0 0.0
      %1759 = vmatpush1.msra.mxu0 0.0
      %1760 = vmatprep.subr.mxu0 0.0
      %1761 = vmatpush1.msra.mxu0 0.0
      %1762 = vmatprep.mubr.f32.mxu0 0.0
      %1763 = vmatmul.mubr.f32.gmra.mrb[0].mxu0 %v1696
      %v1764 = vpop.f32.mrb[0].mxu0
      %v1765 = vadd.f32 %v375, %v1764
      %v1766 = vpop.f32.mrb[0].mxu0
      %v1767 = vadd.f32 %v379, %v1766
      %1768 = vdwg.mxu0
      %v1769 = vadd.f32 %v1692, %v1765
      %v1770 = vxor.u32 %v1769, 2147483648
      %v1771 = vmul.f32 %v1770, 1.442695
      %v1772 = vpow.pop %v1771
      %v1773 = vadd.f32 %v1772, 1.0
      %v1774 = vrcp.pop %v1773
      %v1775 = vmul.f32 1.0, %v1774
      %1777 = vrot.lane.b32.xlu0 %v1765, 64
      %v1778 = vpop.permute.xlu0 %1777
      %v1780 = vmul.f32 %v1775, %v1778
      %1782 = vrot.lane.b32.xlu0 %v1780, 64
      %v1783 = vpop.permute.xlu0 %1782
      %v1785 = vadd.f32 %v1692, %v1783
      %v1786 = vtanh.pop %v1785
      %v1787 = vsub.f32 1.0, %v1775
      %1789 = vrot.lane.b32.xlu0 %v1786, 96
      %v1790 = vpop.permute.xlu0 %1789
      %v1792 = vmul.f32 %v1787, %v1790
      %v1793 = vmul.f32 %v1775, %v1585
      %v1794 = vadd.f32 %v1792, %v1793
      %v1795 = vsel %vm1690, 1, 0
      %1796 = vset.pattern.permute.xlu0 0
      %1797 = vperm.xlu0 %1796, %v1795
      %v1798 = vpop.permute.xlu0 %1797
      %vm1799 = vcmp.eq.s32.totalorder %v1798, 1
      %v1800 = vsel %vm1799, %v1794, %v1585
      %1802 = vrot.lane.b32.xlu0 %v1800, 96
      %v1803 = vpop.permute.xlu0 %1802
      %v1804 = vsel %vm398, %v1803, 0
      %1806 = vmatprep.subr.mxu0 0.0
      %1807 = vmatpush1.msra.mxu0 %v366
      %1808 = vmatprep.subr.mxu0 0.0
      %1809 = vmatpush1.msra.mxu0 %v367
      %1810 = vmatprep.subr.mxu0 0.0
      %1811 = vmatpush1.msra.mxu0 %v368
      %1812 = vmatprep.subr.mxu0 0.0
      %1813 = vmatpush1.msra.mxu0 %v369
      %1814 = vmatprep.subr.mxu0 0.0
      %1815 = vmatpush1.msra.mxu0 0.0
      %1816 = vmatprep.subr.mxu0 0.0
      %1817 = vmatpush1.msra.mxu0 0.0
      %1818 = vmatprep.subr.mxu0 0.0
      %1819 = vmatpush1.msra.mxu0 0.0
      %1820 = vmatprep.subr.mxu0 0.0
      %1821 = vmatpush1.msra.mxu0 0.0
      %1822 = vmatprep.subr.mxu0 0.0
      %1823 = vmatpush1.msra.mxu0 0.0
      %1824 = vmatprep.subr.mxu0 0.0
      %1825 = vmatpush1.msra.mxu0 0.0
      %1826 = vmatprep.subr.mxu0 0.0
      %1827 = vmatpush1.msra.mxu0 0.0
      %1828 = vmatprep.subr.mxu0 0.0
      %1829 = vmatpush1.msra.mxu0 0.0
      %1830 = vmatprep.subr.mxu0 0.0
      %1831 = vmatpush1.msra.mxu0 0.0
      %1832 = vmatprep.subr.mxu0 0.0
      %1833 = vmatpush1.msra.mxu0 0.0
      %1834 = vmatprep.subr.mxu0 0.0
      %1835 = vmatpush1.msra.mxu0 0.0
      %1836 = vmatprep.subr.mxu0 0.0
      %1837 = vmatpush1.msra.mxu0 0.0
      %1838 = vmatprep.subr.mxu0 0.0
      %1839 = vmatpush1.msra.mxu0 0.0
      %1840 = vmatprep.subr.mxu0 0.0
      %1841 = vmatpush1.msra.mxu0 0.0
      %1842 = vmatprep.subr.mxu0 0.0
      %1843 = vmatpush1.msra.mxu0 0.0
      %1844 = vmatprep.subr.mxu0 0.0
      %1845 = vmatpush1.msra.mxu0 0.0
      %1846 = vmatprep.subr.mxu0 0.0
      %1847 = vmatpush1.msra.mxu0 0.0
      %1848 = vmatprep.subr.mxu0 0.0
      %1849 = vmatpush1.msra.mxu0 0.0
      %1850 = vmatprep.subr.mxu0 0.0
      %1851 = vmatpush1.msra.mxu0 0.0
      %1852 = vmatprep.subr.mxu0 0.0
      %1853 = vmatpush1.msra.mxu0 0.0
      %1854 = vmatprep.subr.mxu0 0.0
      %1855 = vmatpush1.msra.mxu0 0.0
      %1856 = vmatprep.subr.mxu0 0.0
      %1857 = vmatpush1.msra.mxu0 0.0
      %1858 = vmatprep.subr.mxu0 0.0
      %1859 = vmatpush1.msra.mxu0 0.0
      %1860 = vmatprep.subr.mxu0 0.0
      %1861 = vmatpush1.msra.mxu0 0.0
      %1862 = vmatprep.subr.mxu0 0.0
      %1863 = vmatpush1.msra.mxu0 0.0
      %1864 = vmatprep.subr.mxu0 0.0
      %1865 = vmatpush1.msra.mxu0 0.0
      %1866 = vmatprep.subr.mxu0 0.0
      %1867 = vmatpush1.msra.mxu0 0.0
      %1868 = vmatprep.subr.mxu0 0.0
      %1869 = vmatpush1.msra.mxu0 0.0
      %1870 = vmatprep.mubr.f32.mxu0 0.0
      %1871 = vmatmul.mubr.f32.gmra.mrb[0].mxu0 %v1804
      %v1872 = vpop.f32.mrb[0].mxu0
      %v1873 = vadd.f32 %v387, %v1872
      %v1874 = vpop.f32.mrb[0].mxu0
      %1875 = vdwg.mxu0
      %v1876 = vadd.f32 %v1873, %v1767
      %v1877 = vxor.u32 %v1876, 2147483648
      %v1878 = vmul.f32 %v1877, 1.442695
      %v1879 = vpow.pop %v1878
      %v1880 = vadd.f32 %v1879, 1.0
      %v1881 = vrcp.pop %v1880
      %v1882 = vmul.f32 1.0, %v1881
      %1884 = vrot.lane.b32.xlu0 %v1767, 64
      %v1885 = vpop.permute.xlu0 %1884
      %v1887 = vmul.f32 %v1882, %v1885
      %1889 = vrot.lane.b32.xlu0 %v1887, 64
      %v1890 = vpop.permute.xlu0 %1889
      %v1892 = vadd.f32 %v1873, %v1890
      %v1893 = vtanh.pop %v1892
      %v1894 = vsub.f32 1.0, %v1882
      %1896 = vrot.lane.b32.xlu0 %v1893, 96
      %v1897 = vpop.permute.xlu0 %1896
      %v1899 = vmul.f32 %v1894, %v1897
      %v1900 = vmul.f32 %v1882, %v1687
      %v1901 = vadd.f32 %v1899, %v1900
      %v1902 = vsel %vm1799, %v1901, %v1687
      %s1903 = sadd.s32 %s67, 7
      %v1904 = vstv %s1903
      %vm1905 = vcmp.lt.s32.totalorder %v1904, %v349
      %s1906 = scalar_lea.vmem [#allocation2], 14
      %v1907 = vld [vmem:[%s1906] sm:$0x3]
      %v1909 = vsel %vm398, %v1803, %v1902
      %v1911 = vsel %vm400, %v1909, 0
      %1913 = vmatprep.subr.mxu0 %v351
      %1914 = vmatpush1.msra.mxu0 %v350
      %1915 = vmatprep.subr.mxu0 %v353
      %1916 = vmatpush1.msra.mxu0 %v352
      %1917 = vmatprep.subr.mxu0 %v355
      %1918 = vmatpush1.msra.mxu0 %v354
      %1919 = vmatprep.subr.mxu0 %v357
      %1920 = vmatpush1.msra.mxu0 %v356
      %1921 = vmatprep.subr.mxu0 %v359
      %1922 = vmatpush1.msra.mxu0 %v358
      %1923 = vmatprep.subr.mxu0 %v361
      %1924 = vmatpush1.msra.mxu0 %v360
      %1925 = vmatprep.subr.mxu0 %v363
      %1926 = vmatpush1.msra.mxu0 %v362
      %1927 = vmatprep.subr.mxu0 %v365
      %1928 = vmatpush1.msra.mxu0 %v364
      %1929 = vmatprep.subr.mxu0 0.0
      %1930 = vmatpush1.msra.mxu0 0.0
      %1931 = vmatprep.subr.mxu0 0.0
      %1932 = vmatpush1.msra.mxu0 0.0
      %1933 = vmatprep.subr.mxu0 0.0
      %1934 = vmatpush1.msra.mxu0 0.0
      %1935 = vmatprep.subr.mxu0 0.0
      %1936 = vmatpush1.msra.mxu0 0.0
      %1937 = vmatprep.subr.mxu0 0.0
      %1938 = vmatpush1.msra.mxu0 0.0
      %1939 = vmatprep.subr.mxu0 0.0
      %1940 = vmatpush1.msra.mxu0 0.0
      %1941 = vmatprep.subr.mxu0 0.0
      %1942 = vmatpush1.msra.mxu0 0.0
      %1943 = vmatprep.subr.mxu0 0.0
      %1944 = vmatpush1.msra.mxu0 0.0
      %1945 = vmatprep.subr.mxu0 0.0
      %1946 = vmatpush1.msra.mxu0 0.0
      %1947 = vmatprep.subr.mxu0 0.0
      %1948 = vmatpush1.msra.mxu0 0.0
      %1949 = vmatprep.subr.mxu0 0.0
      %1950 = vmatpush1.msra.mxu0 0.0
      %1951 = vmatprep.subr.mxu0 0.0
      %1952 = vmatpush1.msra.mxu0 0.0
      %1953 = vmatprep.subr.mxu0 0.0
      %1954 = vmatpush1.msra.mxu0 0.0
      %1955 = vmatprep.subr.mxu0 0.0
      %1956 = vmatpush1.msra.mxu0 0.0
      %1957 = vmatprep.subr.mxu0 0.0
      %1958 = vmatpush1.msra.mxu0 0.0
      %1959 = vmatprep.subr.mxu0 0.0
      %1960 = vmatpush1.msra.mxu0 0.0
      %1961 = vmatprep.subr.mxu0 0.0
      %1962 = vmatpush1.msra.mxu0 0.0
      %1963 = vmatprep.subr.mxu0 0.0
      %1964 = vmatpush1.msra.mxu0 0.0
      %1965 = vmatprep.subr.mxu0 0.0
      %1966 = vmatpush1.msra.mxu0 0.0
      %1967 = vmatprep.subr.mxu0 0.0
      %1968 = vmatpush1.msra.mxu0 0.0
      %1969 = vmatprep.subr.mxu0 0.0
      %1970 = vmatpush1.msra.mxu0 0.0
      %1971 = vmatprep.subr.mxu0 0.0
      %1972 = vmatpush1.msra.mxu0 0.0
      %1973 = vmatprep.subr.mxu0 0.0
      %1974 = vmatpush1.msra.mxu0 0.0
      %1975 = vmatprep.subr.mxu0 0.0
      %1976 = vmatpush1.msra.mxu0 0.0
      %1977 = vmatprep.mubr.f32.mxu0 0.0
      %1978 = vmatmul.mubr.f32.gmra.mrb[0].mxu0 %v1911
      %v1979 = vpop.f32.mrb[0].mxu0
      %v1980 = vadd.f32 %v375, %v1979
      %v1981 = vpop.f32.mrb[0].mxu0
      %v1982 = vadd.f32 %v379, %v1981
      %1983 = vdwg.mxu0
      %v1984 = vadd.f32 %v1907, %v1980
      %v1985 = vxor.u32 %v1984, 2147483648
      %v1986 = vmul.f32 %v1985, 1.442695
      %v1987 = vpow.pop %v1986
      %v1988 = vadd.f32 %v1987, 1.0
      %v1989 = vrcp.pop %v1988
      %v1990 = vmul.f32 1.0, %v1989
      %1992 = vrot.lane.b32.xlu0 %v1980, 64
      %v1993 = vpop.permute.xlu0 %1992
      %v1995 = vmul.f32 %v1990, %v1993
      %1997 = vrot.lane.b32.xlu0 %v1995, 64
      %v1998 = vpop.permute.xlu0 %1997
      %v2000 = vadd.f32 %v1907, %v1998
      %v2001 = vtanh.pop %v2000
      %v2002 = vsub.f32 1.0, %v1990
      %2004 = vrot.lane.b32.xlu0 %v2001, 96
      %v2005 = vpop.permute.xlu0 %2004
      %v2007 = vmul.f32 %v2002, %v2005
      %v2008 = vmul.f32 %v1990, %v1800
      %v2009 = vadd.f32 %v2007, %v2008
      %v2010 = vsel %vm1905, 1, 0
      %2011 = vset.pattern.permute.xlu0 0
      %2012 = vperm.xlu0 %2011, %v2010
      %v2013 = vpop.permute.xlu0 %2012
      %vm2014 = vcmp.eq.s32.totalorder %v2013, 1
      %v2015 = vsel %vm2014, %v2009, %v1800
      %2017 = vrot.lane.b32.xlu0 %v2015, 96
      %v2018 = vpop.permute.xlu0 %2017
      %v2019 = vsel %vm398, %v2018, 0
      %2021 = vmatprep.subr.mxu0 0.0
      %2022 = vmatpush1.msra.mxu0 %v366
      %2023 = vmatprep.subr.mxu0 0.0
      %2024 = vmatpush1.msra.mxu0 %v367
      %2025 = vmatprep.subr.mxu0 0.0
      %2026 = vmatpush1.msra.mxu0 %v368
      %2027 = vmatprep.subr.mxu0 0.0
      %2028 = vmatpush1.msra.mxu0 %v369
      %2029 = vmatprep.subr.mxu0 0.0
      %2030 = vmatpush1.msra.mxu0 0.0
      %2031 = vmatprep.subr.mxu0 0.0
      %2032 = vmatpush1.msra.mxu0 0.0
      %2033 = vmatprep.subr.mxu0 0.0
      %2034 = vmatpush1.msra.mxu0 0.0
      %2035 = vmatprep.subr.mxu0 0.0
      %2036 = vmatpush1.msra.mxu0 0.0
      %2037 = vmatprep.subr.mxu0 0.0
      %2038 = vmatpush1.msra.mxu0 0.0
      %2039 = vmatprep.subr.mxu0 0.0
      %2040 = vmatpush1.msra.mxu0 0.0
      %2041 = vmatprep.subr.mxu0 0.0
      %2042 = vmatpush1.msra.mxu0 0.0
      %2043 = vmatprep.subr.mxu0 0.0
      %2044 = vmatpush1.msra.mxu0 0.0
      %2045 = vmatprep.subr.mxu0 0.0
      %2046 = vmatpush1.msra.mxu0 0.0
      %2047 = vmatprep.subr.mxu0 0.0
      %2048 = vmatpush1.msra.mxu0 0.0
      %2049 = vmatprep.subr.mxu0 0.0
      %2050 = vmatpush1.msra.mxu0 0.0
      %2051 = vmatprep.subr.mxu0 0.0
      %2052 = vmatpush1.msra.mxu0 0.0
      %2053 = vmatprep.subr.mxu0 0.0
      %2054 = vmatpush1.msra.mxu0 0.0
      %2055 = vmatprep.subr.mxu0 0.0
      %2056 = vmatpush1.msra.mxu0 0.0
      %2057 = vmatprep.subr.mxu0 0.0
      %2058 = vmatpush1.msra.mxu0 0.0
      %2059 = vmatprep.subr.mxu0 0.0
      %2060 = vmatpush1.msra.mxu0 0.0
      %2061 = vmatprep.subr.mxu0 0.0
      %2062 = vmatpush1.msra.mxu0 0.0
      %2063 = vmatprep.subr.mxu0 0.0
      %2064 = vmatpush1.msra.mxu0 0.0
      %2065 = vmatprep.subr.mxu0 0.0
      %2066 = vmatpush1.msra.mxu0 0.0
      %2067 = vmatprep.subr.mxu0 0.0
      %2068 = vmatpush1.msra.mxu0 0.0
      %2069 = vmatprep.subr.mxu0 0.0
      %2070 = vmatpush1.msra.mxu0 0.0
      %2071 = vmatprep.subr.mxu0 0.0
      %2072 = vmatpush1.msra.mxu0 0.0
      %2073 = vmatprep.subr.mxu0 0.0
      %2074 = vmatpush1.msra.mxu0 0.0
      %2075 = vmatprep.subr.mxu0 0.0
      %2076 = vmatpush1.msra.mxu0 0.0
      %2077 = vmatprep.subr.mxu0 0.0
      %2078 = vmatpush1.msra.mxu0 0.0
      %2079 = vmatprep.subr.mxu0 0.0
      %2080 = vmatpush1.msra.mxu0 0.0
      %2081 = vmatprep.subr.mxu0 0.0
      %2082 = vmatpush1.msra.mxu0 0.0
      %2083 = vmatprep.subr.mxu0 0.0
      %2084 = vmatpush1.msra.mxu0 0.0
      %2085 = vmatprep.mubr.f32.mxu0 0.0
      %2086 = vmatmul.mubr.f32.gmra.mrb[0].mxu0 %v2019
      %v2087 = vpop.f32.mrb[0].mxu0
      %v2088 = vadd.f32 %v387, %v2087
      %v2089 = vpop.f32.mrb[0].mxu0
      %2090 = vdwg.mxu0
      %v2091 = vadd.f32 %v2088, %v1982
      %v2092 = vxor.u32 %v2091, 2147483648
      %v2093 = vmul.f32 %v2092, 1.442695
      %v2094 = vpow.pop %v2093
      %v2095 = vadd.f32 %v2094, 1.0
      %v2096 = vrcp.pop %v2095
      %v2097 = vmul.f32 1.0, %v2096
      %2099 = vrot.lane.b32.xlu0 %v1982, 64
      %v2100 = vpop.permute.xlu0 %2099
      %v2102 = vmul.f32 %v2097, %v2100
      %2104 = vrot.lane.b32.xlu0 %v2102, 64
      %v2105 = vpop.permute.xlu0 %2104
      %v2107 = vadd.f32 %v2088, %v2105
      %v2108 = vtanh.pop %v2107
      %v2109 = vsub.f32 1.0, %v2097
      %2111 = vrot.lane.b32.xlu0 %v2108, 96
      %v2112 = vpop.permute.xlu0 %2111
      %v2114 = vmul.f32 %v2109, %v2112
      %v2115 = vmul.f32 %v2097, %v1902
      %v2116 = vadd.f32 %v2114, %v2115
      %v2117 = vsel %vm2014, %v2116, %v1902
      %vm2119 = vcmask 254976
      %2120 = vst.msk [vmem:[#allocation3] sm:$0x3] %vm2119, %v2018
      %2122 = vrot.lane.b32.xlu0 %v2117, 96
      %v2123 = vpop.permute.xlu0 %2122
      %2125 = vst.msk [vmem:[#allocation4] sm:$0x3] %vm2119, %v2123
    $region57: #{tpu_custom_call.1} parent=1 // pred_fallthru
      _
    // Predicated region
    $region58: #{tpu_custom_call.1} parent=1 // pred_check
      %p2126 = pneg %p68
    $region59: #{tpu_custom_call.1} parent=1 // pred_check_branch
      %2128 = sbr.rel (%p2126) target = $region61
    $region60: #{tpu_custom_call.1} parent=1 // pred_region
      %v2129 = vld [vmem:[#allocation4] sm:$0x3]
      %v2130 = vld [vmem:[%s9] sm:$0xff]
      %v2131 = vld [vmem:[%s9 + $0x8] sm:$0xff]
      %v2132 = vld [vmem:[%s9 + $0x10] sm:$0xff]
      %v2133 = vld [vmem:[%s9 + $0x18] sm:$0xff]
      %v2134 = vld [vmem:[%s10] sm:$0x1]
      %v2136 = vlaneseq
      %v2137 = vshrl.u32 %v2136, 7
      %v2138 = vsub.s32 0, %v2137
      %v2139 = vrot.slane %v2134, %v2138
      %vm2141 = vcmask 261120
      %v2143 = vsel %vm2141, %v2129, 0
      %2145 = vmatprep.subr.mxu0 0.0
      %2146 = vmatpush1.msra.mxu0 %v2130
      %2147 = vmatprep.subr.mxu0 0.0
      %2148 = vmatpush1.msra.mxu0 %v2131
      %2149 = vmatprep.subr.mxu0 0.0
      %2150 = vmatpush1.msra.mxu0 %v2132
      %2151 = vmatprep.subr.mxu0 0.0
      %2152 = vmatpush1.msra.mxu0 %v2133
      %2153 = vmatprep.subr.mxu0 0.0
      %2154 = vmatpush1.msra.mxu0 0.0
      %2155 = vmatprep.subr.mxu0 0.0
      %2156 = vmatpush1.msra.mxu0 0.0
      %2157 = vmatprep.subr.mxu0 0.0
      %2158 = vmatpush1.msra.mxu0 0.0
      %2159 = vmatprep.subr.mxu0 0.0
      %2160 = vmatpush1.msra.mxu0 0.0
      %2161 = vmatprep.subr.mxu0 0.0
      %2162 = vmatpush1.msra.mxu0 0.0
      %2163 = vmatprep.subr.mxu0 0.0
      %2164 = vmatpush1.msra.mxu0 0.0
      %2165 = vmatprep.subr.mxu0 0.0
      %2166 = vmatpush1.msra.mxu0 0.0
      %2167 = vmatprep.subr.mxu0 0.0
      %2168 = vmatpush1.msra.mxu0 0.0
      %2169 = vmatprep.subr.mxu0 0.0
      %2170 = vmatpush1.msra.mxu0 0.0
      %2171 = vmatprep.subr.mxu0 0.0
      %2172 = vmatpush1.msra.mxu0 0.0
      %2173 = vmatprep.subr.mxu0 0.0
      %2174 = vmatpush1.msra.mxu0 0.0
      %2175 = vmatprep.subr.mxu0 0.0
      %2176 = vmatpush1.msra.mxu0 0.0
      %2177 = vmatprep.subr.mxu0 0.0
      %2178 = vmatpush1.msra.mxu0 0.0
      %2179 = vmatprep.subr.mxu0 0.0
      %2180 = vmatpush1.msra.mxu0 0.0
      %2181 = vmatprep.subr.mxu0 0.0
      %2182 = vmatpush1.msra.mxu0 0.0
      %2183 = vmatprep.subr.mxu0 0.0
      %2184 = vmatpush1.msra.mxu0 0.0
      %2185 = vmatprep.subr.mxu0 0.0
      %2186 = vmatpush1.msra.mxu0 0.0
      %2187 = vmatprep.subr.mxu0 0.0
      %2188 = vmatpush1.msra.mxu0 0.0
      %2189 = vmatprep.subr.mxu0 0.0
      %2190 = vmatpush1.msra.mxu0 0.0
      %2191 = vmatprep.subr.mxu0 0.0
      %2192 = vmatpush1.msra.mxu0 0.0
      %2193 = vmatprep.subr.mxu0 0.0
      %2194 = vmatpush1.msra.mxu0 0.0
      %2195 = vmatprep.subr.mxu0 0.0
      %2196 = vmatpush1.msra.mxu0 0.0
      %2197 = vmatprep.subr.mxu0 0.0
      %2198 = vmatpush1.msra.mxu0 0.0
      %2199 = vmatprep.subr.mxu0 0.0
      %2200 = vmatpush1.msra.mxu0 0.0
      %2201 = vmatprep.subr.mxu0 0.0
      %2202 = vmatpush1.msra.mxu0 0.0
      %2203 = vmatprep.subr.mxu0 0.0
      %2204 = vmatpush1.msra.mxu0 0.0
      %2205 = vmatprep.subr.mxu0 0.0
      %2206 = vmatpush1.msra.mxu0 0.0
      %2207 = vmatprep.subr.mxu0 0.0
      %2208 = vmatpush1.msra.mxu0 0.0
      %2209 = vmatprep.mubr.f32.mxu0 0.0
      %2210 = vmatmul.mubr.f32.gmra.mrb[0].mxu0 %v2143
      %v2211 = vpop.f32.mrb[0].mxu0
      %v2212 = vadd.f32 %v2139, %v2211
      %v2213 = vpop.f32.mrb[0].mxu0
      %2214 = vdwg.mxu0
      %vm2215 = vcmask 91136
      %2216 = vst.msk [vmem:[#allocation12] sm:$0x3] %vm2215, %v2212
    $region61: #{tpu_custom_call.1} parent=1 // pred_fallthru
      _
    // Predicated region
    $region62: #{tpu_custom_call.1} parent=1 // pred_check
      _
    $region63: #{tpu_custom_call.1} parent=1 // pred_check_branch
      %2218 = sbr.rel (0) target = $region65
    $region64: #{tpu_custom_call.1} parent=1 // pred_region
      %s2220 = ssub.s32 32, 32
      %2221 = vsyncadd [#allocation9], %s2220
      %s2223 = sshll.u32 [#allocation12], 4
      %s2224 = int_to_ptr.vmem [resolvable:$true] %s2223
      %2226 = dma.vmem_to_hbm [thread:$0]  %s2224, 32, %s11, [#allocation9]
    $region65: #{tpu_custom_call.1} parent=1 // pred_fallthru
      _
    // Predicated region
    $region66: #{tpu_custom_call.1} parent=1 // pred_check
      _
    $region67: #{tpu_custom_call.1} parent=1 // pred_check_branch
      %2228 = sbr.rel (0) target = $region69
    $region68: #{tpu_custom_call.1} parent=1 // pred_region
      %2229 = dma.done [#allocation9], 32
    $region69: #{tpu_custom_call.1} parent=1 // pred_fallthru
      _
    %2230 = vsyncpa [#allocation8], 1
    %2231 = vsyncpa [#allocation11], 1
    %2232 = vsyncpa [#allocation9], 1

</llo_original>
